<compile_context>
chip_gen: v7x
topology: tpu7x:2x2x1
jax: 0.10.0
libtpu: 0.0.40
codegen_flags: <defaults>
</compile_context>

<pallas_src>
import functools
import math

import jax
import jax.numpy as jnp
from jax.experimental import pallas as pl
from jax.experimental.pallas import tpu as pltpu


# ----------------------------------------------------------------------------------
# Shared math helpers (pure-JAX reference side)
# ----------------------------------------------------------------------------------
def _linear(v, W, b):
    """y = v @ W.T + b  (W is [out, in], PyTorch convention)."""
    lead = v.shape[:-1]
    v2 = v.reshape((-1, v.shape[-1]))
    o = jax.lax.dot_general(v2, W, (((1,), (1,)), ((), ())),
                            preferred_element_type=jnp.float32)
    return o.reshape(lead + (W.shape[0],)) + b


def _layer_norm_ref(v, g, b, eps=1e-5):
    mu = jnp.mean(v, axis=-1, keepdims=True)
    var = jnp.mean(jnp.square(v - mu), axis=-1, keepdims=True)
    return (v - mu) * jax.lax.rsqrt(var + eps) * g + b


def _softmax(s):
    s = s - jnp.max(s, axis=-1, keepdims=True)
    e = jnp.exp(s)
    return e / jnp.sum(e, axis=-1, keepdims=True)


# ----------------------------------------------------------------------------------
# Packed-parameter slab row indices
# ----------------------------------------------------------------------------------
# matrix slab wm [8, C, C] (all matrices stored transposed: [in, out])
_W_IN2, _W_SKIP, _W_TO, _W_SO, _W_FF1, _W_FF2, _W_O1, _W_O2 = range(8)
# vector slab vb [18, C]
(_V_INWX, _V_INWM, _V_INB1, _V_INB2,
 _V_SKIPB, _V_G1, _V_BE1, _V_TOB,
 _V_G2, _V_BE2, _V_SOB,
 _V_G3, _V_BE3, _V_FFB1, _V_FFB2,
 _V_OB1, _V_OB2, _V_OW3) = range(18)


# ----------------------------------------------------------------------------------
# In-kernel helpers
# ----------------------------------------------------------------------------------
def _layer_norm_1pass(v, g, b, eps=1e-5):
    """Single-pass LayerNorm: E[x], E[x^2] (one cross-lane reduction saved)."""
    inv_c = 1.0 / v.shape[-1]
    mu = jnp.sum(v, axis=-1, keepdims=True) * inv_c
    ms = jnp.sum(v * v, axis=-1, keepdims=True) * inv_c
    var = ms - mu * mu
    return (v - mu) * jax.lax.rsqrt(var + eps) * g + b


# ----------------------------------------------------------------------------------
# Pallas kernel (single grid step, full batch flattened to N = B*L*K rows)
# ----------------------------------------------------------------------------------
def csdi_kernel(xs_ref, add_ref, bias_ref, wm_ref, wqkv_ref, bqkv_ref, vb_ref,
                out_ref, *, C):
    def V(i):
        return vb_ref[i]

    def mm(a, w_bf16):
        """Dense layer: bf16 MXU matmul, f32 accumulation. w is [in, out]."""
        return jnp.dot(a.astype(jnp.bfloat16), w_bf16,
                       preferred_element_type=jnp.float32)

    def attention(xn, wqkv, bqkv, wo, bo, bias):
        """Single-head masked attention over all N rows; QKV fused into one matmul."""
        qkv = mm(xn, wqkv) + bqkv                       # [N, 3C] f32
        q = qkv[:, 0:C]
        k = qkv[:, C:2 * C]
        v = qkv[:, 2 * C:3 * C]
        scale = 1.0 / math.sqrt(C)
        s = jax.lax.dot_general(q.astype(jnp.bfloat16), k.astype(jnp.bfloat16),
                                (((1,), (1,)), ((), ())),
                                preferred_element_type=jnp.float32) * scale + bias
        s = s - jnp.max(s, axis=-1, keepdims=True)
        e = jnp.exp(s)
        p = e * pl.reciprocal(jnp.sum(e, axis=-1, keepdims=True), approx=True)
        o = jnp.dot(p.astype(jnp.bfloat16), v.astype(jnp.bfloat16),
                    preferred_element_type=jnp.float32)
        return mm(o, wo) + bo

    # input_projection MLP: Linear(2, C)+ReLU (width-2 input folded into two broadcast
    # columns), then Linear(C, C)+ReLU.
    xin = xs_ref[:, 0:1]
    m = xs_ref[:, 1:2]
    h = jax.nn.relu(xin * V(_V_INWX) + m * V(_V_INWM) + V(_V_INB1))
    h = jax.nn.relu(mm(h, wm_ref[_W_IN2]) + V(_V_INB2))

    # + positional encoding + spatial embedding + diffusion-step embedding
    # (precombined in the wrapper into one [N, C] additive bias)
    h = h + add_ref[...]

    # ---- SpatioTemporalTransformerLayer (nheads=1, causal=False, dropout=0) ----
    # temporal self-attention (same batch element AND same node)
    xn = _layer_norm_1pass(h, V(_V_G1), V(_V_BE1))
    h = (mm(h, wm_ref[_W_SKIP]) + V(_V_SKIPB)
         + attention(xn, wqkv_ref[0], bqkv_ref[0], wm_ref[_W_TO], V(_V_TOB),
                     bias_ref[0]))

    # spatial self-attention (same batch element AND same time step)
    xn = _layer_norm_1pass(h, V(_V_G2), V(_V_BE2))
    h = h + attention(xn, wqkv_ref[1], bqkv_ref[1], wm_ref[_W_SO], V(_V_SOB),
                      bias_ref[1])

    # feed-forward block
    xn = _layer_norm_1pass(h, V(_V_G3), V(_V_BE3))
    ff = jax.nn.relu(mm(xn, wm_ref[_W_FF1]) + V(_V_FFB1))
    h = h + mm(ff, wm_ref[_W_FF2]) + V(_V_FFB2)

    # output_projection MLP + readout Linear(C, 1), emitted as a lane-dense [1, N] row
    # (readout bias is added in the wrapper).
    o = jax.nn.relu(mm(h, wm_ref[_W_O1]) + V(_V_OB1))
    o = jax.nn.relu(mm(o, wm_ref[_W_O2]) + V(_V_OB2))
    out_ref[...] = jax.lax.dot_general(
        vb_ref[_V_OW3:_V_OW3 + 1].astype(jnp.bfloat16), o.astype(jnp.bfloat16),
        (((1,), (1,)), ((), ())), preferred_element_type=jnp.float32)


# ----------------------------------------------------------------------------------
# Buffers & parameter initialization (deterministic, synthetic)
# ----------------------------------------------------------------------------------
def _positional_encoding(L, C):
    pos = jnp.arange(L, dtype=jnp.float32)[:, None]
    div = jnp.exp(jnp.arange(0, C, 2, dtype=jnp.float32) * (-math.log(10000.0) / C))
    pe = jnp.zeros((L, C), jnp.float32)
    pe = pe.at[:, 0::2].set(jnp.sin(pos * div))
    pe = pe.at[:, 1::2].set(jnp.cos(pos * div))
    return pe


def _diffusion_table(num_steps, C):
    half = C // 2
    steps = jnp.arange(num_steps, dtype=jnp.float32)[:, None]
    freqs = (10.0 ** (jnp.arange(half, dtype=jnp.float32) / (half - 1) * 4.0))[None, :]
    table = steps * freqs
    return jnp.concatenate([jnp.sin(table), jnp.cos(table)], axis=1)


def init_params(key, C, num_nodes, num_steps=50, input_dim=1):
    keys = list(jax.random.split(key, 20))
    it = iter(keys)

    def lin(k, out_dim, in_dim):
        s = 1.0 / math.sqrt(in_dim)
        kw, kb = jax.random.split(k)
        W = jax.random.uniform(kw, (out_dim, in_dim), jnp.float32, -s, s)
        b = jax.random.uniform(kb, (out_dim,), jnp.float32, -s, s)
        return W, b

    p = {}
    p["dW1"], p["db1"] = lin(next(it), C, C)
    p["dW2"], p["db2"] = lin(next(it), C, C)
    W1, b1 = lin(next(it), C, 2 * input_dim)
    p["in_wx"], p["in_wm"], p["in_b1"] = W1[:, 0], W1[:, 1], b1
    p["inW2"], p["inb2"] = lin(next(it), C, C)
    p["skipW"], p["skipb"] = lin(next(it), C, C)
    p["g1"], p["be1"] = jnp.ones((C,), jnp.float32), jnp.zeros((C,), jnp.float32)
    tw, tb_ = lin(next(it), 3 * C, C)
    p["tW"], p["tb"] = tw.reshape(3, C, C), tb_.reshape(3, C)
    p["toW"], p["tob"] = lin(next(it), C, C)
    p["g2"], p["be2"] = jnp.ones((C,), jnp.float32), jnp.zeros((C,), jnp.float32)
    sw, sb_ = lin(next(it), 3 * C, C)
    p["sW"], p["sb"] = sw.reshape(3, C, C), sb_.reshape(3, C)
    p["soW"], p["sob"] = lin(next(it), C, C)
    p["g3"], p["be3"] = jnp.ones((C,), jnp.float32), jnp.zeros((C,), jnp.float32)
    p["ffW1"], p["ffb1"] = lin(next(it), C, C)
    p["ffW2"], p["ffb2"] = lin(next(it), C, C)
    p["oW1"], p["ob1"] = lin(next(it), C, C)
    p["oW2"], p["ob2"] = lin(next(it), C, C)
    p["oW3"], p["ob3"] = lin(next(it), input_dim, C)
    p["spat"] = 0.1 * jax.random.normal(next(it), (num_nodes, C), jnp.float32)
    p["dtab"] = _diffusion_table(num_steps, C)
    return p


# ----------------------------------------------------------------------------------
# Pallas wrapper
# ----------------------------------------------------------------------------------
def csdi_forward_pallas(params, x, mask, noisy_data, diffusion_step):
    B, L, K, _ = x.shape
    C = params["inW2"].shape[0]
    N = B * L * K

    # Diffusion-step embedding (per batch element) hoisted to XLA: table row -> Linear
    # -> SiLU -> Linear -> SiLU, then folded with the positional + spatial encodings
    # into a single additive [N, C] bias.
    with jax.default_matmul_precision("highest"):
        drow = params["dtab"][diffusion_step]                                  # [B, C]
        d = jax.nn.silu(_linear(drow, params["dW1"], params["db1"]))
        d = jax.nn.silu(_linear(d, params["dW2"], params["db2"]))              # [B, C]
    pe = _positional_encoding(L, C)
    add_bias = (pe[None, :, None, :] + params["spat"][None, None, :, :]
                + d[:, None, None, :]).reshape(N, C).astype(jnp.float32)

    # Lane-dense activation input: rows are flattened (b, l, k), columns = (xin, mask)
    # with xin = x*m + nz*(1-m) precomputed here.
    xin = (x * mask + noisy_data * (1.0 - mask))[..., 0]
    xs = jnp.stack([xin, mask[..., 0]],
                   axis=-1).astype(jnp.float32).reshape(N, 2)

    # Precomputed block-diagonal additive attention biases: [2, N, N]
    # (index 0: temporal = same batch & same node; index 1: spatial = same batch & time)
    n = jnp.arange(N, dtype=jnp.int32)
    b_idx = n // (L * K)
    l_idx = (n // K) % L
    k_idx = n % K
    t_same = (b_idx[:, None] == b_idx[None, :]) & (k_idx[:, None] == k_idx[None, :])
    s_same = (b_idx[:, None] == b_idx[None, :]) & (l_idx[:, None] == l_idx[None, :])
    neg = jnp.float32(-1e9)
    bias_masks = jnp.stack([jnp.where(t_same, 0.0, neg),
                            jnp.where(s_same, 0.0, neg)]).astype(jnp.float32)

    # Packed parameter slabs, matrices transposed to [in, out] and cast to bf16
    # (MXU-native); biases / LN gains stay f32 (tiny, added to f32 accumulators).
    def T(w):
        return jnp.transpose(w)

    wm = jnp.stack([
        T(params["inW2"]), T(params["skipW"]), T(params["toW"]), T(params["soW"]),
        T(params["ffW1"]), T(params["ffW2"]), T(params["oW1"]), T(params["oW2"]),
    ]).astype(jnp.bfloat16)                                                    # [8,C,C]
    wqkv = jnp.stack([
        jnp.concatenate([T(params["tW"][0]), T(params["tW"][1]),
                         T(params["tW"][2])], axis=1),
        jnp.concatenate([T(params["sW"][0]), T(params["sW"][1]),
                         T(params["sW"][2])], axis=1),
    ]).astype(jnp.bfloat16)                                                    # [2,C,3C]
    bqkv = jnp.stack([params["tb"].reshape(-1),
                      params["sb"].reshape(-1)]).astype(jnp.float32)           # [2,3C]
    vb = jnp.stack([
        params["in_wx"], params["in_wm"], params["in_b1"], params["inb2"],
        params["skipb"], params["g1"], params["be1"], params["tob"],
        params["g2"], params["be2"], params["sob"],
        params["g3"], params["be3"], params["ffb1"], params["ffb2"],
        params["ob1"], params["ob2"], params["oW3"][0],
    ]).astype(jnp.float32)                                                     # [18, C]

    kernel = functools.partial(csdi_kernel, C=C)
    out_row = pl.pallas_call(
        kernel,
        out_shape=jax.ShapeDtypeStruct((1, N), jnp.float32),
        grid=(1,),
        in_specs=[
            pl.BlockSpec((N, 2), lambda i: (0, 0)),
            pl.BlockSpec((N, C), lambda i: (0, 0)),
            pl.BlockSpec((2, N, N), lambda i: (0, 0, 0)),
            pl.BlockSpec(wm.shape, lambda i: (0, 0, 0)),
            pl.BlockSpec(wqkv.shape, lambda i: (0, 0, 0)),
            pl.BlockSpec(bqkv.shape, lambda i: (0, 0)),
            pl.BlockSpec(vb.shape, lambda i: (0, 0)),
        ],
        out_specs=pl.BlockSpec((1, N), lambda i: (0, 0)),
        compiler_params=pltpu.CompilerParams(dimension_semantics=("arbitrary",)),
    )(xs, add_bias, bias_masks, wm, wqkv, bqkv, vb)

    # Readout bias added here (saves one input DMA / BlockSpec in the kernel).
    out = out_row + params["ob3"].reshape(1, 1).astype(jnp.float32)
    return out.reshape(B, L, K, 1)


# ----------------------------------------------------------------------------------
# Pure-JAX reference (faithful grouped-attention, f32 throughout)
# ----------------------------------------------------------------------------------
def _attention_ref(xn, in_w, in_b, out_w, out_b, axis):
    q = _linear(xn, in_w[0], in_b[0])
    k = _linear(xn, in_w[1], in_b[1])
    v = _linear(xn, in_w[2], in_b[2])
    scale = 1.0 / math.sqrt(q.shape[-1])
    if axis == "time":
        s = jnp.einsum("...lkc,...mkc->...klm", q, k,
                       preferred_element_type=jnp.float32) * scale
        p = _softmax(s)
        o = jnp.einsum("...klm,...mkc->...lkc", p, v,
                       preferred_element_type=jnp.float32)
    else:
        s = jnp.einsum("...lkc,...lmc->...lkm", q, k,
                       preferred_element_type=jnp.float32) * scale
        p = _softmax(s)
        o = jnp.einsum("...lkm,...lmc->...lkc", p, v,
                       preferred_element_type=jnp.float32)
    return _linear(o, out_w, out_b)


def _csdi_math_ref(x, m, nz, pe, spat, drow, w):
    x = x * m + nz * (1.0 - m)
    h = x[..., None] * w["in_wx"] + m[..., None] * w["in_wm"] + w["in_b1"]
    h = jax.nn.relu(h)
    h = jax.nn.relu(_linear(h, w["inW2"], w["inb2"]))
    h = h + pe[:, None, :]
    h = h + spat
    d = jax.nn.silu(_linear(drow, w["dW1"], w["db1"]))
    d = jax.nn.silu(_linear(d, w["dW2"], w["db2"]))
    h = h + d[..., None, None, :]
    xn = _layer_norm_ref(h, w["g1"], w["be1"])
    h = _linear(h, w["skipW"], w["skipb"]) + _attention_ref(
        xn, w["tW"], w["tb"], w["toW"], w["tob"], "time")
    xn = _layer_norm_ref(h, w["g2"], w["be2"])
    h = h + _attention_ref(xn, w["sW"], w["sb"], w["soW"], w["sob"], "nodes")
    xn = _layer_norm_ref(h, w["g3"], w["be3"])
    ff = jax.nn.relu(_linear(xn, w["ffW1"], w["ffb1"]))
    h = h + _linear(ff, w["ffW2"], w["ffb2"])
    o = jax.nn.relu(_linear(h, w["oW1"], w["ob1"]))
    o = jax.nn.relu(_linear(o, w["oW2"], w["ob2"]))
    return _linear(o, w["oW3"], w["ob3"])


def csdi_forward_ref(params, x, mask, noisy_data, diffusion_step):
    _, L, _, _ = x.shape
    C = params["inW2"].shape[0]
    pe = _positional_encoding(L, C)
    drow = params["dtab"][diffusion_step]
    return _csdi_math_ref(x[..., 0].astype(jnp.float32),
                          mask[..., 0].astype(jnp.float32),
                          noisy_data[..., 0].astype(jnp.float32),
                          pe, params["spat"], drow, params)


# ----------------------------------------------------------------------------------
if __name__ == "__main__":
    B, L, K, C = 2, 8, 8, 64          # batch, time, nodes(spatial_dim), hidden_dim
    input_dim, num_steps = 1, 50

    params = init_params(jax.random.PRNGKey(0), C=C, num_nodes=K,
                         num_steps=num_steps, input_dim=input_dim)

    kx, km, kn, kd = jax.random.split(jax.random.PRNGKey(0), 4)
    x = jax.random.normal(kx, (B, L, K, input_dim), jnp.float32)
    mask = (jax.random.uniform(km, (B, L, K, input_dim)) > 0.3).astype(jnp.float32)
    noisy = jax.random.normal(kn, (B, L, K, input_dim), jnp.float32)
    dstep = jax.random.randint(kd, (B,), 0, num_steps, dtype=jnp.int32)

    out = csdi_forward_pallas(params, x, mask, noisy, dstep)
    out = jax.block_until_ready(out)
    assert out.shape == (B, L, K, input_dim)

    with jax.default_matmul_precision("highest"):
        ref = csdi_forward_ref(params, x, mask, noisy, dstep)
    ref = jax.block_until_ready(ref)
    err = float(jnp.max(jnp.abs(out - ref)))
    # Tolerance loosened (1e-2 -> 3e-2) to account for the bf16 MXU operands and
    # approx-reciprocal softmax adopted per the perf review (f32 accumulation kept).
    assert err < 3e-2, f"mismatch vs reference: max abs err = {err}"

    print("KERNEL_OK")
</pallas_src>

<mosaic_0001>
module attributes {stable_mosaic.version = 11 : i64} {
  func.func @csdi_kernel(%arg0: i32, %arg1: memref<128x2xf32, #tpu.memory_space<vmem>>, %arg2: memref<128x64xf32, #tpu.memory_space<vmem>>, %arg3: memref<2x128x128xf32, #tpu.memory_space<vmem>>, %arg4: memref<8x64x64xbf16, #tpu.memory_space<vmem>>, %arg5: memref<2x64x192xbf16, #tpu.memory_space<vmem>>, %arg6: memref<2x192xf32, #tpu.memory_space<vmem>>, %arg7: memref<18x64xf32, #tpu.memory_space<vmem>>, %arg8: memref<1x128xf32, #tpu.memory_space<vmem>>) attributes {dimension_semantics = [#tpu.dimension_semantics<arbitrary>], iteration_bounds = array<i64: 1>, scalar_prefetch = 0 : i64, scratch_operands = 0 : i64, tpu.core_type = #tpu.core_type<tc>, window_params = [{pipeline_mode = #tpu.pipeline_mode<synchronous>, transform_indices = @transform_0, window_bounds = array<i64: 128, 2>}, {pipeline_mode = #tpu.pipeline_mode<synchronous>, transform_indices = @transform_1, window_bounds = array<i64: 128, 64>}, {pipeline_mode = #tpu.pipeline_mode<synchronous>, transform_indices = @transform_2, window_bounds = array<i64: 2, 128, 128>}, {pipeline_mode = #tpu.pipeline_mode<synchronous>, transform_indices = @transform_3, window_bounds = array<i64: 8, 64, 64>}, {pipeline_mode = #tpu.pipeline_mode<synchronous>, transform_indices = @transform_4, window_bounds = array<i64: 2, 64, 192>}, {pipeline_mode = #tpu.pipeline_mode<synchronous>, transform_indices = @transform_5, window_bounds = array<i64: 2, 192>}, {pipeline_mode = #tpu.pipeline_mode<synchronous>, transform_indices = @transform_6, window_bounds = array<i64: 18, 64>}, {pipeline_mode = #tpu.pipeline_mode<synchronous>, transform_indices = @transform_7, window_bounds = array<i64: 1, 128>}]} {
    %c0 = arith.constant 0 : index
    %c0_0 = arith.constant 0 : index
    %0 = vector.load %arg1[%c0, %c0_0] : memref<128x2xf32, #tpu.memory_space<vmem>>, vector<128x1xf32>
    %c0_1 = arith.constant 0 : index
    %c1 = arith.constant 1 : index
    %1 = vector.load %arg1[%c0_1, %c1] : memref<128x2xf32, #tpu.memory_space<vmem>>, vector<128x1xf32>
    %c0_2 = arith.constant 0 : index
    %c0_3 = arith.constant 0 : index
    %2 = vector.load %arg7[%c0_2, %c0_3] : memref<18x64xf32, #tpu.memory_space<vmem>>, vector<1x64xf32>
    %3 = vector.shape_cast %2 : vector<1x64xf32> to vector<64xf32>
    %4 = vector.shape_cast %3 : vector<64xf32> to vector<1x64xf32>
    %5 = vector.broadcast %0 : vector<128x1xf32> to vector<128x64xf32>
    %6 = vector.broadcast %4 : vector<1x64xf32> to vector<128x64xf32>
    %7 = arith.mulf %5, %6 : vector<128x64xf32>
    %c1_4 = arith.constant 1 : index
    %c0_5 = arith.constant 0 : index
    %8 = vector.load %arg7[%c1_4, %c0_5] : memref<18x64xf32, #tpu.memory_space<vmem>>, vector<1x64xf32>
    %9 = vector.shape_cast %8 : vector<1x64xf32> to vector<64xf32>
    %10 = vector.shape_cast %9 : vector<64xf32> to vector<1x64xf32>
    %11 = vector.broadcast %1 : vector<128x1xf32> to vector<128x64xf32>
    %12 = vector.broadcast %10 : vector<1x64xf32> to vector<128x64xf32>
    %13 = arith.mulf %11, %12 : vector<128x64xf32>
    %14 = arith.addf %7, %13 : vector<128x64xf32>
    %c2 = arith.constant 2 : index
    %c0_6 = arith.constant 0 : index
    %15 = vector.load %arg7[%c2, %c0_6] : memref<18x64xf32, #tpu.memory_space<vmem>>, vector<1x64xf32>
    %16 = vector.shape_cast %15 : vector<1x64xf32> to vector<64xf32>
    %17 = vector.shape_cast %16 : vector<64xf32> to vector<1x64xf32>
    %18 = vector.broadcast %17 : vector<1x64xf32> to vector<128x64xf32>
    %19 = arith.addf %14, %18 : vector<128x64xf32>
    %cst = arith.constant 0.000000e+00 : f32
    %20 = vector.broadcast %cst : f32 to vector<128x64xf32>
    %21 = arith.maximumf %19, %20 : vector<128x64xf32>
    %c0_7 = arith.constant 0 : index
    %c0_8 = arith.constant 0 : index
    %c0_9 = arith.constant 0 : index
    %22 = vector.load %arg4[%c0_7, %c0_8, %c0_9] : memref<8x64x64xbf16, #tpu.memory_space<vmem>>, vector<1x64x64xbf16>
    %23 = vector.shape_cast %22 : vector<1x64x64xbf16> to vector<64x64xbf16>
    %24 = arith.truncf %21 : vector<128x64xf32> to vector<128x64xbf16>
    %cst_10 = arith.constant dense<0.000000e+00> : vector<128x64xf32>
    %25 = tpu.matmul %24, %23, %cst_10 {dimension_numbers = #tpu.dot_dimension_numbers<[1], [0], [0], [1], [0, 0, 1, 1], [], []>} : vector<128x64xbf16>, vector<64x64xbf16>, vector<128x64xf32> -> vector<128x64xf32>
    %c3 = arith.constant 3 : index
    %c0_11 = arith.constant 0 : index
    %26 = vector.load %arg7[%c3, %c0_11] : memref<18x64xf32, #tpu.memory_space<vmem>>, vector<1x64xf32>
    %27 = vector.shape_cast %26 : vector<1x64xf32> to vector<64xf32>
    %28 = vector.shape_cast %27 : vector<64xf32> to vector<1x64xf32>
    %29 = vector.broadcast %28 : vector<1x64xf32> to vector<128x64xf32>
    %30 = arith.addf %25, %29 : vector<128x64xf32>
    %cst_12 = arith.constant 0.000000e+00 : f32
    %31 = vector.broadcast %cst_12 : f32 to vector<128x64xf32>
    %32 = arith.maximumf %30, %31 : vector<128x64xf32>
    %c0_13 = arith.constant 0 : index
    %c0_14 = arith.constant 0 : index
    %33 = vector.load %arg2[%c0_13, %c0_14] : memref<128x64xf32, #tpu.memory_space<vmem>>, vector<128x64xf32>
    %34 = arith.addf %32, %33 : vector<128x64xf32>
    %c5 = arith.constant 5 : index
    %c0_15 = arith.constant 0 : index
    %35 = vector.load %arg7[%c5, %c0_15] : memref<18x64xf32, #tpu.memory_space<vmem>>, vector<1x64xf32>
    %36 = vector.shape_cast %35 : vector<1x64xf32> to vector<64xf32>
    %c6 = arith.constant 6 : index
    %c0_16 = arith.constant 0 : index
    %37 = vector.load %arg7[%c6, %c0_16] : memref<18x64xf32, #tpu.memory_space<vmem>>, vector<1x64xf32>
    %38 = vector.shape_cast %37 : vector<1x64xf32> to vector<64xf32>
    %cst_17 = arith.constant dense<0.000000e+00> : vector<128xf32>
    %39 = vector.multi_reduction <add>, %34, %cst_17 [1] : vector<128x64xf32> to vector<128xf32>
    %40 = vector.shape_cast %39 : vector<128xf32> to vector<128x1xf32>
    %cst_18 = arith.constant 1.562500e-02 : f32
    %41 = vector.broadcast %cst_18 : f32 to vector<128x1xf32>
    %42 = arith.mulf %40, %41 : vector<128x1xf32>
    %43 = arith.mulf %34, %34 : vector<128x64xf32>
    %cst_19 = arith.constant dense<0.000000e+00> : vector<128xf32>
    %44 = vector.multi_reduction <add>, %43, %cst_19 [1] : vector<128x64xf32> to vector<128xf32>
    %45 = vector.shape_cast %44 : vector<128xf32> to vector<128x1xf32>
    %cst_20 = arith.constant 1.562500e-02 : f32
    %46 = vector.broadcast %cst_20 : f32 to vector<128x1xf32>
    %47 = arith.mulf %45, %46 : vector<128x1xf32>
    %48 = arith.mulf %42, %42 : vector<128x1xf32>
    %49 = arith.subf %47, %48 : vector<128x1xf32>
    %50 = vector.broadcast %42 : vector<128x1xf32> to vector<128x64xf32>
    %51 = arith.subf %34, %50 : vector<128x64xf32>
    %cst_21 = arith.constant 9.99999974E-6 : f32
    %52 = vector.broadcast %cst_21 : f32 to vector<128x1xf32>
    %53 = arith.addf %49, %52 : vector<128x1xf32>
    %54 = math.rsqrt %53 : vector<128x1xf32>
    %55 = vector.broadcast %54 : vector<128x1xf32> to vector<128x64xf32>
    %56 = arith.mulf %51, %55 : vector<128x64xf32>
    %57 = vector.shape_cast %36 : vector<64xf32> to vector<1x64xf32>
    %58 = vector.broadcast %57 : vector<1x64xf32> to vector<128x64xf32>
    %59 = arith.mulf %56, %58 : vector<128x64xf32>
    %60 = vector.shape_cast %38 : vector<64xf32> to vector<1x64xf32>
    %61 = vector.broadcast %60 : vector<1x64xf32> to vector<128x64xf32>
    %62 = arith.addf %59, %61 : vector<128x64xf32>
    %c1_22 = arith.constant 1 : index
    %c0_23 = arith.constant 0 : index
    %c0_24 = arith.constant 0 : index
    %63 = vector.load %arg4[%c1_22, %c0_23, %c0_24] : memref<8x64x64xbf16, #tpu.memory_space<vmem>>, vector<1x64x64xbf16>
    %64 = vector.shape_cast %63 : vector<1x64x64xbf16> to vector<64x64xbf16>
    %65 = arith.truncf %34 : vector<128x64xf32> to vector<128x64xbf16>
    %cst_25 = arith.constant dense<0.000000e+00> : vector<128x64xf32>
    %66 = tpu.matmul %65, %64, %cst_25 {dimension_numbers = #tpu.dot_dimension_numbers<[1], [0], [0], [1], [0, 0, 1, 1], [], []>} : vector<128x64xbf16>, vector<64x64xbf16>, vector<128x64xf32> -> vector<128x64xf32>
    %c4 = arith.constant 4 : index
    %c0_26 = arith.constant 0 : index
    %67 = vector.load %arg7[%c4, %c0_26] : memref<18x64xf32, #tpu.memory_space<vmem>>, vector<1x64xf32>
    %68 = vector.shape_cast %67 : vector<1x64xf32> to vector<64xf32>
    %69 = vector.shape_cast %68 : vector<64xf32> to vector<1x64xf32>
    %70 = vector.broadcast %69 : vector<1x64xf32> to vector<128x64xf32>
    %71 = arith.addf %66, %70 : vector<128x64xf32>
    %c0_27 = arith.constant 0 : index
    %c0_28 = arith.constant 0 : index
    %c0_29 = arith.constant 0 : index
    %72 = vector.load %arg5[%c0_27, %c0_28, %c0_29] : memref<2x64x192xbf16, #tpu.memory_space<vmem>>, vector<1x64x192xbf16>
    %73 = vector.shape_cast %72 : vector<1x64x192xbf16> to vector<64x192xbf16>
    %c0_30 = arith.constant 0 : index
    %c0_31 = arith.constant 0 : index
    %74 = vector.load %arg6[%c0_30, %c0_31] : memref<2x192xf32, #tpu.memory_space<vmem>>, vector<1x192xf32>
    %75 = vector.shape_cast %74 : vector<1x192xf32> to vector<192xf32>
    %c2_32 = arith.constant 2 : index
    %c0_33 = arith.constant 0 : index
    %c0_34 = arith.constant 0 : index
    %76 = vector.load %arg4[%c2_32, %c0_33, %c0_34] : memref<8x64x64xbf16, #tpu.memory_space<vmem>>, vector<1x64x64xbf16>
    %77 = vector.shape_cast %76 : vector<1x64x64xbf16> to vector<64x64xbf16>
    %c7 = arith.constant 7 : index
    %c0_35 = arith.constant 0 : index
    %78 = vector.load %arg7[%c7, %c0_35] : memref<18x64xf32, #tpu.memory_space<vmem>>, vector<1x64xf32>
    %79 = vector.shape_cast %78 : vector<1x64xf32> to vector<64xf32>
    %c0_36 = arith.constant 0 : index
    %c0_37 = arith.constant 0 : index
    %c0_38 = arith.constant 0 : index
    %80 = vector.load %arg3[%c0_36, %c0_37, %c0_38] : memref<2x128x128xf32, #tpu.memory_space<vmem>>, vector<1x128x128xf32>
    %81 = vector.shape_cast %80 : vector<1x128x128xf32> to vector<128x128xf32>
    %82 = arith.truncf %62 : vector<128x64xf32> to vector<128x64xbf16>
    %cst_39 = arith.constant dense<0.000000e+00> : vector<128x192xf32>
    %83 = tpu.matmul %82, %73, %cst_39 {dimension_numbers = #tpu.dot_dimension_numbers<[1], [0], [0], [1], [0, 0, 1, 1], [], []>} : vector<128x64xbf16>, vector<64x192xbf16>, vector<128x192xf32> -> vector<128x192xf32>
    %84 = vector.shape_cast %75 : vector<192xf32> to vector<1x192xf32>
    %85 = vector.broadcast %84 : vector<1x192xf32> to vector<128x192xf32>
    %86 = arith.addf %83, %85 : vector<128x192xf32>
    %87 = vector.extract_strided_slice %86 {offsets = [0, 0], sizes = [128, 64], strides = [1, 1]} : vector<128x192xf32> to vector<128x64xf32>
    %88 = vector.extract_strided_slice %86 {offsets = [0, 64], sizes = [128, 64], strides = [1, 1]} : vector<128x192xf32> to vector<128x64xf32>
    %89 = vector.extract_strided_slice %86 {offsets = [0, 128], sizes = [128, 64], strides = [1, 1]} : vector<128x192xf32> to vector<128x64xf32>
    %90 = arith.truncf %87 : vector<128x64xf32> to vector<128x64xbf16>
    %91 = arith.truncf %88 : vector<128x64xf32> to vector<128x64xbf16>
    %cst_40 = arith.constant dense<0.000000e+00> : vector<128x128xf32>
    %92 = tpu.matmul %90, %91, %cst_40 {dimension_numbers = #tpu.dot_dimension_numbers<[1], [1], [0], [0], [0, 0, 1, 0], [], []>} : vector<128x64xbf16>, vector<128x64xbf16>, vector<128x128xf32> -> vector<128x128xf32>
    %cst_41 = arith.constant 1.250000e-01 : f32
    %93 = vector.broadcast %cst_41 : f32 to vector<128x128xf32>
    %94 = arith.mulf %92, %93 : vector<128x128xf32>
    %95 = arith.addf %94, %81 : vector<128x128xf32>
    %cst_42 = arith.constant dense<0xFF800000> : vector<128xf32>
    %96 = vector.multi_reduction <maximumf>, %95, %cst_42 [1] : vector<128x128xf32> to vector<128xf32>
    %97 = vector.shape_cast %96 : vector<128xf32> to vector<128x1xf32>
    %98 = vector.broadcast %97 : vector<128x1xf32> to vector<128x128xf32>
    %99 = arith.subf %95, %98 : vector<128x128xf32>
    %100 = math.exp %99 : vector<128x128xf32>
    %cst_43 = arith.constant dense<0.000000e+00> : vector<128xf32>
    %101 = vector.multi_reduction <add>, %100, %cst_43 [1] : vector<128x128xf32> to vector<128xf32>
    %102 = vector.shape_cast %101 : vector<128xf32> to vector<128x1xf32>
    %103 = tpu.reciprocal %102 {approx = true} : vector<128x1xf32> -> vector<128x1xf32>
    %104 = vector.broadcast %103 : vector<128x1xf32> to vector<128x128xf32>
    %105 = arith.mulf %100, %104 : vector<128x128xf32>
    %106 = arith.truncf %105 : vector<128x128xf32> to vector<128x128xbf16>
    %107 = arith.truncf %89 : vector<128x64xf32> to vector<128x64xbf16>
    %cst_44 = arith.constant dense<0.000000e+00> : vector<128x64xf32>
    %108 = tpu.matmul %106, %107, %cst_44 {dimension_numbers = #tpu.dot_dimension_numbers<[1], [0], [0], [1], [0, 0, 1, 1], [], []>} : vector<128x128xbf16>, vector<128x64xbf16>, vector<128x64xf32> -> vector<128x64xf32>
    %109 = arith.truncf %108 : vector<128x64xf32> to vector<128x64xbf16>
    %cst_45 = arith.constant dense<0.000000e+00> : vector<128x64xf32>
    %110 = tpu.matmul %109, %77, %cst_45 {dimension_numbers = #tpu.dot_dimension_numbers<[1], [0], [0], [1], [0, 0, 1, 1], [], []>} : vector<128x64xbf16>, vector<64x64xbf16>, vector<128x64xf32> -> vector<128x64xf32>
    %111 = vector.shape_cast %79 : vector<64xf32> to vector<1x64xf32>
    %112 = vector.broadcast %111 : vector<1x64xf32> to vector<128x64xf32>
    %113 = arith.addf %110, %112 : vector<128x64xf32>
    %114 = arith.addf %71, %113 : vector<128x64xf32>
    %c8 = arith.constant 8 : index
    %c0_46 = arith.constant 0 : index
    %115 = vector.load %arg7[%c8, %c0_46] : memref<18x64xf32, #tpu.memory_space<vmem>>, vector<1x64xf32>
    %116 = vector.shape_cast %115 : vector<1x64xf32> to vector<64xf32>
    %c9 = arith.constant 9 : index
    %c0_47 = arith.constant 0 : index
    %117 = vector.load %arg7[%c9, %c0_47] : memref<18x64xf32, #tpu.memory_space<vmem>>, vector<1x64xf32>
    %118 = vector.shape_cast %117 : vector<1x64xf32> to vector<64xf32>
    %cst_48 = arith.constant dense<0.000000e+00> : vector<128xf32>
    %119 = vector.multi_reduction <add>, %114, %cst_48 [1] : vector<128x64xf32> to vector<128xf32>
    %120 = vector.shape_cast %119 : vector<128xf32> to vector<128x1xf32>
    %cst_49 = arith.constant 1.562500e-02 : f32
    %121 = vector.broadcast %cst_49 : f32 to vector<128x1xf32>
    %122 = arith.mulf %120, %121 : vector<128x1xf32>
    %123 = arith.mulf %114, %114 : vector<128x64xf32>
    %cst_50 = arith.constant dense<0.000000e+00> : vector<128xf32>
    %124 = vector.multi_reduction <add>, %123, %cst_50 [1] : vector<128x64xf32> to vector<128xf32>
    %125 = vector.shape_cast %124 : vector<128xf32> to vector<128x1xf32>
    %cst_51 = arith.constant 1.562500e-02 : f32
    %126 = vector.broadcast %cst_51 : f32 to vector<128x1xf32>
    %127 = arith.mulf %125, %126 : vector<128x1xf32>
    %128 = arith.mulf %122, %122 : vector<128x1xf32>
    %129 = arith.subf %127, %128 : vector<128x1xf32>
    %130 = vector.broadcast %122 : vector<128x1xf32> to vector<128x64xf32>
    %131 = arith.subf %114, %130 : vector<128x64xf32>
    %cst_52 = arith.constant 9.99999974E-6 : f32
    %132 = vector.broadcast %cst_52 : f32 to vector<128x1xf32>
    %133 = arith.addf %129, %132 : vector<128x1xf32>
    %134 = math.rsqrt %133 : vector<128x1xf32>
    %135 = vector.broadcast %134 : vector<128x1xf32> to vector<128x64xf32>
    %136 = arith.mulf %131, %135 : vector<128x64xf32>
    %137 = vector.shape_cast %116 : vector<64xf32> to vector<1x64xf32>
    %138 = vector.broadcast %137 : vector<1x64xf32> to vector<128x64xf32>
    %139 = arith.mulf %136, %138 : vector<128x64xf32>
    %140 = vector.shape_cast %118 : vector<64xf32> to vector<1x64xf32>
    %141 = vector.broadcast %140 : vector<1x64xf32> to vector<128x64xf32>
    %142 = arith.addf %139, %141 : vector<128x64xf32>
    %c1_53 = arith.constant 1 : index
    %c0_54 = arith.constant 0 : index
    %c0_55 = arith.constant 0 : index
    %143 = vector.load %arg5[%c1_53, %c0_54, %c0_55] : memref<2x64x192xbf16, #tpu.memory_space<vmem>>, vector<1x64x192xbf16>
    %144 = vector.shape_cast %143 : vector<1x64x192xbf16> to vector<64x192xbf16>
    %c1_56 = arith.constant 1 : index
    %c0_57 = arith.constant 0 : index
    %145 = vector.load %arg6[%c1_56, %c0_57] : memref<2x192xf32, #tpu.memory_space<vmem>>, vector<1x192xf32>
    %146 = vector.shape_cast %145 : vector<1x192xf32> to vector<192xf32>
    %c3_58 = arith.constant 3 : index
    %c0_59 = arith.constant 0 : index
    %c0_60 = arith.constant 0 : index
    %147 = vector.load %arg4[%c3_58, %c0_59, %c0_60] : memref<8x64x64xbf16, #tpu.memory_space<vmem>>, vector<1x64x64xbf16>
    %148 = vector.shape_cast %147 : vector<1x64x64xbf16> to vector<64x64xbf16>
    %c10 = arith.constant 10 : index
    %c0_61 = arith.constant 0 : index
    %149 = vector.load %arg7[%c10, %c0_61] : memref<18x64xf32, #tpu.memory_space<vmem>>, vector<1x64xf32>
    %150 = vector.shape_cast %149 : vector<1x64xf32> to vector<64xf32>
    %c1_62 = arith.constant 1 : index
    %c0_63 = arith.constant 0 : index
    %c0_64 = arith.constant 0 : index
    %151 = vector.load %arg3[%c1_62, %c0_63, %c0_64] : memref<2x128x128xf32, #tpu.memory_space<vmem>>, vector<1x128x128xf32>
    %152 = vector.shape_cast %151 : vector<1x128x128xf32> to vector<128x128xf32>
    %153 = arith.truncf %142 : vector<128x64xf32> to vector<128x64xbf16>
    %cst_65 = arith.constant dense<0.000000e+00> : vector<128x192xf32>
    %154 = tpu.matmul %153, %144, %cst_65 {dimension_numbers = #tpu.dot_dimension_numbers<[1], [0], [0], [1], [0, 0, 1, 1], [], []>} : vector<128x64xbf16>, vector<64x192xbf16>, vector<128x192xf32> -> vector<128x192xf32>
    %155 = vector.shape_cast %146 : vector<192xf32> to vector<1x192xf32>
    %156 = vector.broadcast %155 : vector<1x192xf32> to vector<128x192xf32>
    %157 = arith.addf %154, %156 : vector<128x192xf32>
    %158 = vector.extract_strided_slice %157 {offsets = [0, 0], sizes = [128, 64], strides = [1, 1]} : vector<128x192xf32> to vector<128x64xf32>
    %159 = vector.extract_strided_slice %157 {offsets = [0, 64], sizes = [128, 64], strides = [1, 1]} : vector<128x192xf32> to vector<128x64xf32>
    %160 = vector.extract_strided_slice %157 {offsets = [0, 128], sizes = [128, 64], strides = [1, 1]} : vector<128x192xf32> to vector<128x64xf32>
    %161 = arith.truncf %158 : vector<128x64xf32> to vector<128x64xbf16>
    %162 = arith.truncf %159 : vector<128x64xf32> to vector<128x64xbf16>
    %cst_66 = arith.constant dense<0.000000e+00> : vector<128x128xf32>
    %163 = tpu.matmul %161, %162, %cst_66 {dimension_numbers = #tpu.dot_dimension_numbers<[1], [1], [0], [0], [0, 0, 1, 0], [], []>} : vector<128x64xbf16>, vector<128x64xbf16>, vector<128x128xf32> -> vector<128x128xf32>
    %cst_67 = arith.constant 1.250000e-01 : f32
    %164 = vector.broadcast %cst_67 : f32 to vector<128x128xf32>
    %165 = arith.mulf %163, %164 : vector<128x128xf32>
    %166 = arith.addf %165, %152 : vector<128x128xf32>
    %cst_68 = arith.constant dense<0xFF800000> : vector<128xf32>
    %167 = vector.multi_reduction <maximumf>, %166, %cst_68 [1] : vector<128x128xf32> to vector<128xf32>
    %168 = vector.shape_cast %167 : vector<128xf32> to vector<128x1xf32>
    %169 = vector.broadcast %168 : vector<128x1xf32> to vector<128x128xf32>
    %170 = arith.subf %166, %169 : vector<128x128xf32>
    %171 = math.exp %170 : vector<128x128xf32>
    %cst_69 = arith.constant dense<0.000000e+00> : vector<128xf32>
    %172 = vector.multi_reduction <add>, %171, %cst_69 [1] : vector<128x128xf32> to vector<128xf32>
    %173 = vector.shape_cast %172 : vector<128xf32> to vector<128x1xf32>
    %174 = tpu.reciprocal %173 {approx = true} : vector<128x1xf32> -> vector<128x1xf32>
    %175 = vector.broadcast %174 : vector<128x1xf32> to vector<128x128xf32>
    %176 = arith.mulf %171, %175 : vector<128x128xf32>
    %177 = arith.truncf %176 : vector<128x128xf32> to vector<128x128xbf16>
    %178 = arith.truncf %160 : vector<128x64xf32> to vector<128x64xbf16>
    %cst_70 = arith.constant dense<0.000000e+00> : vector<128x64xf32>
    %179 = tpu.matmul %177, %178, %cst_70 {dimension_numbers = #tpu.dot_dimension_numbers<[1], [0], [0], [1], [0, 0, 1, 1], [], []>} : vector<128x128xbf16>, vector<128x64xbf16>, vector<128x64xf32> -> vector<128x64xf32>
    %180 = arith.truncf %179 : vector<128x64xf32> to vector<128x64xbf16>
    %cst_71 = arith.constant dense<0.000000e+00> : vector<128x64xf32>
    %181 = tpu.matmul %180, %148, %cst_71 {dimension_numbers = #tpu.dot_dimension_numbers<[1], [0], [0], [1], [0, 0, 1, 1], [], []>} : vector<128x64xbf16>, vector<64x64xbf16>, vector<128x64xf32> -> vector<128x64xf32>
    %182 = vector.shape_cast %150 : vector<64xf32> to vector<1x64xf32>
    %183 = vector.broadcast %182 : vector<1x64xf32> to vector<128x64xf32>
    %184 = arith.addf %181, %183 : vector<128x64xf32>
    %185 = arith.addf %114, %184 : vector<128x64xf32>
    %c11 = arith.constant 11 : index
    %c0_72 = arith.constant 0 : index
    %186 = vector.load %arg7[%c11, %c0_72] : memref<18x64xf32, #tpu.memory_space<vmem>>, vector<1x64xf32>
    %187 = vector.shape_cast %186 : vector<1x64xf32> to vector<64xf32>
    %c12 = arith.constant 12 : index
    %c0_73 = arith.constant 0 : index
    %188 = vector.load %arg7[%c12, %c0_73] : memref<18x64xf32, #tpu.memory_space<vmem>>, vector<1x64xf32>
    %189 = vector.shape_cast %188 : vector<1x64xf32> to vector<64xf32>
    %cst_74 = arith.constant dense<0.000000e+00> : vector<128xf32>
    %190 = vector.multi_reduction <add>, %185, %cst_74 [1] : vector<128x64xf32> to vector<128xf32>
    %191 = vector.shape_cast %190 : vector<128xf32> to vector<128x1xf32>
    %cst_75 = arith.constant 1.562500e-02 : f32
    %192 = vector.broadcast %cst_75 : f32 to vector<128x1xf32>
    %193 = arith.mulf %191, %192 : vector<128x1xf32>
    %194 = arith.mulf %185, %185 : vector<128x64xf32>
    %cst_76 = arith.constant dense<0.000000e+00> : vector<128xf32>
    %195 = vector.multi_reduction <add>, %194, %cst_76 [1] : vector<128x64xf32> to vector<128xf32>
    %196 = vector.shape_cast %195 : vector<128xf32> to vector<128x1xf32>
    %cst_77 = arith.constant 1.562500e-02 : f32
    %197 = vector.broadcast %cst_77 : f32 to vector<128x1xf32>
    %198 = arith.mulf %196, %197 : vector<128x1xf32>
    %199 = arith.mulf %193, %193 : vector<128x1xf32>
    %200 = arith.subf %198, %199 : vector<128x1xf32>
    %201 = vector.broadcast %193 : vector<128x1xf32> to vector<128x64xf32>
    %202 = arith.subf %185, %201 : vector<128x64xf32>
    %cst_78 = arith.constant 9.99999974E-6 : f32
    %203 = vector.broadcast %cst_78 : f32 to vector<128x1xf32>
    %204 = arith.addf %200, %203 : vector<128x1xf32>
    %205 = math.rsqrt %204 : vector<128x1xf32>
    %206 = vector.broadcast %205 : vector<128x1xf32> to vector<128x64xf32>
    %207 = arith.mulf %202, %206 : vector<128x64xf32>
    %208 = vector.shape_cast %187 : vector<64xf32> to vector<1x64xf32>
    %209 = vector.broadcast %208 : vector<1x64xf32> to vector<128x64xf32>
    %210 = arith.mulf %207, %209 : vector<128x64xf32>
    %211 = vector.shape_cast %189 : vector<64xf32> to vector<1x64xf32>
    %212 = vector.broadcast %211 : vector<1x64xf32> to vector<128x64xf32>
    %213 = arith.addf %210, %212 : vector<128x64xf32>
    %c4_79 = arith.constant 4 : index
    %c0_80 = arith.constant 0 : index
    %c0_81 = arith.constant 0 : index
    %214 = vector.load %arg4[%c4_79, %c0_80, %c0_81] : memref<8x64x64xbf16, #tpu.memory_space<vmem>>, vector<1x64x64xbf16>
    %215 = vector.shape_cast %214 : vector<1x64x64xbf16> to vector<64x64xbf16>
    %216 = arith.truncf %213 : vector<128x64xf32> to vector<128x64xbf16>
    %cst_82 = arith.constant dense<0.000000e+00> : vector<128x64xf32>
    %217 = tpu.matmul %216, %215, %cst_82 {dimension_numbers = #tpu.dot_dimension_numbers<[1], [0], [0], [1], [0, 0, 1, 1], [], []>} : vector<128x64xbf16>, vector<64x64xbf16>, vector<128x64xf32> -> vector<128x64xf32>
    %c13 = arith.constant 13 : index
    %c0_83 = arith.constant 0 : index
    %218 = vector.load %arg7[%c13, %c0_83] : memref<18x64xf32, #tpu.memory_space<vmem>>, vector<1x64xf32>
    %219 = vector.shape_cast %218 : vector<1x64xf32> to vector<64xf32>
    %220 = vector.shape_cast %219 : vector<64xf32> to vector<1x64xf32>
    %221 = vector.broadcast %220 : vector<1x64xf32> to vector<128x64xf32>
    %222 = arith.addf %217, %221 : vector<128x64xf32>
    %cst_84 = arith.constant 0.000000e+00 : f32
    %223 = vector.broadcast %cst_84 : f32 to vector<128x64xf32>
    %224 = arith.maximumf %222, %223 : vector<128x64xf32>
    %c5_85 = arith.constant 5 : index
    %c0_86 = arith.constant 0 : index
    %c0_87 = arith.constant 0 : index
    %225 = vector.load %arg4[%c5_85, %c0_86, %c0_87] : memref<8x64x64xbf16, #tpu.memory_space<vmem>>, vector<1x64x64xbf16>
    %226 = vector.shape_cast %225 : vector<1x64x64xbf16> to vector<64x64xbf16>
    %227 = arith.truncf %224 : vector<128x64xf32> to vector<128x64xbf16>
    %cst_88 = arith.constant dense<0.000000e+00> : vector<128x64xf32>
    %228 = tpu.matmul %227, %226, %cst_88 {dimension_numbers = #tpu.dot_dimension_numbers<[1], [0], [0], [1], [0, 0, 1, 1], [], []>} : vector<128x64xbf16>, vector<64x64xbf16>, vector<128x64xf32> -> vector<128x64xf32>
    %229 = arith.addf %185, %228 : vector<128x64xf32>
    %c14 = arith.constant 14 : index
    %c0_89 = arith.constant 0 : index
    %230 = vector.load %arg7[%c14, %c0_89] : memref<18x64xf32, #tpu.memory_space<vmem>>, vector<1x64xf32>
    %231 = vector.shape_cast %230 : vector<1x64xf32> to vector<64xf32>
    %232 = vector.shape_cast %231 : vector<64xf32> to vector<1x64xf32>
    %233 = vector.broadcast %232 : vector<1x64xf32> to vector<128x64xf32>
    %234 = arith.addf %229, %233 : vector<128x64xf32>
    %c6_90 = arith.constant 6 : index
    %c0_91 = arith.constant 0 : index
    %c0_92 = arith.constant 0 : index
    %235 = vector.load %arg4[%c6_90, %c0_91, %c0_92] : memref<8x64x64xbf16, #tpu.memory_space<vmem>>, vector<1x64x64xbf16>
    %236 = vector.shape_cast %235 : vector<1x64x64xbf16> to vector<64x64xbf16>
    %237 = arith.truncf %234 : vector<128x64xf32> to vector<128x64xbf16>
    %cst_93 = arith.constant dense<0.000000e+00> : vector<128x64xf32>
    %238 = tpu.matmul %237, %236, %cst_93 {dimension_numbers = #tpu.dot_dimension_numbers<[1], [0], [0], [1], [0, 0, 1, 1], [], []>} : vector<128x64xbf16>, vector<64x64xbf16>, vector<128x64xf32> -> vector<128x64xf32>
    %c15 = arith.constant 15 : index
    %c0_94 = arith.constant 0 : index
    %239 = vector.load %arg7[%c15, %c0_94] : memref<18x64xf32, #tpu.memory_space<vmem>>, vector<1x64xf32>
    %240 = vector.shape_cast %239 : vector<1x64xf32> to vector<64xf32>
    %241 = vector.shape_cast %240 : vector<64xf32> to vector<1x64xf32>
    %242 = vector.broadcast %241 : vector<1x64xf32> to vector<128x64xf32>
    %243 = arith.addf %238, %242 : vector<128x64xf32>
    %cst_95 = arith.constant 0.000000e+00 : f32
    %244 = vector.broadcast %cst_95 : f32 to vector<128x64xf32>
    %245 = arith.maximumf %243, %244 : vector<128x64xf32>
    %c7_96 = arith.constant 7 : index
    %c0_97 = arith.constant 0 : index
    %c0_98 = arith.constant 0 : index
    %246 = vector.load %arg4[%c7_96, %c0_97, %c0_98] : memref<8x64x64xbf16, #tpu.memory_space<vmem>>, vector<1x64x64xbf16>
    %247 = vector.shape_cast %246 : vector<1x64x64xbf16> to vector<64x64xbf16>
    %248 = arith.truncf %245 : vector<128x64xf32> to vector<128x64xbf16>
    %cst_99 = arith.constant dense<0.000000e+00> : vector<128x64xf32>
    %249 = tpu.matmul %248, %247, %cst_99 {dimension_numbers = #tpu.dot_dimension_numbers<[1], [0], [0], [1], [0, 0, 1, 1], [], []>} : vector<128x64xbf16>, vector<64x64xbf16>, vector<128x64xf32> -> vector<128x64xf32>
    %c16 = arith.constant 16 : index
    %c0_100 = arith.constant 0 : index
    %250 = vector.load %arg7[%c16, %c0_100] : memref<18x64xf32, #tpu.memory_space<vmem>>, vector<1x64xf32>
    %251 = vector.shape_cast %250 : vector<1x64xf32> to vector<64xf32>
    %252 = vector.shape_cast %251 : vector<64xf32> to vector<1x64xf32>
    %253 = vector.broadcast %252 : vector<1x64xf32> to vector<128x64xf32>
    %254 = arith.addf %249, %253 : vector<128x64xf32>
    %cst_101 = arith.constant 0.000000e+00 : f32
    %255 = vector.broadcast %cst_101 : f32 to vector<128x64xf32>
    %256 = arith.maximumf %254, %255 : vector<128x64xf32>
    %c17 = arith.constant 17 : index
    %c0_102 = arith.constant 0 : index
    %257 = vector.load %arg7[%c17, %c0_102] : memref<18x64xf32, #tpu.memory_space<vmem>>, vector<1x64xf32>
    %258 = arith.truncf %257 : vector<1x64xf32> to vector<1x64xbf16>
    %259 = arith.truncf %256 : vector<128x64xf32> to vector<128x64xbf16>
    %cst_103 = arith.constant dense<0.000000e+00> : vector<1x128xf32>
    %260 = tpu.matmul %258, %259, %cst_103 {dimension_numbers = #tpu.dot_dimension_numbers<[1], [1], [0], [0], [0, 0, 1, 0], [], []>} : vector<1x64xbf16>, vector<128x64xbf16>, vector<1x128xf32> -> vector<1x128xf32>
    %c0_104 = arith.constant 0 : index
    %c0_105 = arith.constant 0 : index
    %261 = vector.load %arg8[%c0_104, %c0_105] : memref<1x128xf32, #tpu.memory_space<vmem>>, vector<1x128xf32>
    tpu.vector_store %arg8[%c0_104, %c0_105], %260 {strides = array<i32>} : memref<1x128xf32, #tpu.memory_space<vmem>>, vector<1x128xf32>,
    return
  }
  func.func @transform_0(%arg0: i32) -> (i32, i32) {
    %c0_i32 = arith.constant 0 : i32
    %c0_i32_0 = arith.constant 0 : i32
    %c0_i32_1 = arith.constant 0 : i32
    return %c0_i32, %c0_i32_0 : i32, i32
  }
  func.func @transform_1(%arg0: i32) -> (i32, i32) {
    %c0_i32 = arith.constant 0 : i32
    %c0_i32_0 = arith.constant 0 : i32
    %c0_i32_1 = arith.constant 0 : i32
    return %c0_i32, %c0_i32_0 : i32, i32
  }
  func.func @transform_2(%arg0: i32) -> (i32, i32, i32) {
    %c0_i32 = arith.constant 0 : i32
    %c0_i32_0 = arith.constant 0 : i32
    %c0_i32_1 = arith.constant 0 : i32
    %c0_i32_2 = arith.constant 0 : i32
    return %c0_i32, %c0_i32_0, %c0_i32_1 : i32, i32, i32
  }
  func.func @transform_3(%arg0: i32) -> (i32, i32, i32) {
    %c0_i32 = arith.constant 0 : i32
    %c0_i32_0 = arith.constant 0 : i32
    %c0_i32_1 = arith.constant 0 : i32
    %c0_i32_2 = arith.constant 0 : i32
    return %c0_i32, %c0_i32_0, %c0_i32_1 : i32, i32, i32
  }
  func.func @transform_4(%arg0: i32) -> (i32, i32, i32) {
    %c0_i32 = arith.constant 0 : i32
    %c0_i32_0 = arith.constant 0 : i32
    %c0_i32_1 = arith.constant 0 : i32
    %c0_i32_2 = arith.constant 0 : i32
    return %c0_i32, %c0_i32_0, %c0_i32_1 : i32, i32, i32
  }
  func.func @transform_5(%arg0: i32) -> (i32, i32) {
    %c0_i32 = arith.constant 0 : i32
    %c0_i32_0 = arith.constant 0 : i32
    %c0_i32_1 = arith.constant 0 : i32
    return %c0_i32, %c0_i32_0 : i32, i32
  }
  func.func @transform_6(%arg0: i32) -> (i32, i32) {
    %c0_i32 = arith.constant 0 : i32
    %c0_i32_0 = arith.constant 0 : i32
    %c0_i32_1 = arith.constant 0 : i32
    return %c0_i32, %c0_i32_0 : i32, i32
  }
  func.func @transform_7(%arg0: i32) -> (i32, i32) {
    %c0_i32 = arith.constant 0 : i32
    %c0_i32_0 = arith.constant 0 : i32
    %c0_i32_1 = arith.constant 0 : i32
    return %c0_i32, %c0_i32_0 : i32, i32
  }
}

</mosaic_0001>

<llo_original>
// kernel: tpu_custom_call.1
$region0: #{tpu_custom_call.1}
  #allocation0 [shape = 'u32[]', space=smem, size = 0x4, offset = 0x4, fixed_abs, tag = 'smem constant byte address 0x4 - core index']
  #allocation1 [shape = 'u32[144,128]{1,0:T(1,128)}', space=vmem, size = 0x12000, scoped, tag = 'internal scratch']
  %s0 = inlined_call_operand.vmem [shape: f32[128,2], index: 0, kind: input, shape index: {}]
  %s1 = inlined_call_operand.vmem [shape: f32[128,64], index: 1, kind: input, shape index: {}]
  %s2 = inlined_call_operand.vmem [shape: f32[2,128,128], index: 2, kind: input, shape index: {}]
  %s3 = inlined_call_operand.hbm [shape: bf16[8,64,64], index: 3, kind: input, shape index: {}]
  %s4 = inlined_call_operand.hbm [shape: bf16[2,64,192], index: 4, kind: input, shape index: {}]
  %s5 = inlined_call_operand.vmem [shape: f32[2,192], index: 5, kind: input, shape index: {}]
  %s6 = inlined_call_operand.vmem [shape: f32[18,64], index: 6, kind: input, shape index: {}]
  %s7 = inlined_call_operand.hbm [shape: f32[1,128], index: 7, kind: output, shape index: {}]
  %s8 = sld [smem:[#allocation0]]
  $region46: #{tpu_custom_call.1} parent=0
    _
  %s10 = ssub.s32 1, %s8
  %s11 = scalar_select 0, %s10, %s8
  $region1: #{tpu_custom_call.1} parent=0
    #allocation2 [shape = 'u8[131072]{0}', space=vmem, size = 0x20000, scoped, tag = 'input window, operand 3, single buffered']
    #allocation3 [shape = 's32[1]{0}', space=sflag, size = 0x4, scoped, tag = 'scoped memory for tpu_custom_call.1']
    #allocation4 [shape = 's32[1]{0}', space=sflag, size = 0x4, scoped, tag = 'scoped memory for tpu_custom_call.1']
    #allocation5 [shape = 'u8[65536]{0}', space=vmem, size = 0x10000, scoped, tag = 'input window, operand 4, single buffered']
    #allocation6 [shape = 's32[1]{0}', space=sflag, size = 0x4, scoped, tag = 'scoped memory for tpu_custom_call.1']
    #allocation7 [shape = 'u8[512]{0}', space=vmem, size = 0x400, scoped, tag = 'output window, operand 0, single buffered']
    %12 = vsyncpa [#allocation3], 0
    %13 = vsyncpa [#allocation6], 0
    %14 = vsyncpa [#allocation4], 0
    // Predicated region
    $region2: #{tpu_custom_call.1} parent=1 // pred_check
      _
    $region3: #{tpu_custom_call.1} parent=1 // pred_check_branch
      %16 = sbr.rel (0) target = $region5
    $region4: #{tpu_custom_call.1} parent=1 // pred_region
      _
    $region5: #{tpu_custom_call.1} parent=1 // pred_fallthru
      _
    // Predicated region
    $region6: #{tpu_custom_call.1} parent=1 // pred_check
      _
    $region7: #{tpu_custom_call.1} parent=1 // pred_check_branch
      %18 = sbr.rel (0) target = $region9
    $region8: #{tpu_custom_call.1} parent=1 // pred_region
      _
    $region9: #{tpu_custom_call.1} parent=1 // pred_fallthru
      _
    // Predicated region
    $region10: #{tpu_custom_call.1} parent=1 // pred_check
      _
    $region11: #{tpu_custom_call.1} parent=1 // pred_check_branch
      %20 = sbr.rel (0) target = $region13
    $region12: #{tpu_custom_call.1} parent=1 // pred_region
      _
    $region13: #{tpu_custom_call.1} parent=1 // pred_fallthru
      _
    // Predicated region
    $region14: #{tpu_custom_call.1} parent=1 // pred_check
      _
    $region15: #{tpu_custom_call.1} parent=1 // pred_check_branch
      %22 = sbr.rel (0) target = $region17
    $region16: #{tpu_custom_call.1} parent=1 // pred_region
      %s24 = ssub.s32 4096, 4096
      %25 = vsyncadd [#allocation3], %s24
      %s26 = sshll.u32 [#allocation2], 4
      %s27 = int_to_ptr.vmem [resolvable:$true] %s26
      %32 = dma.hbm_to_vmem [thread:$0]  %s3, 4096, %s27, [#allocation3], 64, 64, 4
    $region17: #{tpu_custom_call.1} parent=1 // pred_fallthru
      _
    // Predicated region
    $region18: #{tpu_custom_call.1} parent=1 // pred_check
      _
    $region19: #{tpu_custom_call.1} parent=1 // pred_check_branch
      %34 = sbr.rel (0) target = $region21
    $region20: #{tpu_custom_call.1} parent=1 // pred_region
      %s36 = ssub.s32 2048, 2048
      %37 = vsyncadd [#allocation6], %s36
      %s38 = sshll.u32 [#allocation5], 4
      %s39 = int_to_ptr.vmem [resolvable:$true] %s38
      %44 = dma.hbm_to_vmem [thread:$0]  %s4, 2048, %s39, [#allocation6], 128, 128, 8
    $region21: #{tpu_custom_call.1} parent=1 // pred_fallthru
      _
    // Predicated region
    $region22: #{tpu_custom_call.1} parent=1 // pred_check
      _
    $region23: #{tpu_custom_call.1} parent=1 // pred_check_branch
      %46 = sbr.rel (0) target = $region25
    $region24: #{tpu_custom_call.1} parent=1 // pred_region
      _
    $region25: #{tpu_custom_call.1} parent=1 // pred_fallthru
      _
    // Predicated region
    $region26: #{tpu_custom_call.1} parent=1 // pred_check
      _
    $region27: #{tpu_custom_call.1} parent=1 // pred_check_branch
      %48 = sbr.rel (0) target = $region29
    $region28: #{tpu_custom_call.1} parent=1 // pred_region
      _
    $region29: #{tpu_custom_call.1} parent=1 // pred_fallthru
      _
    // Predicated region
    $region30: #{tpu_custom_call.1} parent=1 // pred_check
      _
    $region31: #{tpu_custom_call.1} parent=1 // pred_check_branch
      %50 = sbr.rel (0) target = $region33
    $region32: #{tpu_custom_call.1} parent=1 // pred_region
      %51 = dma.done [#allocation3], 4096
    $region33: #{tpu_custom_call.1} parent=1 // pred_fallthru
      _
    // Predicated region
    $region34: #{tpu_custom_call.1} parent=1 // pred_check
      _
    $region35: #{tpu_custom_call.1} parent=1 // pred_check_branch
      %53 = sbr.rel (0) target = $region37
    $region36: #{tpu_custom_call.1} parent=1 // pred_region
      %54 = dma.done [#allocation6], 2048
    $region37: #{tpu_custom_call.1} parent=1 // pred_fallthru
      _
    %v56 = vld [vmem:[%s0] sm:$0xff]
    %v57 = vld [vmem:[%s0 + $0x8] sm:$0xff]
    %v58 = vld [vmem:[%s0 + $0x10] sm:$0xff]
    %v59 = vld [vmem:[%s0 + $0x18] sm:$0xff]
    %v60 = vld [vmem:[%s0 + $0x20] sm:$0xff]
    %v61 = vld [vmem:[%s0 + $0x28] sm:$0xff]
    %v62 = vld [vmem:[%s0 + $0x30] sm:$0xff]
    %v63 = vld [vmem:[%s0 + $0x38] sm:$0xff]
    %v64 = vld [vmem:[%s0 + $0x40] sm:$0xff]
    %v65 = vld [vmem:[%s0 + $0x48] sm:$0xff]
    %v66 = vld [vmem:[%s0 + $0x50] sm:$0xff]
    %v67 = vld [vmem:[%s0 + $0x58] sm:$0xff]
    %v68 = vld [vmem:[%s0 + $0x60] sm:$0xff]
    %v69 = vld [vmem:[%s0 + $0x68] sm:$0xff]
    %v70 = vld [vmem:[%s0 + $0x70] sm:$0xff]
    %v71 = vld [vmem:[%s0 + $0x78] sm:$0xff]
    %v72 = vld [vmem:[%s6] sm:$0x1]
    %74 = vset.pattern.permute.xlu0 0
    %75 = vperm.xlu0 %74, %v56
    %v76 = vpop.permute.xlu0 %75
    %79 = vset.pattern.permute.xlu0 0
    %80 = vperm.xlu0 %79, %v57
    %v81 = vpop.permute.xlu0 %80
    %84 = vset.pattern.permute.xlu0 0
    %85 = vperm.xlu0 %84, %v58
    %v86 = vpop.permute.xlu0 %85
    %89 = vset.pattern.permute.xlu0 0
    %90 = vperm.xlu0 %89, %v59
    %v91 = vpop.permute.xlu0 %90
    %94 = vset.pattern.permute.xlu0 0
    %95 = vperm.xlu0 %94, %v60
    %v96 = vpop.permute.xlu0 %95
    %99 = vset.pattern.permute.xlu0 0
    %100 = vperm.xlu0 %99, %v61
    %v101 = vpop.permute.xlu0 %100
    %104 = vset.pattern.permute.xlu0 0
    %105 = vperm.xlu0 %104, %v62
    %v106 = vpop.permute.xlu0 %105
    %109 = vset.pattern.permute.xlu0 0
    %110 = vperm.xlu0 %109, %v63
    %v111 = vpop.permute.xlu0 %110
    %114 = vset.pattern.permute.xlu0 0
    %115 = vperm.xlu0 %114, %v64
    %v116 = vpop.permute.xlu0 %115
    %119 = vset.pattern.permute.xlu0 0
    %120 = vperm.xlu0 %119, %v65
    %v121 = vpop.permute.xlu0 %120
    %124 = vset.pattern.permute.xlu0 0
    %125 = vperm.xlu0 %124, %v66
    %v126 = vpop.permute.xlu0 %125
    %129 = vset.pattern.permute.xlu0 0
    %130 = vperm.xlu0 %129, %v67
    %v131 = vpop.permute.xlu0 %130
    %134 = vset.pattern.permute.xlu0 0
    %135 = vperm.xlu0 %134, %v68
    %v136 = vpop.permute.xlu0 %135
    %139 = vset.pattern.permute.xlu0 0
    %140 = vperm.xlu0 %139, %v69
    %v141 = vpop.permute.xlu0 %140
    %144 = vset.pattern.permute.xlu0 0
    %145 = vperm.xlu0 %144, %v70
    %v146 = vpop.permute.xlu0 %145
    %149 = vset.pattern.permute.xlu0 0
    %150 = vperm.xlu0 %149, %v71
    %v151 = vpop.permute.xlu0 %150
    %v153 = vlaneseq
    %v154 = vshrl.u32 %v153, 7
    %v155 = vsub.s32 0, %v154
    %v156 = vrot.slane %v72, %v155
    %v157 = vmul.f32 %v76, %v156
    %v158 = vmul.f32 %v81, %v156
    %v159 = vmul.f32 %v86, %v156
    %v160 = vmul.f32 %v91, %v156
    %v161 = vmul.f32 %v96, %v156
    %v162 = vmul.f32 %v101, %v156
    %v163 = vmul.f32 %v106, %v156
    %v164 = vmul.f32 %v111, %v156
    %v165 = vmul.f32 %v116, %v156
    %v166 = vmul.f32 %v121, %v156
    %v167 = vmul.f32 %v126, %v156
    %v168 = vmul.f32 %v131, %v156
    %v169 = vmul.f32 %v136, %v156
    %v170 = vmul.f32 %v141, %v156
    %v171 = vmul.f32 %v146, %v156
    %v172 = vmul.f32 %v151, %v156
    %v173 = vld [vmem:[%s6 + $0x1] sm:$0x1]
    %174 = vset.pattern.permute.xlu0 1
    %175 = vperm.xlu0 %174, %v56
    %v176 = vpop.permute.xlu0 %175
    %178 = vset.pattern.permute.xlu0 1
    %179 = vperm.xlu0 %178, %v57
    %v180 = vpop.permute.xlu0 %179
    %182 = vset.pattern.permute.xlu0 1
    %183 = vperm.xlu0 %182, %v58
    %v184 = vpop.permute.xlu0 %183
    %186 = vset.pattern.permute.xlu0 1
    %187 = vperm.xlu0 %186, %v59
    %v188 = vpop.permute.xlu0 %187
    %190 = vset.pattern.permute.xlu0 1
    %191 = vperm.xlu0 %190, %v60
    %v192 = vpop.permute.xlu0 %191
    %194 = vset.pattern.permute.xlu0 1
    %195 = vperm.xlu0 %194, %v61
    %v196 = vpop.permute.xlu0 %195
    %198 = vset.pattern.permute.xlu0 1
    %199 = vperm.xlu0 %198, %v62
    %v200 = vpop.permute.xlu0 %199
    %202 = vset.pattern.permute.xlu0 1
    %203 = vperm.xlu0 %202, %v63
    %v204 = vpop.permute.xlu0 %203
    %206 = vset.pattern.permute.xlu0 1
    %207 = vperm.xlu0 %206, %v64
    %v208 = vpop.permute.xlu0 %207
    %210 = vset.pattern.permute.xlu0 1
    %211 = vperm.xlu0 %210, %v65
    %v212 = vpop.permute.xlu0 %211
    %214 = vset.pattern.permute.xlu0 1
    %215 = vperm.xlu0 %214, %v66
    %v216 = vpop.permute.xlu0 %215
    %218 = vset.pattern.permute.xlu0 1
    %219 = vperm.xlu0 %218, %v67
    %v220 = vpop.permute.xlu0 %219
    %222 = vset.pattern.permute.xlu0 1
    %223 = vperm.xlu0 %222, %v68
    %v224 = vpop.permute.xlu0 %223
    %226 = vset.pattern.permute.xlu0 1
    %227 = vperm.xlu0 %226, %v69
    %v228 = vpop.permute.xlu0 %227
    %230 = vset.pattern.permute.xlu0 1
    %231 = vperm.xlu0 %230, %v70
    %v232 = vpop.permute.xlu0 %231
    %234 = vset.pattern.permute.xlu0 1
    %235 = vperm.xlu0 %234, %v71
    %v236 = vpop.permute.xlu0 %235
    %v238 = vlaneseq
    %v239 = vshrl.u32 %v238, 7
    %v240 = vsub.s32 0, %v239
    %v241 = vrot.slane %v173, %v240
    %v242 = vmul.f32 %v176, %v241
    %v243 = vmul.f32 %v180, %v241
    %v244 = vmul.f32 %v184, %v241
    %v245 = vmul.f32 %v188, %v241
    %v246 = vmul.f32 %v192, %v241
    %v247 = vmul.f32 %v196, %v241
    %v248 = vmul.f32 %v200, %v241
    %v249 = vmul.f32 %v204, %v241
    %v250 = vmul.f32 %v208, %v241
    %v251 = vmul.f32 %v212, %v241
    %v252 = vmul.f32 %v216, %v241
    %v253 = vmul.f32 %v220, %v241
    %v254 = vmul.f32 %v224, %v241
    %v255 = vmul.f32 %v228, %v241
    %v256 = vmul.f32 %v232, %v241
    %v257 = vmul.f32 %v236, %v241
    %v258 = vadd.f32 %v157, %v242
    %v259 = vadd.f32 %v158, %v243
    %v260 = vadd.f32 %v159, %v244
    %v261 = vadd.f32 %v160, %v245
    %v262 = vadd.f32 %v161, %v246
    %v263 = vadd.f32 %v162, %v247
    %v264 = vadd.f32 %v163, %v248
    %v265 = vadd.f32 %v164, %v249
    %v266 = vadd.f32 %v165, %v250
    %v267 = vadd.f32 %v166, %v251
    %v268 = vadd.f32 %v167, %v252
    %v269 = vadd.f32 %v168, %v253
    %v270 = vadd.f32 %v169, %v254
    %v271 = vadd.f32 %v170, %v255
    %v272 = vadd.f32 %v171, %v256
    %v273 = vadd.f32 %v172, %v257
    %v274 = vld [vmem:[%s6 + $0x2] sm:$0x1]
    %v275 = vlaneseq
    %v276 = vshrl.u32 %v275, 7
    %v277 = vsub.s32 0, %v276
    %v278 = vrot.slane %v274, %v277
    %v279 = vadd.f32 %v258, %v278
    %v280 = vadd.f32 %v259, %v278
    %v281 = vadd.f32 %v260, %v278
    %v282 = vadd.f32 %v261, %v278
    %v283 = vadd.f32 %v262, %v278
    %v284 = vadd.f32 %v263, %v278
    %v285 = vadd.f32 %v264, %v278
    %v286 = vadd.f32 %v265, %v278
    %v287 = vadd.f32 %v266, %v278
    %v288 = vadd.f32 %v267, %v278
    %v289 = vadd.f32 %v268, %v278
    %v290 = vadd.f32 %v269, %v278
    %v291 = vadd.f32 %v270, %v278
    %v292 = vadd.f32 %v271, %v278
    %v293 = vadd.f32 %v272, %v278
    %v294 = vadd.f32 %v273, %v278
    %v295 = vmax.f32 %v279, 0.0
    %v296 = vmax.f32 %v280, 0.0
    %v297 = vmax.f32 %v281, 0.0
    %v298 = vmax.f32 %v282, 0.0
    %v299 = vmax.f32 %v283, 0.0
    %v300 = vmax.f32 %v284, 0.0
    %v301 = vmax.f32 %v285, 0.0
    %v302 = vmax.f32 %v286, 0.0
    %v303 = vmax.f32 %v287, 0.0
    %v304 = vmax.f32 %v288, 0.0
    %v305 = vmax.f32 %v289, 0.0
    %v306 = vmax.f32 %v290, 0.0
    %v307 = vmax.f32 %v291, 0.0
    %v308 = vmax.f32 %v292, 0.0
    %v309 = vmax.f32 %v293, 0.0
    %v310 = vmax.f32 %v294, 0.0
    %v311 = vld [vmem:[#allocation2] sm:$0xf]
    %v312 = vld [vmem:[#allocation2 + $0x4] sm:$0xf]
    %v313 = vld [vmem:[#allocation2 + $0x8] sm:$0xf]
    %v314 = vld [vmem:[#allocation2 + $0xc] sm:$0xf]
    %v315 = vld [vmem:[#allocation2 + $0x10] sm:$0xf]
    %v316 = vld [vmem:[#allocation2 + $0x14] sm:$0xf]
    %v317 = vld [vmem:[#allocation2 + $0x18] sm:$0xf]
    %v318 = vld [vmem:[#allocation2 + $0x1c] sm:$0xf]
    %v319 = vpack.c.bf16 %v296, %v295
    %v320 = vpack.c.bf16 %v298, %v297
    %v321 = vpack.c.bf16 %v300, %v299
    %v322 = vpack.c.bf16 %v302, %v301
    %v323 = vpack.c.bf16 %v304, %v303
    %v324 = vpack.c.bf16 %v306, %v305
    %v325 = vpack.c.bf16 %v308, %v307
    %v326 = vpack.c.bf16 %v310, %v309
    %v327 = vld [vmem:[%s6 + $0x3] sm:$0x1]
    %v328 = vlaneseq
    %v329 = vshrl.u32 %v328, 7
    %v330 = vsub.s32 0, %v329
    %v331 = vrot.slane %v327, %v330
    %v340 = vunpack.c.l.b16 %v311
    %v341 = vunpack.c.l.b16 %v312
    %v342 = vunpack.c.l.b16 %v313
    %v343 = vunpack.c.l.b16 %v314
    %v344 = vunpack.c.l.b16 %v315
    %v345 = vunpack.c.l.b16 %v316
    %v346 = vunpack.c.l.b16 %v317
    %v347 = vunpack.c.l.b16 %v318
    %v348 = vpack.c.b16 %v341, %v340
    %v349 = vpack.c.b16 %v343, %v342
    %v350 = vpack.c.b16 %v345, %v344
    %v351 = vpack.c.b16 %v347, %v346
    %vm356 = vcmask 523264
    %v358 = vsel %vm356, %v319, 0
    %v361 = vsel %vm356, %v320, 0
    %v364 = vsel %vm356, %v321, 0
    %v367 = vsel %vm356, %v322, 0
    %v370 = vsel %vm356, %v323, 0
    %v373 = vsel %vm356, %v324, 0
    %v376 = vsel %vm356, %v325, 0
    %v379 = vsel %vm356, %v326, 0
    %381 = vmatprep.subr.bf16.mxu0 0
    %382 = vmatpush1.bf16.msra.mxu0 %v348
    %383 = vmatprep.subr.bf16.mxu0 0
    %384 = vmatpush1.bf16.msra.mxu0 %v349
    %385 = vmatprep.subr.bf16.mxu0 0
    %386 = vmatpush1.bf16.msra.mxu0 %v350
    %387 = vmatprep.subr.bf16.mxu0 0
    %388 = vmatpush1.bf16.msra.mxu0 %v351
    %389 = vmatprep.subr.bf16.mxu0 0
    %390 = vmatpush1.bf16.msra.mxu0 0
    %391 = vmatprep.subr.bf16.mxu0 0
    %392 = vmatpush1.bf16.msra.mxu0 0
    %393 = vmatprep.subr.bf16.mxu0 0
    %394 = vmatpush1.bf16.msra.mxu0 0
    %395 = vmatprep.subr.bf16.mxu0 0
    %396 = vmatpush1.bf16.msra.mxu0 0
    %397 = vmatprep.subr.bf16.mxu0 0
    %398 = vmatpush1.bf16.msra.mxu0 0
    %399 = vmatprep.subr.bf16.mxu0 0
    %400 = vmatpush1.bf16.msra.mxu0 0
    %401 = vmatprep.subr.bf16.mxu0 0
    %402 = vmatpush1.bf16.msra.mxu0 0
    %403 = vmatprep.subr.bf16.mxu0 0
    %404 = vmatpush1.bf16.msra.mxu0 0
    %405 = vmatprep.subr.bf16.mxu0 0
    %406 = vmatpush1.bf16.msra.mxu0 0
    %407 = vmatprep.subr.bf16.mxu0 0
    %408 = vmatpush1.bf16.msra.mxu0 0
    %409 = vmatprep.subr.bf16.mxu0 0
    %410 = vmatpush1.bf16.msra.mxu0 0
    %411 = vmatprep.subr.bf16.mxu0 0
    %412 = vmatpush1.bf16.msra.mxu0 0
    %413 = vmatprep.mubr.bf16.mxu0 0
    %414 = vmatmul.mubr.bf16.gmra.mrb[0].mxu0 %v358
    %v415 = vpop.f32.mrb[0].mxu0
    %v416 = vadd.f32 %v331, %v415
    %v417 = vpop.f32.mrb[0].mxu0
    %v418 = vpop.f32.mrb[0].mxu0
    %v419 = vadd.f32 %v331, %v418
    %v420 = vpop.f32.mrb[0].mxu0
    %421 = vmatprep.mubr.bf16.mxu0 0
    %422 = vmatmul.mubr.bf16.gmra.mrb[0].mxu0 %v361
    %v423 = vpop.f32.mrb[0].mxu0
    %v424 = vadd.f32 %v331, %v423
    %v425 = vpop.f32.mrb[0].mxu0
    %v426 = vpop.f32.mrb[0].mxu0
    %v427 = vadd.f32 %v331, %v426
    %v428 = vpop.f32.mrb[0].mxu0
    %429 = vmatprep.mubr.bf16.mxu0 0
    %430 = vmatmul.mubr.bf16.gmra.mrb[0].mxu0 %v364
    %v431 = vpop.f32.mrb[0].mxu0
    %v432 = vadd.f32 %v331, %v431
    %v433 = vpop.f32.mrb[0].mxu0
    %v434 = vpop.f32.mrb[0].mxu0
    %v435 = vadd.f32 %v331, %v434
    %v436 = vpop.f32.mrb[0].mxu0
    %437 = vmatprep.mubr.bf16.mxu0 0
    %438 = vmatmul.mubr.bf16.gmra.mrb[0].mxu0 %v367
    %v439 = vpop.f32.mrb[0].mxu0
    %v440 = vadd.f32 %v331, %v439
    %v441 = vpop.f32.mrb[0].mxu0
    %v442 = vpop.f32.mrb[0].mxu0
    %v443 = vadd.f32 %v331, %v442
    %v444 = vpop.f32.mrb[0].mxu0
    %445 = vmatprep.mubr.bf16.mxu0 0
    %446 = vmatmul.mubr.bf16.gmra.mrb[0].mxu0 %v370
    %v447 = vpop.f32.mrb[0].mxu0
    %v448 = vadd.f32 %v331, %v447
    %v449 = vpop.f32.mrb[0].mxu0
    %v450 = vpop.f32.mrb[0].mxu0
    %v451 = vadd.f32 %v331, %v450
    %v452 = vpop.f32.mrb[0].mxu0
    %453 = vmatprep.mubr.bf16.mxu0 0
    %454 = vmatmul.mubr.bf16.gmra.mrb[0].mxu0 %v373
    %v455 = vpop.f32.mrb[0].mxu0
    %v456 = vadd.f32 %v331, %v455
    %v457 = vpop.f32.mrb[0].mxu0
    %v458 = vpop.f32.mrb[0].mxu0
    %v459 = vadd.f32 %v331, %v458
    %v460 = vpop.f32.mrb[0].mxu0
    %461 = vmatprep.mubr.bf16.mxu0 0
    %462 = vmatmul.mubr.bf16.gmra.mrb[0].mxu0 %v376
    %v463 = vpop.f32.mrb[0].mxu0
    %v464 = vadd.f32 %v331, %v463
    %v465 = vpop.f32.mrb[0].mxu0
    %v466 = vpop.f32.mrb[0].mxu0
    %v467 = vadd.f32 %v331, %v466
    %v468 = vpop.f32.mrb[0].mxu0
    %469 = vmatprep.mubr.bf16.mxu0 0
    %470 = vmatmul.mubr.bf16.gmra.mrb[0].mxu0 %v379
    %v471 = vpop.f32.mrb[0].mxu0
    %v472 = vadd.f32 %v331, %v471
    %v473 = vpop.f32.mrb[0].mxu0
    %v474 = vpop.f32.mrb[0].mxu0
    %v475 = vadd.f32 %v331, %v474
    %v476 = vpop.f32.mrb[0].mxu0
    %477 = vdwg.mxu0
    %v478 = vmax.f32 %v416, 0.0
    %v479 = vmax.f32 %v419, 0.0
    %v480 = vmax.f32 %v424, 0.0
    %v481 = vmax.f32 %v427, 0.0
    %v482 = vmax.f32 %v432, 0.0
    %v483 = vmax.f32 %v435, 0.0
    %v484 = vmax.f32 %v440, 0.0
    %v485 = vmax.f32 %v443, 0.0
    %v486 = vmax.f32 %v448, 0.0
    %v487 = vmax.f32 %v451, 0.0
    %v488 = vmax.f32 %v456, 0.0
    %v489 = vmax.f32 %v459, 0.0
    %v490 = vmax.f32 %v464, 0.0
    %v491 = vmax.f32 %v467, 0.0
    %v492 = vmax.f32 %v472, 0.0
    %v493 = vmax.f32 %v475, 0.0
    %v494 = vld [vmem:[%s1] sm:$0xff]
    %v495 = vld [vmem:[%s1 + $0x8] sm:$0xff]
    %v496 = vld [vmem:[%s1 + $0x10] sm:$0xff]
    %v497 = vld [vmem:[%s1 + $0x18] sm:$0xff]
    %v498 = vld [vmem:[%s1 + $0x20] sm:$0xff]
    %v499 = vld [vmem:[%s1 + $0x28] sm:$0xff]
    %v500 = vld [vmem:[%s1 + $0x30] sm:$0xff]
    %v501 = vld [vmem:[%s1 + $0x38] sm:$0xff]
    %v502 = vld [vmem:[%s1 + $0x40] sm:$0xff]
    %v503 = vld [vmem:[%s1 + $0x48] sm:$0xff]
    %v504 = vld [vmem:[%s1 + $0x50] sm:$0xff]
    %v505 = vld [vmem:[%s1 + $0x58] sm:$0xff]
    %v506 = vld [vmem:[%s1 + $0x60] sm:$0xff]
    %v507 = vld [vmem:[%s1 + $0x68] sm:$0xff]
    %v508 = vld [vmem:[%s1 + $0x70] sm:$0xff]
    %v509 = vld [vmem:[%s1 + $0x78] sm:$0xff]
    %v510 = vadd.f32 %v478, %v494
    %v511 = vadd.f32 %v479, %v495
    %v512 = vadd.f32 %v480, %v496
    %v513 = vadd.f32 %v481, %v497
    %v514 = vadd.f32 %v482, %v498
    %v515 = vadd.f32 %v483, %v499
    %v516 = vadd.f32 %v484, %v500
    %v517 = vadd.f32 %v485, %v501
    %v518 = vadd.f32 %v486, %v502
    %v519 = vadd.f32 %v487, %v503
    %v520 = vadd.f32 %v488, %v504
    %v521 = vadd.f32 %v489, %v505
    %v522 = vadd.f32 %v490, %v506
    %v523 = vadd.f32 %v491, %v507
    %v524 = vadd.f32 %v492, %v508
    %v525 = vadd.f32 %v493, %v509
    %v526 = vld [vmem:[%s6 + $0x5] sm:$0x1]
    %v527 = vld [vmem:[%s6 + $0x6] sm:$0x1]
    %v528 = vsel %vm356, %v510, 0.0
    %529 = vadd.xlane.f32.xlu0 %v528
    %v530 = vpop.xlane.xlu0 %529
    %v531 = vsel %vm356, %v511, 0.0
    %532 = vadd.xlane.f32.xlu0 %v531
    %v533 = vpop.xlane.xlu0 %532
    %v534 = vsel %vm356, %v512, 0.0
    %535 = vadd.xlane.f32.xlu0 %v534
    %v536 = vpop.xlane.xlu0 %535
    %v537 = vsel %vm356, %v513, 0.0
    %538 = vadd.xlane.f32.xlu0 %v537
    %v539 = vpop.xlane.xlu0 %538
    %v540 = vsel %vm356, %v514, 0.0
    %541 = vadd.xlane.f32.xlu0 %v540
    %v542 = vpop.xlane.xlu0 %541
    %v543 = vsel %vm356, %v515, 0.0
    %544 = vadd.xlane.f32.xlu0 %v543
    %v545 = vpop.xlane.xlu0 %544
    %v546 = vsel %vm356, %v516, 0.0
    %547 = vadd.xlane.f32.xlu0 %v546
    %v548 = vpop.xlane.xlu0 %547
    %v549 = vsel %vm356, %v517, 0.0
    %550 = vadd.xlane.f32.xlu0 %v549
    %v551 = vpop.xlane.xlu0 %550
    %v552 = vsel %vm356, %v518, 0.0
    %553 = vadd.xlane.f32.xlu0 %v552
    %v554 = vpop.xlane.xlu0 %553
    %v555 = vsel %vm356, %v519, 0.0
    %556 = vadd.xlane.f32.xlu0 %v555
    %v557 = vpop.xlane.xlu0 %556
    %v558 = vsel %vm356, %v520, 0.0
    %559 = vadd.xlane.f32.xlu0 %v558
    %v560 = vpop.xlane.xlu0 %559
    %v561 = vsel %vm356, %v521, 0.0
    %562 = vadd.xlane.f32.xlu0 %v561
    %v563 = vpop.xlane.xlu0 %562
    %v564 = vsel %vm356, %v522, 0.0
    %565 = vadd.xlane.f32.xlu0 %v564
    %v566 = vpop.xlane.xlu0 %565
    %v567 = vsel %vm356, %v523, 0.0
    %568 = vadd.xlane.f32.xlu0 %v567
    %v569 = vpop.xlane.xlu0 %568
    %v570 = vsel %vm356, %v524, 0.0
    %571 = vadd.xlane.f32.xlu0 %v570
    %v572 = vpop.xlane.xlu0 %571
    %v573 = vsel %vm356, %v525, 0.0
    %574 = vadd.xlane.f32.xlu0 %v573
    %v575 = vpop.xlane.xlu0 %574
    %v576 = vmul.f32 %v530, 0.015625
    %v577 = vmul.f32 %v533, 0.015625
    %v578 = vmul.f32 %v536, 0.015625
    %v579 = vmul.f32 %v539, 0.015625
    %v580 = vmul.f32 %v542, 0.015625
    %v581 = vmul.f32 %v545, 0.015625
    %v582 = vmul.f32 %v548, 0.015625
    %v583 = vmul.f32 %v551, 0.015625
    %v584 = vmul.f32 %v554, 0.015625
    %v585 = vmul.f32 %v557, 0.015625
    %v586 = vmul.f32 %v560, 0.015625
    %v587 = vmul.f32 %v563, 0.015625
    %v588 = vmul.f32 %v566, 0.015625
    %v589 = vmul.f32 %v569, 0.015625
    %v590 = vmul.f32 %v572, 0.015625
    %v591 = vmul.f32 %v575, 0.015625
    %v592 = vmul.f32 %v510, %v510
    %v593 = vmul.f32 %v511, %v511
    %v594 = vmul.f32 %v512, %v512
    %v595 = vmul.f32 %v513, %v513
    %v596 = vmul.f32 %v514, %v514
    %v597 = vmul.f32 %v515, %v515
    %v598 = vmul.f32 %v516, %v516
    %v599 = vmul.f32 %v517, %v517
    %v600 = vmul.f32 %v518, %v518
    %v601 = vmul.f32 %v519, %v519
    %v602 = vmul.f32 %v520, %v520
    %v603 = vmul.f32 %v521, %v521
    %v604 = vmul.f32 %v522, %v522
    %v605 = vmul.f32 %v523, %v523
    %v606 = vmul.f32 %v524, %v524
    %v607 = vmul.f32 %v525, %v525
    %v608 = vsel %vm356, %v592, 0.0
    %609 = vadd.xlane.f32.xlu0 %v608
    %v610 = vpop.xlane.xlu0 %609
    %v611 = vsel %vm356, %v593, 0.0
    %612 = vadd.xlane.f32.xlu0 %v611
    %v613 = vpop.xlane.xlu0 %612
    %v614 = vsel %vm356, %v594, 0.0
    %615 = vadd.xlane.f32.xlu0 %v614
    %v616 = vpop.xlane.xlu0 %615
    %v617 = vsel %vm356, %v595, 0.0
    %618 = vadd.xlane.f32.xlu0 %v617
    %v619 = vpop.xlane.xlu0 %618
    %v620 = vsel %vm356, %v596, 0.0
    %621 = vadd.xlane.f32.xlu0 %v620
    %v622 = vpop.xlane.xlu0 %621
    %v623 = vsel %vm356, %v597, 0.0
    %624 = vadd.xlane.f32.xlu0 %v623
    %v625 = vpop.xlane.xlu0 %624
    %v626 = vsel %vm356, %v598, 0.0
    %627 = vadd.xlane.f32.xlu0 %v626
    %v628 = vpop.xlane.xlu0 %627
    %v629 = vsel %vm356, %v599, 0.0
    %630 = vadd.xlane.f32.xlu0 %v629
    %v631 = vpop.xlane.xlu0 %630
    %v632 = vsel %vm356, %v600, 0.0
    %633 = vadd.xlane.f32.xlu0 %v632
    %v634 = vpop.xlane.xlu0 %633
    %v635 = vsel %vm356, %v601, 0.0
    %636 = vadd.xlane.f32.xlu0 %v635
    %v637 = vpop.xlane.xlu0 %636
    %v638 = vsel %vm356, %v602, 0.0
    %639 = vadd.xlane.f32.xlu0 %v638
    %v640 = vpop.xlane.xlu0 %639
    %v641 = vsel %vm356, %v603, 0.0
    %642 = vadd.xlane.f32.xlu0 %v641
    %v643 = vpop.xlane.xlu0 %642
    %v644 = vsel %vm356, %v604, 0.0
    %645 = vadd.xlane.f32.xlu0 %v644
    %v646 = vpop.xlane.xlu0 %645
    %v647 = vsel %vm356, %v605, 0.0
    %648 = vadd.xlane.f32.xlu0 %v647
    %v649 = vpop.xlane.xlu0 %648
    %v650 = vsel %vm356, %v606, 0.0
    %651 = vadd.xlane.f32.xlu0 %v650
    %v652 = vpop.xlane.xlu0 %651
    %v653 = vsel %vm356, %v607, 0.0
    %654 = vadd.xlane.f32.xlu0 %v653
    %v655 = vpop.xlane.xlu0 %654
    %v656 = vmul.f32 %v610, 0.015625
    %v657 = vmul.f32 %v613, 0.015625
    %v658 = vmul.f32 %v616, 0.015625
    %v659 = vmul.f32 %v619, 0.015625
    %v660 = vmul.f32 %v622, 0.015625
    %v661 = vmul.f32 %v625, 0.015625
    %v662 = vmul.f32 %v628, 0.015625
    %v663 = vmul.f32 %v631, 0.015625
    %v664 = vmul.f32 %v634, 0.015625
    %v665 = vmul.f32 %v637, 0.015625
    %v666 = vmul.f32 %v640, 0.015625
    %v667 = vmul.f32 %v643, 0.015625
    %v668 = vmul.f32 %v646, 0.015625
    %v669 = vmul.f32 %v649, 0.015625
    %v670 = vmul.f32 %v652, 0.015625
    %v671 = vmul.f32 %v655, 0.015625
    %v672 = vmul.f32 %v576, %v576
    %v673 = vmul.f32 %v577, %v577
    %v674 = vmul.f32 %v578, %v578
    %v675 = vmul.f32 %v579, %v579
    %v676 = vmul.f32 %v580, %v580
    %v677 = vmul.f32 %v581, %v581
    %v678 = vmul.f32 %v582, %v582
    %v679 = vmul.f32 %v583, %v583
    %v680 = vmul.f32 %v584, %v584
    %v681 = vmul.f32 %v585, %v585
    %v682 = vmul.f32 %v586, %v586
    %v683 = vmul.f32 %v587, %v587
    %v684 = vmul.f32 %v588, %v588
    %v685 = vmul.f32 %v589, %v589
    %v686 = vmul.f32 %v590, %v590
    %v687 = vmul.f32 %v591, %v591
    %v688 = vsub.f32 %v656, %v672
    %v689 = vsub.f32 %v657, %v673
    %v690 = vsub.f32 %v658, %v674
    %v691 = vsub.f32 %v659, %v675
    %v692 = vsub.f32 %v660, %v676
    %v693 = vsub.f32 %v661, %v677
    %v694 = vsub.f32 %v662, %v678
    %v695 = vsub.f32 %v663, %v679
    %v696 = vsub.f32 %v664, %v680
    %v697 = vsub.f32 %v665, %v681
    %v698 = vsub.f32 %v666, %v682
    %v699 = vsub.f32 %v667, %v683
    %v700 = vsub.f32 %v668, %v684
    %v701 = vsub.f32 %v669, %v685
    %v702 = vsub.f32 %v670, %v686
    %v703 = vsub.f32 %v671, %v687
    %v704 = vsub.f32 %v510, %v576
    %v705 = vsub.f32 %v511, %v577
    %v706 = vsub.f32 %v512, %v578
    %v707 = vsub.f32 %v513, %v579
    %v708 = vsub.f32 %v514, %v580
    %v709 = vsub.f32 %v515, %v581
    %v710 = vsub.f32 %v516, %v582
    %v711 = vsub.f32 %v517, %v583
    %v712 = vsub.f32 %v518, %v584
    %v713 = vsub.f32 %v519, %v585
    %v714 = vsub.f32 %v520, %v586
    %v715 = vsub.f32 %v521, %v587
    %v716 = vsub.f32 %v522, %v588
    %v717 = vsub.f32 %v523, %v589
    %v718 = vsub.f32 %v524, %v590
    %v719 = vsub.f32 %v525, %v591
    %v720 = vadd.f32 %v688, 1e-05
    %v721 = vadd.f32 %v689, 1e-05
    %v722 = vadd.f32 %v690, 1e-05
    %v723 = vadd.f32 %v691, 1e-05
    %v724 = vadd.f32 %v692, 1e-05
    %v725 = vadd.f32 %v693, 1e-05
    %v726 = vadd.f32 %v694, 1e-05
    %v727 = vadd.f32 %v695, 1e-05
    %v728 = vadd.f32 %v696, 1e-05
    %v729 = vadd.f32 %v697, 1e-05
    %v730 = vadd.f32 %v698, 1e-05
    %v731 = vadd.f32 %v699, 1e-05
    %v732 = vadd.f32 %v700, 1e-05
    %v733 = vadd.f32 %v701, 1e-05
    %v734 = vadd.f32 %v702, 1e-05
    %v735 = vadd.f32 %v703, 1e-05
    %v736 = vrsqrt.pop %v720
    %v737 = vrsqrt.pop %v721
    %v738 = vrsqrt.pop %v722
    %v739 = vrsqrt.pop %v723
    %v740 = vrsqrt.pop %v724
    %v741 = vrsqrt.pop %v725
    %v742 = vrsqrt.pop %v726
    %v743 = vrsqrt.pop %v727
    %v744 = vrsqrt.pop %v728
    %v745 = vrsqrt.pop %v729
    %v746 = vrsqrt.pop %v730
    %v747 = vrsqrt.pop %v731
    %v748 = vrsqrt.pop %v732
    %v749 = vrsqrt.pop %v733
    %v750 = vrsqrt.pop %v734
    %v751 = vrsqrt.pop %v735
    %v752 = vmul.f32 %v704, %v736
    %v753 = vmul.f32 %v705, %v737
    %v754 = vmul.f32 %v706, %v738
    %v755 = vmul.f32 %v707, %v739
    %v756 = vmul.f32 %v708, %v740
    %v757 = vmul.f32 %v709, %v741
    %v758 = vmul.f32 %v710, %v742
    %v759 = vmul.f32 %v711, %v743
    %v760 = vmul.f32 %v712, %v744
    %v761 = vmul.f32 %v713, %v745
    %v762 = vmul.f32 %v714, %v746
    %v763 = vmul.f32 %v715, %v747
    %v764 = vmul.f32 %v716, %v748
    %v765 = vmul.f32 %v717, %v749
    %v766 = vmul.f32 %v718, %v750
    %v767 = vmul.f32 %v719, %v751
    %v768 = vlaneseq
    %v769 = vshrl.u32 %v768, 7
    %v770 = vsub.s32 0, %v769
    %v771 = vrot.slane %v526, %v770
    %v772 = vmul.f32 %v752, %v771
    %v773 = vmul.f32 %v753, %v771
    %v774 = vmul.f32 %v754, %v771
    %v775 = vmul.f32 %v755, %v771
    %v776 = vmul.f32 %v756, %v771
    %v777 = vmul.f32 %v757, %v771
    %v778 = vmul.f32 %v758, %v771
    %v779 = vmul.f32 %v759, %v771
    %v780 = vmul.f32 %v760, %v771
    %v781 = vmul.f32 %v761, %v771
    %v782 = vmul.f32 %v762, %v771
    %v783 = vmul.f32 %v763, %v771
    %v784 = vmul.f32 %v764, %v771
    %v785 = vmul.f32 %v765, %v771
    %v786 = vmul.f32 %v766, %v771
    %v787 = vmul.f32 %v767, %v771
    %v788 = vlaneseq
    %v789 = vshrl.u32 %v788, 7
    %v790 = vsub.s32 0, %v789
    %v791 = vrot.slane %v527, %v790
    %v792 = vadd.f32 %v772, %v791
    %v793 = vadd.f32 %v773, %v791
    %v794 = vadd.f32 %v774, %v791
    %v795 = vadd.f32 %v775, %v791
    %v796 = vadd.f32 %v776, %v791
    %v797 = vadd.f32 %v777, %v791
    %v798 = vadd.f32 %v778, %v791
    %v799 = vadd.f32 %v779, %v791
    %v800 = vadd.f32 %v780, %v791
    %v801 = vadd.f32 %v781, %v791
    %v802 = vadd.f32 %v782, %v791
    %v803 = vadd.f32 %v783, %v791
    %v804 = vadd.f32 %v784, %v791
    %v805 = vadd.f32 %v785, %v791
    %v806 = vadd.f32 %v786, %v791
    %v807 = vadd.f32 %v787, %v791
    %s808 = scalar_lea.vmem [#allocation2], 32
    %v809 = vld [vmem:[%s808] sm:$0xf]
    %v810 = vld [vmem:[%s808 + $0x4] sm:$0xf]
    %v811 = vld [vmem:[%s808 + $0x8] sm:$0xf]
    %v812 = vld [vmem:[%s808 + $0xc] sm:$0xf]
    %v813 = vld [vmem:[%s808 + $0x10] sm:$0xf]
    %v814 = vld [vmem:[%s808 + $0x14] sm:$0xf]
    %v815 = vld [vmem:[%s808 + $0x18] sm:$0xf]
    %v816 = vld [vmem:[%s808 + $0x1c] sm:$0xf]
    %v817 = vpack.c.bf16 %v511, %v510
    %v818 = vpack.c.bf16 %v513, %v512
    %v819 = vpack.c.bf16 %v515, %v514
    %v820 = vpack.c.bf16 %v517, %v516
    %v821 = vpack.c.bf16 %v519, %v518
    %v822 = vpack.c.bf16 %v521, %v520
    %v823 = vpack.c.bf16 %v523, %v522
    %v824 = vpack.c.bf16 %v525, %v524
    %v825 = vld [vmem:[%s6 + $0x4] sm:$0x1]
    %v826 = vlaneseq
    %v827 = vshrl.u32 %v826, 7
    %v828 = vsub.s32 0, %v827
    %v829 = vrot.slane %v825, %v828
    %v838 = vunpack.c.l.b16 %v809
    %v839 = vunpack.c.l.b16 %v810
    %v840 = vunpack.c.l.b16 %v811
    %v841 = vunpack.c.l.b16 %v812
    %v842 = vunpack.c.l.b16 %v813
    %v843 = vunpack.c.l.b16 %v814
    %v844 = vunpack.c.l.b16 %v815
    %v845 = vunpack.c.l.b16 %v816
    %v846 = vpack.c.b16 %v839, %v838
    %v847 = vpack.c.b16 %v841, %v840
    %v848 = vpack.c.b16 %v843, %v842
    %v849 = vpack.c.b16 %v845, %v844
    %v855 = vsel %vm356, %v817, 0
    %v858 = vsel %vm356, %v818, 0
    %v861 = vsel %vm356, %v819, 0
    %v864 = vsel %vm356, %v820, 0
    %v867 = vsel %vm356, %v821, 0
    %v870 = vsel %vm356, %v822, 0
    %v873 = vsel %vm356, %v823, 0
    %v876 = vsel %vm356, %v824, 0
    %878 = vmatprep.subr.bf16.mxu0 0
    %879 = vmatpush1.bf16.msra.mxu0 %v846
    %880 = vmatprep.subr.bf16.mxu0 0
    %881 = vmatpush1.bf16.msra.mxu0 %v847
    %882 = vmatprep.subr.bf16.mxu0 0
    %883 = vmatpush1.bf16.msra.mxu0 %v848
    %884 = vmatprep.subr.bf16.mxu0 0
    %885 = vmatpush1.bf16.msra.mxu0 %v849
    %886 = vmatprep.subr.bf16.mxu0 0
    %887 = vmatpush1.bf16.msra.mxu0 0
    %888 = vmatprep.subr.bf16.mxu0 0
    %889 = vmatpush1.bf16.msra.mxu0 0
    %890 = vmatprep.subr.bf16.mxu0 0
    %891 = vmatpush1.bf16.msra.mxu0 0
    %892 = vmatprep.subr.bf16.mxu0 0
    %893 = vmatpush1.bf16.msra.mxu0 0
    %894 = vmatprep.subr.bf16.mxu0 0
    %895 = vmatpush1.bf16.msra.mxu0 0
    %896 = vmatprep.subr.bf16.mxu0 0
    %897 = vmatpush1.bf16.msra.mxu0 0
    %898 = vmatprep.subr.bf16.mxu0 0
    %899 = vmatpush1.bf16.msra.mxu0 0
    %900 = vmatprep.subr.bf16.mxu0 0
    %901 = vmatpush1.bf16.msra.mxu0 0
    %902 = vmatprep.subr.bf16.mxu0 0
    %903 = vmatpush1.bf16.msra.mxu0 0
    %904 = vmatprep.subr.bf16.mxu0 0
    %905 = vmatpush1.bf16.msra.mxu0 0
    %906 = vmatprep.subr.bf16.mxu0 0
    %907 = vmatpush1.bf16.msra.mxu0 0
    %908 = vmatprep.subr.bf16.mxu0 0
    %909 = vmatpush1.bf16.msra.mxu0 0
    %910 = vmatprep.mubr.bf16.mxu0 0
    %911 = vmatmul.mubr.bf16.gmra.mrb[0].mxu0 %v855
    %v912 = vpop.f32.mrb[0].mxu0
    %v913 = vadd.f32 %v829, %v912
    %v914 = vpop.f32.mrb[0].mxu0
    %v915 = vpop.f32.mrb[0].mxu0
    %v916 = vadd.f32 %v829, %v915
    %v917 = vpop.f32.mrb[0].mxu0
    %918 = vmatprep.mubr.bf16.mxu0 0
    %919 = vmatmul.mubr.bf16.gmra.mrb[0].mxu0 %v858
    %v920 = vpop.f32.mrb[0].mxu0
    %v921 = vadd.f32 %v829, %v920
    %v922 = vpop.f32.mrb[0].mxu0
    %v923 = vpop.f32.mrb[0].mxu0
    %v924 = vadd.f32 %v829, %v923
    %v925 = vpop.f32.mrb[0].mxu0
    %926 = vmatprep.mubr.bf16.mxu0 0
    %927 = vmatmul.mubr.bf16.gmra.mrb[0].mxu0 %v861
    %v928 = vpop.f32.mrb[0].mxu0
    %v929 = vadd.f32 %v829, %v928
    %v930 = vpop.f32.mrb[0].mxu0
    %v931 = vpop.f32.mrb[0].mxu0
    %v932 = vadd.f32 %v829, %v931
    %v933 = vpop.f32.mrb[0].mxu0
    %934 = vmatprep.mubr.bf16.mxu0 0
    %935 = vmatmul.mubr.bf16.gmra.mrb[0].mxu0 %v864
    %v936 = vpop.f32.mrb[0].mxu0
    %v937 = vadd.f32 %v829, %v936
    %v938 = vpop.f32.mrb[0].mxu0
    %v939 = vpop.f32.mrb[0].mxu0
    %v940 = vadd.f32 %v829, %v939
    %v941 = vpop.f32.mrb[0].mxu0
    %942 = vmatprep.mubr.bf16.mxu0 0
    %943 = vmatmul.mubr.bf16.gmra.mrb[0].mxu0 %v867
    %v944 = vpop.f32.mrb[0].mxu0
    %v945 = vadd.f32 %v829, %v944
    %v946 = vpop.f32.mrb[0].mxu0
    %v947 = vpop.f32.mrb[0].mxu0
    %v948 = vadd.f32 %v829, %v947
    %v949 = vpop.f32.mrb[0].mxu0
    %950 = vmatprep.mubr.bf16.mxu0 0
    %951 = vmatmul.mubr.bf16.gmra.mrb[0].mxu0 %v870
    %v952 = vpop.f32.mrb[0].mxu0
    %v953 = vadd.f32 %v829, %v952
    %v954 = vpop.f32.mrb[0].mxu0
    %v955 = vpop.f32.mrb[0].mxu0
    %v956 = vadd.f32 %v829, %v955
    %v957 = vpop.f32.mrb[0].mxu0
    %958 = vmatprep.mubr.bf16.mxu0 0
    %959 = vmatmul.mubr.bf16.gmra.mrb[0].mxu0 %v873
    %v960 = vpop.f32.mrb[0].mxu0
    %v961 = vadd.f32 %v829, %v960
    %v962 = vpop.f32.mrb[0].mxu0
    %v963 = vpop.f32.mrb[0].mxu0
    %v964 = vadd.f32 %v829, %v963
    %v965 = vpop.f32.mrb[0].mxu0
    %966 = vmatprep.mubr.bf16.mxu0 0
    %967 = vmatmul.mubr.bf16.gmra.mrb[0].mxu0 %v876
    %v968 = vpop.f32.mrb[0].mxu0
    %v969 = vadd.f32 %v829, %v968
    %v970 = vpop.f32.mrb[0].mxu0
    %v971 = vpop.f32.mrb[0].mxu0
    %v972 = vadd.f32 %v829, %v971
    %v973 = vpop.f32.mrb[0].mxu0
    %974 = vdwg.mxu0
    %v975 = vld [vmem:[#allocation5] sm:$0xff]
    %v976 = vld [vmem:[#allocation5 + $0x8] sm:$0xff]
    %v977 = vld [vmem:[#allocation5 + $0x10] sm:$0xff]
    %v978 = vld [vmem:[#allocation5 + $0x18] sm:$0xff]
    %v979 = vld [vmem:[#allocation5 + $0x20] sm:$0xff]
    %v980 = vld [vmem:[#allocation5 + $0x28] sm:$0xff]
    %v981 = vld [vmem:[#allocation5 + $0x30] sm:$0xff]
    %v982 = vld [vmem:[#allocation5 + $0x38] sm:$0xff]
    %v983 = vld [vmem:[%s5] ss:$2 sm:$0x3]
    %s984 = scalar_lea.vmem [#allocation2], 64
    %v985 = vld [vmem:[%s984] sm:$0xf]
    %v986 = vld [vmem:[%s984 + $0x4] sm:$0xf]
    %v987 = vld [vmem:[%s984 + $0x8] sm:$0xf]
    %v988 = vld [vmem:[%s984 + $0xc] sm:$0xf]
    %v989 = vld [vmem:[%s984 + $0x10] sm:$0xf]
    %v990 = vld [vmem:[%s984 + $0x14] sm:$0xf]
    %v991 = vld [vmem:[%s984 + $0x18] sm:$0xf]
    %v992 = vld [vmem:[%s984 + $0x1c] sm:$0xf]
    %v993 = vld [vmem:[%s6 + $0x7] sm:$0x1]
    %v994 = vld [vmem:[%s2] sm:$0xff]
    %v995 = vld [vmem:[%s2 + $0x8] sm:$0xff]
    %v996 = vld [vmem:[%s2 + $0x10] sm:$0xff]
    %v997 = vld [vmem:[%s2 + $0x18] sm:$0xff]
    %v998 = vld [vmem:[%s2 + $0x20] sm:$0xff]
    %v999 = vld [vmem:[%s2 + $0x28] sm:$0xff]
    %v1000 = vld [vmem:[%s2 + $0x30] sm:$0xff]
    %v1001 = vld [vmem:[%s2 + $0x38] sm:$0xff]
    %v1002 = vld [vmem:[%s2 + $0x40] sm:$0xff]
    %v1003 = vld [vmem:[%s2 + $0x48] sm:$0xff]
    %v1004 = vld [vmem:[%s2 + $0x50] sm:$0xff]
    %v1005 = vld [vmem:[%s2 + $0x58] sm:$0xff]
    %v1006 = vld [vmem:[%s2 + $0x60] sm:$0xff]
    %v1007 = vld [vmem:[%s2 + $0x68] sm:$0xff]
    %v1008 = vld [vmem:[%s2 + $0x70] sm:$0xff]
    %v1009 = vld [vmem:[%s2 + $0x78] sm:$0xff]
    %v1010 = vpack.c.bf16 %v793, %v792
    %v1011 = vpack.c.bf16 %v795, %v794
    %v1012 = vpack.c.bf16 %v797, %v796
    %v1013 = vpack.c.bf16 %v799, %v798
    %v1014 = vpack.c.bf16 %v801, %v800
    %v1015 = vpack.c.bf16 %v803, %v802
    %v1016 = vpack.c.bf16 %v805, %v804
    %v1017 = vpack.c.bf16 %v807, %v806
    %v1019 = vlaneseq
    %v1020 = vshrl.u32 %v1019, 7
    %v1021 = vsub.s32 0, %v1020
    %v1022 = vrot.slane %v983, %v1021
    %v1023 = vlaneseq
    %v1024 = vshrl.u32 %v1023, 7
    %v1025 = vsub.s32 1, %v1024
    %v1026 = vrot.slane %v983, %v1025
    %v1037 = vunpack.c.l.b16 %v975
    %v1038 = vunpack.c.h.b16 %v975
    %v1039 = vunpack.c.l.b16 %v976
    %v1040 = vunpack.c.h.b16 %v976
    %v1041 = vunpack.c.l.b16 %v977
    %v1042 = vunpack.c.h.b16 %v977
    %v1043 = vunpack.c.l.b16 %v978
    %v1044 = vunpack.c.h.b16 %v978
    %v1045 = vunpack.c.l.b16 %v979
    %v1046 = vunpack.c.h.b16 %v979
    %v1047 = vunpack.c.l.b16 %v980
    %v1048 = vunpack.c.h.b16 %v980
    %v1049 = vunpack.c.l.b16 %v981
    %v1050 = vunpack.c.h.b16 %v981
    %v1051 = vunpack.c.l.b16 %v982
    %v1052 = vunpack.c.h.b16 %v982
    %v1053 = vpack.c.b16 %v1039, %v1037
    %v1054 = vpack.c.b16 %v1040, %v1038
    %v1055 = vpack.c.b16 %v1043, %v1041
    %v1056 = vpack.c.b16 %v1044, %v1042
    %v1057 = vpack.c.b16 %v1047, %v1045
    %v1058 = vpack.c.b16 %v1048, %v1046
    %v1059 = vpack.c.b16 %v1051, %v1049
    %v1060 = vpack.c.b16 %v1052, %v1050
    %v1070 = vsel %vm356, %v1010, 0
    %v1073 = vsel %vm356, %v1011, 0
    %v1076 = vsel %vm356, %v1012, 0
    %v1079 = vsel %vm356, %v1013, 0
    %v1082 = vsel %vm356, %v1014, 0
    %v1085 = vsel %vm356, %v1015, 0
    %v1088 = vsel %vm356, %v1016, 0
    %v1091 = vsel %vm356, %v1017, 0
    %1093 = vmatprep.subr.bf16.mxu0 %v1054
    %1094 = vmatpush1.bf16.msra.mxu0 %v1053
    %1095 = vmatprep.subr.bf16.mxu0 %v1056
    %1096 = vmatpush1.bf16.msra.mxu0 %v1055
    %1097 = vmatprep.subr.bf16.mxu0 %v1058
    %1098 = vmatpush1.bf16.msra.mxu0 %v1057
    %1099 = vmatprep.subr.bf16.mxu0 %v1060
    %1100 = vmatpush1.bf16.msra.mxu0 %v1059
    %1101 = vmatprep.subr.bf16.mxu0 0
    %1102 = vmatpush1.bf16.msra.mxu0 0
    %1103 = vmatprep.subr.bf16.mxu0 0
    %1104 = vmatpush1.bf16.msra.mxu0 0
    %1105 = vmatprep.subr.bf16.mxu0 0
    %1106 = vmatpush1.bf16.msra.mxu0 0
    %1107 = vmatprep.subr.bf16.mxu0 0
    %1108 = vmatpush1.bf16.msra.mxu0 0
    %1109 = vmatprep.subr.bf16.mxu0 0
    %1110 = vmatpush1.bf16.msra.mxu0 0
    %1111 = vmatprep.subr.bf16.mxu0 0
    %1112 = vmatpush1.bf16.msra.mxu0 0
    %1113 = vmatprep.subr.bf16.mxu0 0
    %1114 = vmatpush1.bf16.msra.mxu0 0
    %1115 = vmatprep.subr.bf16.mxu0 0
    %1116 = vmatpush1.bf16.msra.mxu0 0
    %1117 = vmatprep.subr.bf16.mxu0 0
    %1118 = vmatpush1.bf16.msra.mxu0 0
    %1119 = vmatprep.subr.bf16.mxu0 0
    %1120 = vmatpush1.bf16.msra.mxu0 0
    %1121 = vmatprep.subr.bf16.mxu0 0
    %1122 = vmatpush1.bf16.msra.mxu0 0
    %1123 = vmatprep.subr.bf16.mxu0 0
    %1124 = vmatpush1.bf16.msra.mxu0 0
    %1125 = vmatprep.mubr.bf16.mxu0 0
    %1126 = vmatmul.mubr.bf16.gmra.mrb[0].mxu0 %v1070
    %v1127 = vpop.f32.mrb[0].mxu0
    %v1128 = vadd.f32 %v1022, %v1127
    %v1129 = vpop.f32.mrb[0].mxu0
    %v1130 = vadd.f32 %v1026, %v1129
    %v1131 = vpop.f32.mrb[0].mxu0
    %v1132 = vadd.f32 %v1022, %v1131
    %v1133 = vpop.f32.mrb[0].mxu0
    %v1134 = vadd.f32 %v1026, %v1133
    %1135 = vmatprep.mubr.bf16.mxu0 0
    %1136 = vmatmul.mubr.bf16.gmra.mrb[0].mxu0 %v1073
    %v1137 = vpop.f32.mrb[0].mxu0
    %v1138 = vadd.f32 %v1022, %v1137
    %v1139 = vpop.f32.mrb[0].mxu0
    %v1140 = vadd.f32 %v1026, %v1139
    %v1141 = vpop.f32.mrb[0].mxu0
    %v1142 = vadd.f32 %v1022, %v1141
    %v1143 = vpop.f32.mrb[0].mxu0
    %v1144 = vadd.f32 %v1026, %v1143
    %1145 = vmatprep.mubr.bf16.mxu0 0
    %1146 = vmatmul.mubr.bf16.gmra.mrb[0].mxu0 %v1076
    %v1147 = vpop.f32.mrb[0].mxu0
    %v1148 = vadd.f32 %v1022, %v1147
    %v1149 = vpop.f32.mrb[0].mxu0
    %v1150 = vadd.f32 %v1026, %v1149
    %v1151 = vpop.f32.mrb[0].mxu0
    %v1152 = vadd.f32 %v1022, %v1151
    %v1153 = vpop.f32.mrb[0].mxu0
    %v1154 = vadd.f32 %v1026, %v1153
    %1155 = vmatprep.mubr.bf16.mxu0 0
    %1156 = vmatmul.mubr.bf16.gmra.mrb[0].mxu0 %v1079
    %v1157 = vpop.f32.mrb[0].mxu0
    %v1158 = vadd.f32 %v1022, %v1157
    %v1159 = vpop.f32.mrb[0].mxu0
    %v1160 = vadd.f32 %v1026, %v1159
    %v1161 = vpop.f32.mrb[0].mxu0
    %v1162 = vadd.f32 %v1022, %v1161
    %v1163 = vpop.f32.mrb[0].mxu0
    %v1164 = vadd.f32 %v1026, %v1163
    %1165 = vmatprep.mubr.bf16.mxu0 0
    %1166 = vmatmul.mubr.bf16.gmra.mrb[0].mxu0 %v1082
    %v1167 = vpop.f32.mrb[0].mxu0
    %v1168 = vadd.f32 %v1022, %v1167
    %v1169 = vpop.f32.mrb[0].mxu0
    %v1170 = vadd.f32 %v1026, %v1169
    %v1171 = vpop.f32.mrb[0].mxu0
    %v1172 = vadd.f32 %v1022, %v1171
    %v1173 = vpop.f32.mrb[0].mxu0
    %v1174 = vadd.f32 %v1026, %v1173
    %1175 = vmatprep.mubr.bf16.mxu0 0
    %1176 = vmatmul.mubr.bf16.gmra.mrb[0].mxu0 %v1085
    %v1177 = vpop.f32.mrb[0].mxu0
    %v1178 = vadd.f32 %v1022, %v1177
    %v1179 = vpop.f32.mrb[0].mxu0
    %v1180 = vadd.f32 %v1026, %v1179
    %v1181 = vpop.f32.mrb[0].mxu0
    %v1182 = vadd.f32 %v1022, %v1181
    %v1183 = vpop.f32.mrb[0].mxu0
    %v1184 = vadd.f32 %v1026, %v1183
    %1185 = vmatprep.mubr.bf16.mxu0 0
    %1186 = vmatmul.mubr.bf16.gmra.mrb[0].mxu0 %v1088
    %v1187 = vpop.f32.mrb[0].mxu0
    %v1188 = vadd.f32 %v1022, %v1187
    %v1189 = vpop.f32.mrb[0].mxu0
    %v1190 = vadd.f32 %v1026, %v1189
    %v1191 = vpop.f32.mrb[0].mxu0
    %v1192 = vadd.f32 %v1022, %v1191
    %v1193 = vpop.f32.mrb[0].mxu0
    %v1194 = vadd.f32 %v1026, %v1193
    %1195 = vmatprep.mubr.bf16.mxu0 0
    %1196 = vmatmul.mubr.bf16.gmra.mrb[0].mxu0 %v1091
    %v1197 = vpop.f32.mrb[0].mxu0
    %v1198 = vadd.f32 %v1022, %v1197
    %v1199 = vpop.f32.mrb[0].mxu0
    %v1200 = vadd.f32 %v1026, %v1199
    %v1201 = vpop.f32.mrb[0].mxu0
    %v1202 = vadd.f32 %v1022, %v1201
    %v1203 = vpop.f32.mrb[0].mxu0
    %v1204 = vadd.f32 %v1026, %v1203
    %1205 = vdwg.mxu0
    %v1206 = vpack.c.bf16 %v1132, %v1128
    %v1207 = vpack.c.bf16 %v1142, %v1138
    %v1208 = vpack.c.bf16 %v1152, %v1148
    %v1209 = vpack.c.bf16 %v1162, %v1158
    %v1210 = vpack.c.bf16 %v1172, %v1168
    %v1211 = vpack.c.bf16 %v1182, %v1178
    %v1212 = vpack.c.bf16 %v1192, %v1188
    %v1213 = vpack.c.bf16 %v1202, %v1198
    %1222 = vrot.lane.b32.xlu0 %v1206, 64
    %v1223 = vpop.permute.xlu0 %1222
    %1224 = vrot.lane.b32.xlu0 %v1207, 64
    %v1225 = vpop.permute.xlu0 %1224
    %1226 = vrot.lane.b32.xlu0 %v1208, 64
    %v1227 = vpop.permute.xlu0 %1226
    %1228 = vrot.lane.b32.xlu0 %v1209, 64
    %v1229 = vpop.permute.xlu0 %1228
    %1230 = vrot.lane.b32.xlu0 %v1210, 64
    %v1231 = vpop.permute.xlu0 %1230
    %1232 = vrot.lane.b32.xlu0 %v1211, 64
    %v1233 = vpop.permute.xlu0 %1232
    %1234 = vrot.lane.b32.xlu0 %v1212, 64
    %v1235 = vpop.permute.xlu0 %1234
    %1236 = vrot.lane.b32.xlu0 %v1213, 64
    %v1237 = vpop.permute.xlu0 %1236
    %v1239 = vsel %vm356, %v1206, 0
    %v1242 = vsel %vm356, %v1207, 0
    %v1245 = vsel %vm356, %v1208, 0
    %v1248 = vsel %vm356, %v1209, 0
    %v1251 = vsel %vm356, %v1210, 0
    %v1254 = vsel %vm356, %v1211, 0
    %v1257 = vsel %vm356, %v1212, 0
    %v1260 = vsel %vm356, %v1213, 0
    %v1263 = vsel %vm356, %v1223, 0
    %v1266 = vsel %vm356, %v1225, 0
    %v1269 = vsel %vm356, %v1227, 0
    %v1272 = vsel %vm356, %v1229, 0
    %v1275 = vsel %vm356, %v1231, 0
    %v1278 = vsel %vm356, %v1233, 0
    %v1281 = vsel %vm356, %v1235, 0
    %v1284 = vsel %vm356, %v1237, 0
    %1286 = vmatprep.subr.bf16.mxu0 0
    %1287 = vmatpush1.bf16.xpose.msra.mxu0 %v1263
    %1288 = vmatprep.subr.bf16.mxu0 0
    %1289 = vmatpush1.bf16.xpose.msra.mxu0 %v1266
    %1290 = vmatprep.subr.bf16.mxu0 0
    %1291 = vmatpush1.bf16.xpose.msra.mxu0 %v1269
    %1292 = vmatprep.subr.bf16.mxu0 0
    %1293 = vmatpush1.bf16.xpose.msra.mxu0 %v1272
    %1294 = vmatprep.subr.bf16.mxu0 0
    %1295 = vmatpush1.bf16.xpose.msra.mxu0 %v1275
    %1296 = vmatprep.subr.bf16.mxu0 0
    %1297 = vmatpush1.bf16.xpose.msra.mxu0 %v1278
    %1298 = vmatprep.subr.bf16.mxu0 0
    %1299 = vmatpush1.bf16.xpose.msra.mxu0 %v1281
    %1300 = vmatprep.subr.bf16.mxu0 0
    %1301 = vmatpush1.bf16.xpose.msra.mxu0 %v1284
    %1302 = vmatprep.subr.bf16.mxu0 0
    %1303 = vmatpush1.bf16.xpose.msra.mxu0 0
    %1304 = vmatprep.subr.bf16.mxu0 0
    %1305 = vmatpush1.bf16.xpose.msra.mxu0 0
    %1306 = vmatprep.subr.bf16.mxu0 0
    %1307 = vmatpush1.bf16.xpose.msra.mxu0 0
    %1308 = vmatprep.subr.bf16.mxu0 0
    %1309 = vmatpush1.bf16.xpose.msra.mxu0 0
    %1310 = vmatprep.subr.bf16.mxu0 0
    %1311 = vmatpush1.bf16.xpose.msra.mxu0 0
    %1312 = vmatprep.subr.bf16.mxu0 0
    %1313 = vmatpush1.bf16.xpose.msra.mxu0 0
    %1314 = vmatprep.subr.bf16.mxu0 0
    %1315 = vmatpush1.bf16.xpose.msra.mxu0 0
    %1316 = vmatprep.subr.bf16.mxu0 0
    %1317 = vmatpush1.bf16.xpose.msra.mxu0 0
    %1318 = vmatprep.mubr.bf16.mxu0 0
    %1319 = vmatmul.mubr.bf16.gmra.mrb[0].mxu0 %v1239
    %v1320 = vpop.f32.mrb[0].mxu0
    %v1321 = vadd.f32 0.0, %v1320
    %v1322 = vpop.f32.mrb[0].mxu0
    %v1323 = vpop.f32.mrb[0].mxu0
    %v1324 = vadd.f32 0.0, %v1323
    %v1325 = vpop.f32.mrb[0].mxu0
    %1326 = vmatprep.mubr.bf16.mxu0 0
    %1327 = vmatmul.mubr.bf16.gmra.mrb[0].mxu0 %v1242
    %v1328 = vpop.f32.mrb[0].mxu0
    %v1329 = vadd.f32 0.0, %v1328
    %v1330 = vpop.f32.mrb[0].mxu0
    %v1331 = vpop.f32.mrb[0].mxu0
    %v1332 = vadd.f32 0.0, %v1331
    %v1333 = vpop.f32.mrb[0].mxu0
    %1334 = vmatprep.mubr.bf16.mxu0 0
    %1335 = vmatmul.mubr.bf16.gmra.mrb[0].mxu0 %v1245
    %v1336 = vpop.f32.mrb[0].mxu0
    %v1337 = vadd.f32 0.0, %v1336
    %v1338 = vpop.f32.mrb[0].mxu0
    %v1339 = vpop.f32.mrb[0].mxu0
    %v1340 = vadd.f32 0.0, %v1339
    %v1341 = vpop.f32.mrb[0].mxu0
    %1342 = vmatprep.mubr.bf16.mxu0 0
    %1343 = vmatmul.mubr.bf16.gmra.mrb[0].mxu0 %v1248
    %v1344 = vpop.f32.mrb[0].mxu0
    %v1345 = vadd.f32 0.0, %v1344
    %v1346 = vpop.f32.mrb[0].mxu0
    %v1347 = vpop.f32.mrb[0].mxu0
    %v1348 = vadd.f32 0.0, %v1347
    %v1349 = vpop.f32.mrb[0].mxu0
    %1350 = vmatprep.mubr.bf16.mxu0 0
    %1351 = vmatmul.mubr.bf16.gmra.mrb[0].mxu0 %v1251
    %v1352 = vpop.f32.mrb[0].mxu0
    %v1353 = vadd.f32 0.0, %v1352
    %v1354 = vpop.f32.mrb[0].mxu0
    %v1355 = vpop.f32.mrb[0].mxu0
    %v1356 = vadd.f32 0.0, %v1355
    %v1357 = vpop.f32.mrb[0].mxu0
    %1358 = vmatprep.mubr.bf16.mxu0 0
    %1359 = vmatmul.mubr.bf16.gmra.mrb[0].mxu0 %v1254
    %v1360 = vpop.f32.mrb[0].mxu0
    %v1361 = vadd.f32 0.0, %v1360
    %v1362 = vpop.f32.mrb[0].mxu0
    %v1363 = vpop.f32.mrb[0].mxu0
    %v1364 = vadd.f32 0.0, %v1363
    %v1365 = vpop.f32.mrb[0].mxu0
    %1366 = vmatprep.mubr.bf16.mxu0 0
    %1367 = vmatmul.mubr.bf16.gmra.mrb[0].mxu0 %v1257
    %v1368 = vpop.f32.mrb[0].mxu0
    %v1369 = vadd.f32 0.0, %v1368
    %v1370 = vpop.f32.mrb[0].mxu0
    %v1371 = vpop.f32.mrb[0].mxu0
    %v1372 = vadd.f32 0.0, %v1371
    %v1373 = vpop.f32.mrb[0].mxu0
    %1374 = vmatprep.mubr.bf16.mxu0 0
    %1375 = vmatmul.mubr.bf16.gmra.mrb[0].mxu0 %v1260
    %v1376 = vpop.f32.mrb[0].mxu0
    %v1377 = vadd.f32 0.0, %v1376
    %v1378 = vpop.f32.mrb[0].mxu0
    %v1379 = vpop.f32.mrb[0].mxu0
    %v1380 = vadd.f32 0.0, %v1379
    %v1381 = vpop.f32.mrb[0].mxu0
    %1382 = vdwg.mxu0
    %v1383 = vmul.f32 %v1321, 0.125
    %v1384 = vmul.f32 %v1324, 0.125
    %v1385 = vmul.f32 %v1329, 0.125
    %v1386 = vmul.f32 %v1332, 0.125
    %v1387 = vmul.f32 %v1337, 0.125
    %v1388 = vmul.f32 %v1340, 0.125
    %v1389 = vmul.f32 %v1345, 0.125
    %v1390 = vmul.f32 %v1348, 0.125
    %v1391 = vmul.f32 %v1353, 0.125
    %v1392 = vmul.f32 %v1356, 0.125
    %v1393 = vmul.f32 %v1361, 0.125
    %v1394 = vmul.f32 %v1364, 0.125
    %v1395 = vmul.f32 %v1369, 0.125
    %v1396 = vmul.f32 %v1372, 0.125
    %v1397 = vmul.f32 %v1377, 0.125
    %v1398 = vmul.f32 %v1380, 0.125
    %v1399 = vadd.f32 %v1383, %v994
    %v1400 = vadd.f32 %v1384, %v995
    %v1401 = vadd.f32 %v1385, %v996
    %v1402 = vadd.f32 %v1386, %v997
    %v1403 = vadd.f32 %v1387, %v998
    %v1404 = vadd.f32 %v1388, %v999
    %v1405 = vadd.f32 %v1389, %v1000
    %v1406 = vadd.f32 %v1390, %v1001
    %v1407 = vadd.f32 %v1391, %v1002
    %v1408 = vadd.f32 %v1392, %v1003
    %v1409 = vadd.f32 %v1393, %v1004
    %v1410 = vadd.f32 %v1394, %v1005
    %v1411 = vadd.f32 %v1395, %v1006
    %v1412 = vadd.f32 %v1396, %v1007
    %v1413 = vadd.f32 %v1397, %v1008
    %v1414 = vadd.f32 %v1398, %v1009
    %1415 = vmax.xlane.f32.xlu0 %v1399
    %v1416 = vpop.xlane.xlu0 %1415
    %1417 = vmax.xlane.f32.xlu0 %v1400
    %v1418 = vpop.xlane.xlu0 %1417
    %1419 = vmax.xlane.f32.xlu0 %v1401
    %v1420 = vpop.xlane.xlu0 %1419
    %1421 = vmax.xlane.f32.xlu0 %v1402
    %v1422 = vpop.xlane.xlu0 %1421
    %1423 = vmax.xlane.f32.xlu0 %v1403
    %v1424 = vpop.xlane.xlu0 %1423
    %1425 = vmax.xlane.f32.xlu0 %v1404
    %v1426 = vpop.xlane.xlu0 %1425
    %1427 = vmax.xlane.f32.xlu0 %v1405
    %v1428 = vpop.xlane.xlu0 %1427
    %1429 = vmax.xlane.f32.xlu0 %v1406
    %v1430 = vpop.xlane.xlu0 %1429
    %1431 = vmax.xlane.f32.xlu0 %v1407
    %v1432 = vpop.xlane.xlu0 %1431
    %1433 = vmax.xlane.f32.xlu0 %v1408
    %v1434 = vpop.xlane.xlu0 %1433
    %1435 = vmax.xlane.f32.xlu0 %v1409
    %v1436 = vpop.xlane.xlu0 %1435
    %1437 = vmax.xlane.f32.xlu0 %v1410
    %v1438 = vpop.xlane.xlu0 %1437
    %1439 = vmax.xlane.f32.xlu0 %v1411
    %v1440 = vpop.xlane.xlu0 %1439
    %1441 = vmax.xlane.f32.xlu0 %v1412
    %v1442 = vpop.xlane.xlu0 %1441
    %1443 = vmax.xlane.f32.xlu0 %v1413
    %v1444 = vpop.xlane.xlu0 %1443
    %1445 = vmax.xlane.f32.xlu0 %v1414
    %v1446 = vpop.xlane.xlu0 %1445
    %v1447 = vsub.f32 %v1399, %v1416
    %v1448 = vsub.f32 %v1400, %v1418
    %v1449 = vsub.f32 %v1401, %v1420
    %v1450 = vsub.f32 %v1402, %v1422
    %v1451 = vsub.f32 %v1403, %v1424
    %v1452 = vsub.f32 %v1404, %v1426
    %v1453 = vsub.f32 %v1405, %v1428
    %v1454 = vsub.f32 %v1406, %v1430
    %v1455 = vsub.f32 %v1407, %v1432
    %v1456 = vsub.f32 %v1408, %v1434
    %v1457 = vsub.f32 %v1409, %v1436
    %v1458 = vsub.f32 %v1410, %v1438
    %v1459 = vsub.f32 %v1411, %v1440
    %v1460 = vsub.f32 %v1412, %v1442
    %v1461 = vsub.f32 %v1413, %v1444
    %v1462 = vsub.f32 %v1414, %v1446
    %v1463 = vmul.f32 %v1447, 1.442695
    %v1464 = vpow.pop %v1463
    %v1465 = vmul.f32 %v1448, 1.442695
    %v1466 = vpow.pop %v1465
    %v1467 = vmul.f32 %v1449, 1.442695
    %v1468 = vpow.pop %v1467
    %v1469 = vmul.f32 %v1450, 1.442695
    %v1470 = vpow.pop %v1469
    %v1471 = vmul.f32 %v1451, 1.442695
    %v1472 = vpow.pop %v1471
    %v1473 = vmul.f32 %v1452, 1.442695
    %v1474 = vpow.pop %v1473
    %v1475 = vmul.f32 %v1453, 1.442695
    %v1476 = vpow.pop %v1475
    %v1477 = vmul.f32 %v1454, 1.442695
    %v1478 = vpow.pop %v1477
    %v1479 = vmul.f32 %v1455, 1.442695
    %v1480 = vpow.pop %v1479
    %v1481 = vmul.f32 %v1456, 1.442695
    %v1482 = vpow.pop %v1481
    %v1483 = vmul.f32 %v1457, 1.442695
    %v1484 = vpow.pop %v1483
    %v1485 = vmul.f32 %v1458, 1.442695
    %v1486 = vpow.pop %v1485
    %v1487 = vmul.f32 %v1459, 1.442695
    %v1488 = vpow.pop %v1487
    %v1489 = vmul.f32 %v1460, 1.442695
    %v1490 = vpow.pop %v1489
    %v1491 = vmul.f32 %v1461, 1.442695
    %v1492 = vpow.pop %v1491
    %v1493 = vmul.f32 %v1462, 1.442695
    %v1494 = vpow.pop %v1493
    %1495 = vadd.xlane.f32.xlu0 %v1464
    %v1496 = vpop.xlane.xlu0 %1495
    %1497 = vadd.xlane.f32.xlu0 %v1466
    %v1498 = vpop.xlane.xlu0 %1497
    %1499 = vadd.xlane.f32.xlu0 %v1468
    %v1500 = vpop.xlane.xlu0 %1499
    %1501 = vadd.xlane.f32.xlu0 %v1470
    %v1502 = vpop.xlane.xlu0 %1501
    %1503 = vadd.xlane.f32.xlu0 %v1472
    %v1504 = vpop.xlane.xlu0 %1503
    %1505 = vadd.xlane.f32.xlu0 %v1474
    %v1506 = vpop.xlane.xlu0 %1505
    %1507 = vadd.xlane.f32.xlu0 %v1476
    %v1508 = vpop.xlane.xlu0 %1507
    %1509 = vadd.xlane.f32.xlu0 %v1478
    %v1510 = vpop.xlane.xlu0 %1509
    %1511 = vadd.xlane.f32.xlu0 %v1480
    %v1512 = vpop.xlane.xlu0 %1511
    %1513 = vadd.xlane.f32.xlu0 %v1482
    %v1514 = vpop.xlane.xlu0 %1513
    %1515 = vadd.xlane.f32.xlu0 %v1484
    %v1516 = vpop.xlane.xlu0 %1515
    %1517 = vadd.xlane.f32.xlu0 %v1486
    %v1518 = vpop.xlane.xlu0 %1517
    %1519 = vadd.xlane.f32.xlu0 %v1488
    %v1520 = vpop.xlane.xlu0 %1519
    %1521 = vadd.xlane.f32.xlu0 %v1490
    %v1522 = vpop.xlane.xlu0 %1521
    %1523 = vadd.xlane.f32.xlu0 %v1492
    %v1524 = vpop.xlane.xlu0 %1523
    %1525 = vadd.xlane.f32.xlu0 %v1494
    %v1526 = vpop.xlane.xlu0 %1525
    %v1527 = vrcp.pop %v1496
    %v1528 = vrcp.pop %v1498
    %v1529 = vrcp.pop %v1500
    %v1530 = vrcp.pop %v1502
    %v1531 = vrcp.pop %v1504
    %v1532 = vrcp.pop %v1506
    %v1533 = vrcp.pop %v1508
    %v1534 = vrcp.pop %v1510
    %v1535 = vrcp.pop %v1512
    %v1536 = vrcp.pop %v1514
    %v1537 = vrcp.pop %v1516
    %v1538 = vrcp.pop %v1518
    %v1539 = vrcp.pop %v1520
    %v1540 = vrcp.pop %v1522
    %v1541 = vrcp.pop %v1524
    %v1542 = vrcp.pop %v1526
    %v1543 = vmul.f32 %v1464, %v1527
    %v1544 = vmul.f32 %v1466, %v1528
    %v1545 = vmul.f32 %v1468, %v1529
    %v1546 = vmul.f32 %v1470, %v1530
    %v1547 = vmul.f32 %v1472, %v1531
    %v1548 = vmul.f32 %v1474, %v1532
    %v1549 = vmul.f32 %v1476, %v1533
    %v1550 = vmul.f32 %v1478, %v1534
    %v1551 = vmul.f32 %v1480, %v1535
    %v1552 = vmul.f32 %v1482, %v1536
    %v1553 = vmul.f32 %v1484, %v1537
    %v1554 = vmul.f32 %v1486, %v1538
    %v1555 = vmul.f32 %v1488, %v1539
    %v1556 = vmul.f32 %v1490, %v1540
    %v1557 = vmul.f32 %v1492, %v1541
    %v1558 = vmul.f32 %v1494, %v1542
    %v1559 = vpack.c.bf16 %v1544, %v1543
    %v1560 = vpack.c.bf16 %v1546, %v1545
    %v1561 = vpack.c.bf16 %v1548, %v1547
    %v1562 = vpack.c.bf16 %v1550, %v1549
    %v1563 = vpack.c.bf16 %v1552, %v1551
    %v1564 = vpack.c.bf16 %v1554, %v1553
    %v1565 = vpack.c.bf16 %v1556, %v1555
    %v1566 = vpack.c.bf16 %v1558, %v1557
    %v1567 = vpack.c.bf16 %v1134, %v1130
    %v1568 = vpack.c.bf16 %v1144, %v1140
    %v1569 = vpack.c.bf16 %v1154, %v1150
    %v1570 = vpack.c.bf16 %v1164, %v1160
    %v1571 = vpack.c.bf16 %v1174, %v1170
    %v1572 = vpack.c.bf16 %v1184, %v1180
    %v1573 = vpack.c.bf16 %v1194, %v1190
    %v1574 = vpack.c.bf16 %v1204, %v1200
    %1575 = vmatprep.subr.bf16.mxu0 0
    %1576 = vmatpush1.bf16.msra.mxu0 %v1567
    %1577 = vmatprep.subr.bf16.mxu0 0
    %1578 = vmatpush1.bf16.msra.mxu0 %v1568
    %1579 = vmatprep.subr.bf16.mxu0 0
    %1580 = vmatpush1.bf16.msra.mxu0 %v1569
    %1581 = vmatprep.subr.bf16.mxu0 0
    %1582 = vmatpush1.bf16.msra.mxu0 %v1570
    %1583 = vmatprep.subr.bf16.mxu0 0
    %1584 = vmatpush1.bf16.msra.mxu0 %v1571
    %1585 = vmatprep.subr.bf16.mxu0 0
    %1586 = vmatpush1.bf16.msra.mxu0 %v1572
    %1587 = vmatprep.subr.bf16.mxu0 0
    %1588 = vmatpush1.bf16.msra.mxu0 %v1573
    %1589 = vmatprep.subr.bf16.mxu0 0
    %1590 = vmatpush1.bf16.msra.mxu0 %v1574
    %1591 = vmatprep.subr.bf16.mxu0 0
    %1592 = vmatpush1.bf16.msra.mxu0 0
    %1593 = vmatprep.subr.bf16.mxu0 0
    %1594 = vmatpush1.bf16.msra.mxu0 0
    %1595 = vmatprep.subr.bf16.mxu0 0
    %1596 = vmatpush1.bf16.msra.mxu0 0
    %1597 = vmatprep.subr.bf16.mxu0 0
    %1598 = vmatpush1.bf16.msra.mxu0 0
    %1599 = vmatprep.subr.bf16.mxu0 0
    %1600 = vmatpush1.bf16.msra.mxu0 0
    %1601 = vmatprep.subr.bf16.mxu0 0
    %1602 = vmatpush1.bf16.msra.mxu0 0
    %1603 = vmatprep.subr.bf16.mxu0 0
    %1604 = vmatpush1.bf16.msra.mxu0 0
    %1605 = vmatprep.subr.bf16.mxu0 0
    %1606 = vmatpush1.bf16.msra.mxu0 0
    %1607 = vmatprep.mubr.bf16.mxu0 0
    %1608 = vmatmul.mubr.bf16.gmra.mrb[0].mxu0 %v1559
    %v1609 = vpop.f32.mrb[0].mxu0
    %v1610 = vadd.f32 0.0, %v1609
    %v1611 = vpop.f32.mrb[0].mxu0
    %v1612 = vpop.f32.mrb[0].mxu0
    %v1613 = vadd.f32 0.0, %v1612
    %v1614 = vpop.f32.mrb[0].mxu0
    %1615 = vmatprep.mubr.bf16.mxu0 0
    %1616 = vmatmul.mubr.bf16.gmra.mrb[0].mxu0 %v1560
    %v1617 = vpop.f32.mrb[0].mxu0
    %v1618 = vadd.f32 0.0, %v1617
    %v1619 = vpop.f32.mrb[0].mxu0
    %v1620 = vpop.f32.mrb[0].mxu0
    %v1621 = vadd.f32 0.0, %v1620
    %v1622 = vpop.f32.mrb[0].mxu0
    %1623 = vmatprep.mubr.bf16.mxu0 0
    %1624 = vmatmul.mubr.bf16.gmra.mrb[0].mxu0 %v1561
    %v1625 = vpop.f32.mrb[0].mxu0
    %v1626 = vadd.f32 0.0, %v1625
    %v1627 = vpop.f32.mrb[0].mxu0
    %v1628 = vpop.f32.mrb[0].mxu0
    %v1629 = vadd.f32 0.0, %v1628
    %v1630 = vpop.f32.mrb[0].mxu0
    %1631 = vmatprep.mubr.bf16.mxu0 0
    %1632 = vmatmul.mubr.bf16.gmra.mrb[0].mxu0 %v1562
    %v1633 = vpop.f32.mrb[0].mxu0
    %v1634 = vadd.f32 0.0, %v1633
    %v1635 = vpop.f32.mrb[0].mxu0
    %v1636 = vpop.f32.mrb[0].mxu0
    %v1637 = vadd.f32 0.0, %v1636
    %v1638 = vpop.f32.mrb[0].mxu0
    %1639 = vmatprep.mubr.bf16.mxu0 0
    %1640 = vmatmul.mubr.bf16.gmra.mrb[0].mxu0 %v1563
    %v1641 = vpop.f32.mrb[0].mxu0
    %v1642 = vadd.f32 0.0, %v1641
    %v1643 = vpop.f32.mrb[0].mxu0
    %v1644 = vpop.f32.mrb[0].mxu0
    %v1645 = vadd.f32 0.0, %v1644
    %v1646 = vpop.f32.mrb[0].mxu0
    %1647 = vmatprep.mubr.bf16.mxu0 0
    %1648 = vmatmul.mubr.bf16.gmra.mrb[0].mxu0 %v1564
    %v1649 = vpop.f32.mrb[0].mxu0
    %v1650 = vadd.f32 0.0, %v1649
    %v1651 = vpop.f32.mrb[0].mxu0
    %v1652 = vpop.f32.mrb[0].mxu0
    %v1653 = vadd.f32 0.0, %v1652
    %v1654 = vpop.f32.mrb[0].mxu0
    %1655 = vmatprep.mubr.bf16.mxu0 0
    %1656 = vmatmul.mubr.bf16.gmra.mrb[0].mxu0 %v1565
    %v1657 = vpop.f32.mrb[0].mxu0
    %v1658 = vadd.f32 0.0, %v1657
    %v1659 = vpop.f32.mrb[0].mxu0
    %v1660 = vpop.f32.mrb[0].mxu0
    %v1661 = vadd.f32 0.0, %v1660
    %v1662 = vpop.f32.mrb[0].mxu0
    %1663 = vmatprep.mubr.bf16.mxu0 0
    %1664 = vmatmul.mubr.bf16.gmra.mrb[0].mxu0 %v1566
    %v1665 = vpop.f32.mrb[0].mxu0
    %v1666 = vadd.f32 0.0, %v1665
    %v1667 = vpop.f32.mrb[0].mxu0
    %v1668 = vpop.f32.mrb[0].mxu0
    %v1669 = vadd.f32 0.0, %v1668
    %v1670 = vpop.f32.mrb[0].mxu0
    %1671 = vdwg.mxu0
    %v1672 = vpack.c.bf16 %v1613, %v1610
    %v1673 = vpack.c.bf16 %v1621, %v1618
    %v1674 = vpack.c.bf16 %v1629, %v1626
    %v1675 = vpack.c.bf16 %v1637, %v1634
    %v1676 = vpack.c.bf16 %v1645, %v1642
    %v1677 = vpack.c.bf16 %v1653, %v1650
    %v1678 = vpack.c.bf16 %v1661, %v1658
    %v1679 = vpack.c.bf16 %v1669, %v1666
    %v1680 = vlaneseq
    %v1681 = vshrl.u32 %v1680, 7
    %v1682 = vsub.s32 0, %v1681
    %v1683 = vrot.slane %v993, %v1682
    %v1692 = vunpack.c.l.b16 %v985
    %v1693 = vunpack.c.l.b16 %v986
    %v1694 = vunpack.c.l.b16 %v987
    %v1695 = vunpack.c.l.b16 %v988
    %v1696 = vunpack.c.l.b16 %v989
    %v1697 = vunpack.c.l.b16 %v990
    %v1698 = vunpack.c.l.b16 %v991
    %v1699 = vunpack.c.l.b16 %v992
    %v1700 = vpack.c.b16 %v1693, %v1692
    %v1701 = vpack.c.b16 %v1695, %v1694
    %v1702 = vpack.c.b16 %v1697, %v1696
    %v1703 = vpack.c.b16 %v1699, %v1698
    %v1709 = vsel %vm356, %v1672, 0
    %v1712 = vsel %vm356, %v1673, 0
    %v1715 = vsel %vm356, %v1674, 0
    %v1718 = vsel %vm356, %v1675, 0
    %v1721 = vsel %vm356, %v1676, 0
    %v1724 = vsel %vm356, %v1677, 0
    %v1727 = vsel %vm356, %v1678, 0
    %v1730 = vsel %vm356, %v1679, 0
    %1732 = vmatprep.subr.bf16.mxu0 0
    %1733 = vmatpush1.bf16.msra.mxu0 %v1700
    %1734 = vmatprep.subr.bf16.mxu0 0
    %1735 = vmatpush1.bf16.msra.mxu0 %v1701
    %1736 = vmatprep.subr.bf16.mxu0 0
    %1737 = vmatpush1.bf16.msra.mxu0 %v1702
    %1738 = vmatprep.subr.bf16.mxu0 0
    %1739 = vmatpush1.bf16.msra.mxu0 %v1703
    %1740 = vmatprep.subr.bf16.mxu0 0
    %1741 = vmatpush1.bf16.msra.mxu0 0
    %1742 = vmatprep.subr.bf16.mxu0 0
    %1743 = vmatpush1.bf16.msra.mxu0 0
    %1744 = vmatprep.subr.bf16.mxu0 0
    %1745 = vmatpush1.bf16.msra.mxu0 0
    %1746 = vmatprep.subr.bf16.mxu0 0
    %1747 = vmatpush1.bf16.msra.mxu0 0
    %1748 = vmatprep.subr.bf16.mxu0 0
    %1749 = vmatpush1.bf16.msra.mxu0 0
    %1750 = vmatprep.subr.bf16.mxu0 0
    %1751 = vmatpush1.bf16.msra.mxu0 0
    %1752 = vmatprep.subr.bf16.mxu0 0
    %1753 = vmatpush1.bf16.msra.mxu0 0
    %1754 = vmatprep.subr.bf16.mxu0 0
    %1755 = vmatpush1.bf16.msra.mxu0 0
    %1756 = vmatprep.subr.bf16.mxu0 0
    %1757 = vmatpush1.bf16.msra.mxu0 0
    %1758 = vmatprep.subr.bf16.mxu0 0
    %1759 = vmatpush1.bf16.msra.mxu0 0
    %1760 = vmatprep.subr.bf16.mxu0 0
    %1761 = vmatpush1.bf16.msra.mxu0 0
    %1762 = vmatprep.subr.bf16.mxu0 0
    %1763 = vmatpush1.bf16.msra.mxu0 0
    %1764 = vmatprep.mubr.bf16.mxu0 0
    %1765 = vmatmul.mubr.bf16.gmra.mrb[0].mxu0 %v1709
    %v1766 = vpop.f32.mrb[0].mxu0
    %v1767 = vadd.f32 %v1683, %v1766
    %v1768 = vpop.f32.mrb[0].mxu0
    %v1769 = vpop.f32.mrb[0].mxu0
    %v1770 = vadd.f32 %v1683, %v1769
    %v1771 = vpop.f32.mrb[0].mxu0
    %1772 = vmatprep.mubr.bf16.mxu0 0
    %1773 = vmatmul.mubr.bf16.gmra.mrb[0].mxu0 %v1712
    %v1774 = vpop.f32.mrb[0].mxu0
    %v1775 = vadd.f32 %v1683, %v1774
    %v1776 = vpop.f32.mrb[0].mxu0
    %v1777 = vpop.f32.mrb[0].mxu0
    %v1778 = vadd.f32 %v1683, %v1777
    %v1779 = vpop.f32.mrb[0].mxu0
    %1780 = vmatprep.mubr.bf16.mxu0 0
    %1781 = vmatmul.mubr.bf16.gmra.mrb[0].mxu0 %v1715
    %v1782 = vpop.f32.mrb[0].mxu0
    %v1783 = vadd.f32 %v1683, %v1782
    %v1784 = vpop.f32.mrb[0].mxu0
    %v1785 = vpop.f32.mrb[0].mxu0
    %v1786 = vadd.f32 %v1683, %v1785
    %v1787 = vpop.f32.mrb[0].mxu0
    %1788 = vmatprep.mubr.bf16.mxu0 0
    %1789 = vmatmul.mubr.bf16.gmra.mrb[0].mxu0 %v1718
    %v1790 = vpop.f32.mrb[0].mxu0
    %v1791 = vadd.f32 %v1683, %v1790
    %v1792 = vpop.f32.mrb[0].mxu0
    %v1793 = vpop.f32.mrb[0].mxu0
    %v1794 = vadd.f32 %v1683, %v1793
    %v1795 = vpop.f32.mrb[0].mxu0
    %1796 = vmatprep.mubr.bf16.mxu0 0
    %1797 = vmatmul.mubr.bf16.gmra.mrb[0].mxu0 %v1721
    %v1798 = vpop.f32.mrb[0].mxu0
    %v1799 = vadd.f32 %v1683, %v1798
    %v1800 = vpop.f32.mrb[0].mxu0
    %v1801 = vpop.f32.mrb[0].mxu0
    %v1802 = vadd.f32 %v1683, %v1801
    %v1803 = vpop.f32.mrb[0].mxu0
    %1804 = vmatprep.mubr.bf16.mxu0 0
    %1805 = vmatmul.mubr.bf16.gmra.mrb[0].mxu0 %v1724
    %v1806 = vpop.f32.mrb[0].mxu0
    %v1807 = vadd.f32 %v1683, %v1806
    %v1808 = vpop.f32.mrb[0].mxu0
    %v1809 = vpop.f32.mrb[0].mxu0
    %v1810 = vadd.f32 %v1683, %v1809
    %v1811 = vpop.f32.mrb[0].mxu0
    %1812 = vmatprep.mubr.bf16.mxu0 0
    %1813 = vmatmul.mubr.bf16.gmra.mrb[0].mxu0 %v1727
    %v1814 = vpop.f32.mrb[0].mxu0
    %v1815 = vadd.f32 %v1683, %v1814
    %v1816 = vpop.f32.mrb[0].mxu0
    %v1817 = vpop.f32.mrb[0].mxu0
    %v1818 = vadd.f32 %v1683, %v1817
    %v1819 = vpop.f32.mrb[0].mxu0
    %1820 = vmatprep.mubr.bf16.mxu0 0
    %1821 = vmatmul.mubr.bf16.gmra.mrb[0].mxu0 %v1730
    %v1822 = vpop.f32.mrb[0].mxu0
    %v1823 = vadd.f32 %v1683, %v1822
    %v1824 = vpop.f32.mrb[0].mxu0
    %v1825 = vpop.f32.mrb[0].mxu0
    %v1826 = vadd.f32 %v1683, %v1825
    %v1827 = vpop.f32.mrb[0].mxu0
    %1828 = vdwg.mxu0
    %v1829 = vadd.f32 %v913, %v1767
    %v1830 = vadd.f32 %v916, %v1770
    %v1831 = vadd.f32 %v921, %v1775
    %v1832 = vadd.f32 %v924, %v1778
    %v1833 = vadd.f32 %v929, %v1783
    %v1834 = vadd.f32 %v932, %v1786
    %v1835 = vadd.f32 %v937, %v1791
    %v1836 = vadd.f32 %v940, %v1794
    %v1837 = vadd.f32 %v945, %v1799
    %v1838 = vadd.f32 %v948, %v1802
    %v1839 = vadd.f32 %v953, %v1807
    %v1840 = vadd.f32 %v956, %v1810
    %v1841 = vadd.f32 %v961, %v1815
    %v1842 = vadd.f32 %v964, %v1818
    %v1843 = vadd.f32 %v969, %v1823
    %v1844 = vadd.f32 %v972, %v1826
    %v1845 = vld [vmem:[%s6 + $0x8] sm:$0x1]
    %v1846 = vld [vmem:[%s6 + $0x9] sm:$0x1]
    %v1847 = vsel %vm356, %v1829, 0.0
    %1848 = vadd.xlane.f32.xlu0 %v1847
    %v1849 = vpop.xlane.xlu0 %1848
    %v1850 = vsel %vm356, %v1830, 0.0
    %1851 = vadd.xlane.f32.xlu0 %v1850
    %v1852 = vpop.xlane.xlu0 %1851
    %v1853 = vsel %vm356, %v1831, 0.0
    %1854 = vadd.xlane.f32.xlu0 %v1853
    %v1855 = vpop.xlane.xlu0 %1854
    %v1856 = vsel %vm356, %v1832, 0.0
    %1857 = vadd.xlane.f32.xlu0 %v1856
    %v1858 = vpop.xlane.xlu0 %1857
    %v1859 = vsel %vm356, %v1833, 0.0
    %1860 = vadd.xlane.f32.xlu0 %v1859
    %v1861 = vpop.xlane.xlu0 %1860
    %v1862 = vsel %vm356, %v1834, 0.0
    %1863 = vadd.xlane.f32.xlu0 %v1862
    %v1864 = vpop.xlane.xlu0 %1863
    %v1865 = vsel %vm356, %v1835, 0.0
    %1866 = vadd.xlane.f32.xlu0 %v1865
    %v1867 = vpop.xlane.xlu0 %1866
    %v1868 = vsel %vm356, %v1836, 0.0
    %1869 = vadd.xlane.f32.xlu0 %v1868
    %v1870 = vpop.xlane.xlu0 %1869
    %v1871 = vsel %vm356, %v1837, 0.0
    %1872 = vadd.xlane.f32.xlu0 %v1871
    %v1873 = vpop.xlane.xlu0 %1872
    %v1874 = vsel %vm356, %v1838, 0.0
    %1875 = vadd.xlane.f32.xlu0 %v1874
    %v1876 = vpop.xlane.xlu0 %1875
    %v1877 = vsel %vm356, %v1839, 0.0
    %1878 = vadd.xlane.f32.xlu0 %v1877
    %v1879 = vpop.xlane.xlu0 %1878
    %v1880 = vsel %vm356, %v1840, 0.0
    %1881 = vadd.xlane.f32.xlu0 %v1880
    %v1882 = vpop.xlane.xlu0 %1881
    %v1883 = vsel %vm356, %v1841, 0.0
    %1884 = vadd.xlane.f32.xlu0 %v1883
    %v1885 = vpop.xlane.xlu0 %1884
    %v1886 = vsel %vm356, %v1842, 0.0
    %1887 = vadd.xlane.f32.xlu0 %v1886
    %v1888 = vpop.xlane.xlu0 %1887
    %v1889 = vsel %vm356, %v1843, 0.0
    %1890 = vadd.xlane.f32.xlu0 %v1889
    %v1891 = vpop.xlane.xlu0 %1890
    %v1892 = vsel %vm356, %v1844, 0.0
    %1893 = vadd.xlane.f32.xlu0 %v1892
    %v1894 = vpop.xlane.xlu0 %1893
    %v1895 = vmul.f32 %v1849, 0.015625
    %v1896 = vmul.f32 %v1852, 0.015625
    %v1897 = vmul.f32 %v1855, 0.015625
    %v1898 = vmul.f32 %v1858, 0.015625
    %v1899 = vmul.f32 %v1861, 0.015625
    %v1900 = vmul.f32 %v1864, 0.015625
    %v1901 = vmul.f32 %v1867, 0.015625
    %v1902 = vmul.f32 %v1870, 0.015625
    %v1903 = vmul.f32 %v1873, 0.015625
    %v1904 = vmul.f32 %v1876, 0.015625
    %v1905 = vmul.f32 %v1879, 0.015625
    %v1906 = vmul.f32 %v1882, 0.015625
    %v1907 = vmul.f32 %v1885, 0.015625
    %v1908 = vmul.f32 %v1888, 0.015625
    %v1909 = vmul.f32 %v1891, 0.015625
    %v1910 = vmul.f32 %v1894, 0.015625
    %v1911 = vmul.f32 %v1829, %v1829
    %v1912 = vmul.f32 %v1830, %v1830
    %v1913 = vmul.f32 %v1831, %v1831
    %v1914 = vmul.f32 %v1832, %v1832
    %v1915 = vmul.f32 %v1833, %v1833
    %v1916 = vmul.f32 %v1834, %v1834
    %v1917 = vmul.f32 %v1835, %v1835
    %v1918 = vmul.f32 %v1836, %v1836
    %v1919 = vmul.f32 %v1837, %v1837
    %v1920 = vmul.f32 %v1838, %v1838
    %v1921 = vmul.f32 %v1839, %v1839
    %v1922 = vmul.f32 %v1840, %v1840
    %v1923 = vmul.f32 %v1841, %v1841
    %v1924 = vmul.f32 %v1842, %v1842
    %v1925 = vmul.f32 %v1843, %v1843
    %v1926 = vmul.f32 %v1844, %v1844
    %v1927 = vsel %vm356, %v1911, 0.0
    %1928 = vadd.xlane.f32.xlu0 %v1927
    %v1929 = vpop.xlane.xlu0 %1928
    %v1930 = vsel %vm356, %v1912, 0.0
    %1931 = vadd.xlane.f32.xlu0 %v1930
    %v1932 = vpop.xlane.xlu0 %1931
    %v1933 = vsel %vm356, %v1913, 0.0
    %1934 = vadd.xlane.f32.xlu0 %v1933
    %v1935 = vpop.xlane.xlu0 %1934
    %v1936 = vsel %vm356, %v1914, 0.0
    %1937 = vadd.xlane.f32.xlu0 %v1936
    %v1938 = vpop.xlane.xlu0 %1937
    %v1939 = vsel %vm356, %v1915, 0.0
    %1940 = vadd.xlane.f32.xlu0 %v1939
    %v1941 = vpop.xlane.xlu0 %1940
    %v1942 = vsel %vm356, %v1916, 0.0
    %1943 = vadd.xlane.f32.xlu0 %v1942
    %v1944 = vpop.xlane.xlu0 %1943
    %v1945 = vsel %vm356, %v1917, 0.0
    %1946 = vadd.xlane.f32.xlu0 %v1945
    %v1947 = vpop.xlane.xlu0 %1946
    %v1948 = vsel %vm356, %v1918, 0.0
    %1949 = vadd.xlane.f32.xlu0 %v1948
    %v1950 = vpop.xlane.xlu0 %1949
    %v1951 = vsel %vm356, %v1919, 0.0
    %1952 = vadd.xlane.f32.xlu0 %v1951
    %v1953 = vpop.xlane.xlu0 %1952
    %v1954 = vsel %vm356, %v1920, 0.0
    %1955 = vadd.xlane.f32.xlu0 %v1954
    %v1956 = vpop.xlane.xlu0 %1955
    %v1957 = vsel %vm356, %v1921, 0.0
    %1958 = vadd.xlane.f32.xlu0 %v1957
    %v1959 = vpop.xlane.xlu0 %1958
    %v1960 = vsel %vm356, %v1922, 0.0
    %1961 = vadd.xlane.f32.xlu0 %v1960
    %v1962 = vpop.xlane.xlu0 %1961
    %v1963 = vsel %vm356, %v1923, 0.0
    %1964 = vadd.xlane.f32.xlu0 %v1963
    %v1965 = vpop.xlane.xlu0 %1964
    %v1966 = vsel %vm356, %v1924, 0.0
    %1967 = vadd.xlane.f32.xlu0 %v1966
    %v1968 = vpop.xlane.xlu0 %1967
    %v1969 = vsel %vm356, %v1925, 0.0
    %1970 = vadd.xlane.f32.xlu0 %v1969
    %v1971 = vpop.xlane.xlu0 %1970
    %v1972 = vsel %vm356, %v1926, 0.0
    %1973 = vadd.xlane.f32.xlu0 %v1972
    %v1974 = vpop.xlane.xlu0 %1973
    %v1975 = vmul.f32 %v1929, 0.015625
    %v1976 = vmul.f32 %v1932, 0.015625
    %v1977 = vmul.f32 %v1935, 0.015625
    %v1978 = vmul.f32 %v1938, 0.015625
    %v1979 = vmul.f32 %v1941, 0.015625
    %v1980 = vmul.f32 %v1944, 0.015625
    %v1981 = vmul.f32 %v1947, 0.015625
    %v1982 = vmul.f32 %v1950, 0.015625
    %v1983 = vmul.f32 %v1953, 0.015625
    %v1984 = vmul.f32 %v1956, 0.015625
    %v1985 = vmul.f32 %v1959, 0.015625
    %v1986 = vmul.f32 %v1962, 0.015625
    %v1987 = vmul.f32 %v1965, 0.015625
    %v1988 = vmul.f32 %v1968, 0.015625
    %v1989 = vmul.f32 %v1971, 0.015625
    %v1990 = vmul.f32 %v1974, 0.015625
    %v1991 = vmul.f32 %v1895, %v1895
    %v1992 = vmul.f32 %v1896, %v1896
    %v1993 = vmul.f32 %v1897, %v1897
    %v1994 = vmul.f32 %v1898, %v1898
    %v1995 = vmul.f32 %v1899, %v1899
    %v1996 = vmul.f32 %v1900, %v1900
    %v1997 = vmul.f32 %v1901, %v1901
    %v1998 = vmul.f32 %v1902, %v1902
    %v1999 = vmul.f32 %v1903, %v1903
    %v2000 = vmul.f32 %v1904, %v1904
    %v2001 = vmul.f32 %v1905, %v1905
    %v2002 = vmul.f32 %v1906, %v1906
    %v2003 = vmul.f32 %v1907, %v1907
    %v2004 = vmul.f32 %v1908, %v1908
    %v2005 = vmul.f32 %v1909, %v1909
    %v2006 = vmul.f32 %v1910, %v1910
    %v2007 = vsub.f32 %v1975, %v1991
    %v2008 = vsub.f32 %v1976, %v1992
    %v2009 = vsub.f32 %v1977, %v1993
    %v2010 = vsub.f32 %v1978, %v1994
    %v2011 = vsub.f32 %v1979, %v1995
    %v2012 = vsub.f32 %v1980, %v1996
    %v2013 = vsub.f32 %v1981, %v1997
    %v2014 = vsub.f32 %v1982, %v1998
    %v2015 = vsub.f32 %v1983, %v1999
    %v2016 = vsub.f32 %v1984, %v2000
    %v2017 = vsub.f32 %v1985, %v2001
    %v2018 = vsub.f32 %v1986, %v2002
    %v2019 = vsub.f32 %v1987, %v2003
    %v2020 = vsub.f32 %v1988, %v2004
    %v2021 = vsub.f32 %v1989, %v2005
    %v2022 = vsub.f32 %v1990, %v2006
    %v2023 = vsub.f32 %v1829, %v1895
    %v2024 = vsub.f32 %v1830, %v1896
    %v2025 = vsub.f32 %v1831, %v1897
    %v2026 = vsub.f32 %v1832, %v1898
    %v2027 = vsub.f32 %v1833, %v1899
    %v2028 = vsub.f32 %v1834, %v1900
    %v2029 = vsub.f32 %v1835, %v1901
    %v2030 = vsub.f32 %v1836, %v1902
    %v2031 = vsub.f32 %v1837, %v1903
    %v2032 = vsub.f32 %v1838, %v1904
    %v2033 = vsub.f32 %v1839, %v1905
    %v2034 = vsub.f32 %v1840, %v1906
    %v2035 = vsub.f32 %v1841, %v1907
    %v2036 = vsub.f32 %v1842, %v1908
    %v2037 = vsub.f32 %v1843, %v1909
    %v2038 = vsub.f32 %v1844, %v1910
    %v2039 = vadd.f32 %v2007, 1e-05
    %v2040 = vadd.f32 %v2008, 1e-05
    %v2041 = vadd.f32 %v2009, 1e-05
    %v2042 = vadd.f32 %v2010, 1e-05
    %v2043 = vadd.f32 %v2011, 1e-05
    %v2044 = vadd.f32 %v2012, 1e-05
    %v2045 = vadd.f32 %v2013, 1e-05
    %v2046 = vadd.f32 %v2014, 1e-05
    %v2047 = vadd.f32 %v2015, 1e-05
    %v2048 = vadd.f32 %v2016, 1e-05
    %v2049 = vadd.f32 %v2017, 1e-05
    %v2050 = vadd.f32 %v2018, 1e-05
    %v2051 = vadd.f32 %v2019, 1e-05
    %v2052 = vadd.f32 %v2020, 1e-05
    %v2053 = vadd.f32 %v2021, 1e-05
    %v2054 = vadd.f32 %v2022, 1e-05
    %v2055 = vrsqrt.pop %v2039
    %v2056 = vrsqrt.pop %v2040
    %v2057 = vrsqrt.pop %v2041
    %v2058 = vrsqrt.pop %v2042
    %v2059 = vrsqrt.pop %v2043
    %v2060 = vrsqrt.pop %v2044
    %v2061 = vrsqrt.pop %v2045
    %v2062 = vrsqrt.pop %v2046
    %v2063 = vrsqrt.pop %v2047
    %v2064 = vrsqrt.pop %v2048
    %v2065 = vrsqrt.pop %v2049
    %v2066 = vrsqrt.pop %v2050
    %v2067 = vrsqrt.pop %v2051
    %v2068 = vrsqrt.pop %v2052
    %v2069 = vrsqrt.pop %v2053
    %v2070 = vrsqrt.pop %v2054
    %v2071 = vmul.f32 %v2023, %v2055
    %v2072 = vmul.f32 %v2024, %v2056
    %v2073 = vmul.f32 %v2025, %v2057
    %v2074 = vmul.f32 %v2026, %v2058
    %v2075 = vmul.f32 %v2027, %v2059
    %v2076 = vmul.f32 %v2028, %v2060
    %v2077 = vmul.f32 %v2029, %v2061
    %v2078 = vmul.f32 %v2030, %v2062
    %v2079 = vmul.f32 %v2031, %v2063
    %v2080 = vmul.f32 %v2032, %v2064
    %v2081 = vmul.f32 %v2033, %v2065
    %v2082 = vmul.f32 %v2034, %v2066
    %v2083 = vmul.f32 %v2035, %v2067
    %v2084 = vmul.f32 %v2036, %v2068
    %v2085 = vmul.f32 %v2037, %v2069
    %v2086 = vmul.f32 %v2038, %v2070
    %v2087 = vlaneseq
    %v2088 = vshrl.u32 %v2087, 7
    %v2089 = vsub.s32 0, %v2088
    %v2090 = vrot.slane %v1845, %v2089
    %v2091 = vmul.f32 %v2071, %v2090
    %v2092 = vmul.f32 %v2072, %v2090
    %v2093 = vmul.f32 %v2073, %v2090
    %v2094 = vmul.f32 %v2074, %v2090
    %v2095 = vmul.f32 %v2075, %v2090
    %v2096 = vmul.f32 %v2076, %v2090
    %v2097 = vmul.f32 %v2077, %v2090
    %v2098 = vmul.f32 %v2078, %v2090
    %v2099 = vmul.f32 %v2079, %v2090
    %v2100 = vmul.f32 %v2080, %v2090
    %v2101 = vmul.f32 %v2081, %v2090
    %v2102 = vmul.f32 %v2082, %v2090
    %v2103 = vmul.f32 %v2083, %v2090
    %v2104 = vmul.f32 %v2084, %v2090
    %v2105 = vmul.f32 %v2085, %v2090
    %v2106 = vmul.f32 %v2086, %v2090
    %v2107 = vlaneseq
    %v2108 = vshrl.u32 %v2107, 7
    %v2109 = vsub.s32 0, %v2108
    %v2110 = vrot.slane %v1846, %v2109
    %v2111 = vadd.f32 %v2091, %v2110
    %v2112 = vadd.f32 %v2092, %v2110
    %v2113 = vadd.f32 %v2093, %v2110
    %v2114 = vadd.f32 %v2094, %v2110
    %v2115 = vadd.f32 %v2095, %v2110
    %v2116 = vadd.f32 %v2096, %v2110
    %v2117 = vadd.f32 %v2097, %v2110
    %v2118 = vadd.f32 %v2098, %v2110
    %v2119 = vadd.f32 %v2099, %v2110
    %v2120 = vadd.f32 %v2100, %v2110
    %v2121 = vadd.f32 %v2101, %v2110
    %v2122 = vadd.f32 %v2102, %v2110
    %v2123 = vadd.f32 %v2103, %v2110
    %v2124 = vadd.f32 %v2104, %v2110
    %v2125 = vadd.f32 %v2105, %v2110
    %v2126 = vadd.f32 %v2106, %v2110
    %s2127 = scalar_lea.vmem [#allocation5], 64
    %v2128 = vld [vmem:[%s2127] sm:$0xff]
    %v2129 = vld [vmem:[%s2127 + $0x8] sm:$0xff]
    %v2130 = vld [vmem:[%s2127 + $0x10] sm:$0xff]
    %v2131 = vld [vmem:[%s2127 + $0x18] sm:$0xff]
    %v2132 = vld [vmem:[%s2127 + $0x20] sm:$0xff]
    %v2133 = vld [vmem:[%s2127 + $0x28] sm:$0xff]
    %v2134 = vld [vmem:[%s2127 + $0x30] sm:$0xff]
    %v2135 = vld [vmem:[%s2127 + $0x38] sm:$0xff]
    %s2136 = scalar_lea.vmem %s5, 1
    %v2137 = vld [vmem:[%s2136] ss:$2 sm:$0x3]
    %s2138 = scalar_lea.vmem [#allocation2], 96
    %v2139 = vld [vmem:[%s2138] sm:$0xf]
    %v2140 = vld [vmem:[%s2138 + $0x4] sm:$0xf]
    %v2141 = vld [vmem:[%s2138 + $0x8] sm:$0xf]
    %v2142 = vld [vmem:[%s2138 + $0xc] sm:$0xf]
    %v2143 = vld [vmem:[%s2138 + $0x10] sm:$0xf]
    %v2144 = vld [vmem:[%s2138 + $0x14] sm:$0xf]
    %v2145 = vld [vmem:[%s2138 + $0x18] sm:$0xf]
    %v2146 = vld [vmem:[%s2138 + $0x1c] sm:$0xf]
    %v2147 = vld [vmem:[%s6 + $0xa] sm:$0x1]
    %s2148 = scalar_lea.vmem %s2, 128
    %v2149 = vld [vmem:[%s2148] sm:$0xff]
    %v2150 = vld [vmem:[%s2148 + $0x8] sm:$0xff]
    %v2151 = vld [vmem:[%s2148 + $0x10] sm:$0xff]
    %v2152 = vld [vmem:[%s2148 + $0x18] sm:$0xff]
    %v2153 = vld [vmem:[%s2148 + $0x20] sm:$0xff]
    %v2154 = vld [vmem:[%s2148 + $0x28] sm:$0xff]
    %v2155 = vld [vmem:[%s2148 + $0x30] sm:$0xff]
    %v2156 = vld [vmem:[%s2148 + $0x38] sm:$0xff]
    %v2157 = vld [vmem:[%s2148 + $0x40] sm:$0xff]
    %v2158 = vld [vmem:[%s2148 + $0x48] sm:$0xff]
    %v2159 = vld [vmem:[%s2148 + $0x50] sm:$0xff]
    %v2160 = vld [vmem:[%s2148 + $0x58] sm:$0xff]
    %v2161 = vld [vmem:[%s2148 + $0x60] sm:$0xff]
    %v2162 = vld [vmem:[%s2148 + $0x68] sm:$0xff]
    %v2163 = vld [vmem:[%s2148 + $0x70] sm:$0xff]
    %v2164 = vld [vmem:[%s2148 + $0x78] sm:$0xff]
    %v2165 = vpack.c.bf16 %v2112, %v2111
    %v2166 = vpack.c.bf16 %v2114, %v2113
    %v2167 = vpack.c.bf16 %v2116, %v2115
    %v2168 = vpack.c.bf16 %v2118, %v2117
    %v2169 = vpack.c.bf16 %v2120, %v2119
    %v2170 = vpack.c.bf16 %v2122, %v2121
    %v2171 = vpack.c.bf16 %v2124, %v2123
    %v2172 = vpack.c.bf16 %v2126, %v2125
    %v2174 = vlaneseq
    %v2175 = vshrl.u32 %v2174, 7
    %v2176 = vsub.s32 0, %v2175
    %v2177 = vrot.slane %v2137, %v2176
    %v2178 = vlaneseq
    %v2179 = vshrl.u32 %v2178, 7
    %v2180 = vsub.s32 1, %v2179
    %v2181 = vrot.slane %v2137, %v2180
    %v2192 = vunpack.c.l.b16 %v2128
    %v2193 = vunpack.c.h.b16 %v2128
    %v2194 = vunpack.c.l.b16 %v2129
    %v2195 = vunpack.c.h.b16 %v2129
    %v2196 = vunpack.c.l.b16 %v2130
    %v2197 = vunpack.c.h.b16 %v2130
    %v2198 = vunpack.c.l.b16 %v2131
    %v2199 = vunpack.c.h.b16 %v2131
    %v2200 = vunpack.c.l.b16 %v2132
    %v2201 = vunpack.c.h.b16 %v2132
    %v2202 = vunpack.c.l.b16 %v2133
    %v2203 = vunpack.c.h.b16 %v2133
    %v2204 = vunpack.c.l.b16 %v2134
    %v2205 = vunpack.c.h.b16 %v2134
    %v2206 = vunpack.c.l.b16 %v2135
    %v2207 = vunpack.c.h.b16 %v2135
    %v2208 = vpack.c.b16 %v2194, %v2192
    %v2209 = vpack.c.b16 %v2195, %v2193
    %v2210 = vpack.c.b16 %v2198, %v2196
    %v2211 = vpack.c.b16 %v2199, %v2197
    %v2212 = vpack.c.b16 %v2202, %v2200
    %v2213 = vpack.c.b16 %v2203, %v2201
    %v2214 = vpack.c.b16 %v2206, %v2204
    %v2215 = vpack.c.b16 %v2207, %v2205
    %v2225 = vsel %vm356, %v2165, 0
    %v2228 = vsel %vm356, %v2166, 0
    %v2231 = vsel %vm356, %v2167, 0
    %v2234 = vsel %vm356, %v2168, 0
    %v2237 = vsel %vm356, %v2169, 0
    %v2240 = vsel %vm356, %v2170, 0
    %v2243 = vsel %vm356, %v2171, 0
    %v2246 = vsel %vm356, %v2172, 0
    %2248 = vmatprep.subr.bf16.mxu0 %v2209
    %2249 = vmatpush1.bf16.msra.mxu0 %v2208
    %2250 = vmatprep.subr.bf16.mxu0 %v2211
    %2251 = vmatpush1.bf16.msra.mxu0 %v2210
    %2252 = vmatprep.subr.bf16.mxu0 %v2213
    %2253 = vmatpush1.bf16.msra.mxu0 %v2212
    %2254 = vmatprep.subr.bf16.mxu0 %v2215
    %2255 = vmatpush1.bf16.msra.mxu0 %v2214
    %2256 = vmatprep.subr.bf16.mxu0 0
    %2257 = vmatpush1.bf16.msra.mxu0 0
    %2258 = vmatprep.subr.bf16.mxu0 0
    %2259 = vmatpush1.bf16.msra.mxu0 0
    %2260 = vmatprep.subr.bf16.mxu0 0
    %2261 = vmatpush1.bf16.msra.mxu0 0
    %2262 = vmatprep.subr.bf16.mxu0 0
    %2263 = vmatpush1.bf16.msra.mxu0 0
    %2264 = vmatprep.subr.bf16.mxu0 0
    %2265 = vmatpush1.bf16.msra.mxu0 0
    %2266 = vmatprep.subr.bf16.mxu0 0
    %2267 = vmatpush1.bf16.msra.mxu0 0
    %2268 = vmatprep.subr.bf16.mxu0 0
    %2269 = vmatpush1.bf16.msra.mxu0 0
    %2270 = vmatprep.subr.bf16.mxu0 0
    %2271 = vmatpush1.bf16.msra.mxu0 0
    %2272 = vmatprep.subr.bf16.mxu0 0
    %2273 = vmatpush1.bf16.msra.mxu0 0
    %2274 = vmatprep.subr.bf16.mxu0 0
    %2275 = vmatpush1.bf16.msra.mxu0 0
    %2276 = vmatprep.subr.bf16.mxu0 0
    %2277 = vmatpush1.bf16.msra.mxu0 0
    %2278 = vmatprep.subr.bf16.mxu0 0
    %2279 = vmatpush1.bf16.msra.mxu0 0
    %2280 = vmatprep.mubr.bf16.mxu0 0
    %2281 = vmatmul.mubr.bf16.gmra.mrb[0].mxu0 %v2225
    %v2282 = vpop.f32.mrb[0].mxu0
    %v2283 = vadd.f32 %v2177, %v2282
    %v2284 = vpop.f32.mrb[0].mxu0
    %v2285 = vadd.f32 %v2181, %v2284
    %v2286 = vpop.f32.mrb[0].mxu0
    %v2287 = vadd.f32 %v2177, %v2286
    %v2288 = vpop.f32.mrb[0].mxu0
    %v2289 = vadd.f32 %v2181, %v2288
    %2290 = vmatprep.mubr.bf16.mxu0 0
    %2291 = vmatmul.mubr.bf16.gmra.mrb[0].mxu0 %v2228
    %v2292 = vpop.f32.mrb[0].mxu0
    %v2293 = vadd.f32 %v2177, %v2292
    %v2294 = vpop.f32.mrb[0].mxu0
    %v2295 = vadd.f32 %v2181, %v2294
    %v2296 = vpop.f32.mrb[0].mxu0
    %v2297 = vadd.f32 %v2177, %v2296
    %v2298 = vpop.f32.mrb[0].mxu0
    %v2299 = vadd.f32 %v2181, %v2298
    %2300 = vmatprep.mubr.bf16.mxu0 0
    %2301 = vmatmul.mubr.bf16.gmra.mrb[0].mxu0 %v2231
    %v2302 = vpop.f32.mrb[0].mxu0
    %v2303 = vadd.f32 %v2177, %v2302
    %v2304 = vpop.f32.mrb[0].mxu0
    %v2305 = vadd.f32 %v2181, %v2304
    %v2306 = vpop.f32.mrb[0].mxu0
    %v2307 = vadd.f32 %v2177, %v2306
    %v2308 = vpop.f32.mrb[0].mxu0
    %v2309 = vadd.f32 %v2181, %v2308
    %2310 = vmatprep.mubr.bf16.mxu0 0
    %2311 = vmatmul.mubr.bf16.gmra.mrb[0].mxu0 %v2234
    %v2312 = vpop.f32.mrb[0].mxu0
    %v2313 = vadd.f32 %v2177, %v2312
    %v2314 = vpop.f32.mrb[0].mxu0
    %v2315 = vadd.f32 %v2181, %v2314
    %v2316 = vpop.f32.mrb[0].mxu0
    %v2317 = vadd.f32 %v2177, %v2316
    %v2318 = vpop.f32.mrb[0].mxu0
    %v2319 = vadd.f32 %v2181, %v2318
    %2320 = vmatprep.mubr.bf16.mxu0 0
    %2321 = vmatmul.mubr.bf16.gmra.mrb[0].mxu0 %v2237
    %v2322 = vpop.f32.mrb[0].mxu0
    %v2323 = vadd.f32 %v2177, %v2322
    %v2324 = vpop.f32.mrb[0].mxu0
    %v2325 = vadd.f32 %v2181, %v2324
    %v2326 = vpop.f32.mrb[0].mxu0
    %v2327 = vadd.f32 %v2177, %v2326
    %v2328 = vpop.f32.mrb[0].mxu0
    %v2329 = vadd.f32 %v2181, %v2328
    %2330 = vmatprep.mubr.bf16.mxu0 0
    %2331 = vmatmul.mubr.bf16.gmra.mrb[0].mxu0 %v2240
    %v2332 = vpop.f32.mrb[0].mxu0
    %v2333 = vadd.f32 %v2177, %v2332
    %v2334 = vpop.f32.mrb[0].mxu0
    %v2335 = vadd.f32 %v2181, %v2334
    %v2336 = vpop.f32.mrb[0].mxu0
    %v2337 = vadd.f32 %v2177, %v2336
    %v2338 = vpop.f32.mrb[0].mxu0
    %v2339 = vadd.f32 %v2181, %v2338
    %2340 = vmatprep.mubr.bf16.mxu0 0
    %2341 = vmatmul.mubr.bf16.gmra.mrb[0].mxu0 %v2243
    %v2342 = vpop.f32.mrb[0].mxu0
    %v2343 = vadd.f32 %v2177, %v2342
    %v2344 = vpop.f32.mrb[0].mxu0
    %v2345 = vadd.f32 %v2181, %v2344
    %v2346 = vpop.f32.mrb[0].mxu0
    %v2347 = vadd.f32 %v2177, %v2346
    %v2348 = vpop.f32.mrb[0].mxu0
    %v2349 = vadd.f32 %v2181, %v2348
    %2350 = vmatprep.mubr.bf16.mxu0 0
    %2351 = vmatmul.mubr.bf16.gmra.mrb[0].mxu0 %v2246
    %v2352 = vpop.f32.mrb[0].mxu0
    %v2353 = vadd.f32 %v2177, %v2352
    %v2354 = vpop.f32.mrb[0].mxu0
    %v2355 = vadd.f32 %v2181, %v2354
    %v2356 = vpop.f32.mrb[0].mxu0
    %v2357 = vadd.f32 %v2177, %v2356
    %v2358 = vpop.f32.mrb[0].mxu0
    %v2359 = vadd.f32 %v2181, %v2358
    %2360 = vdwg.mxu0
    %v2361 = vpack.c.bf16 %v2287, %v2283
    %v2362 = vpack.c.bf16 %v2297, %v2293
    %v2363 = vpack.c.bf16 %v2307, %v2303
    %v2364 = vpack.c.bf16 %v2317, %v2313
    %v2365 = vpack.c.bf16 %v2327, %v2323
    %v2366 = vpack.c.bf16 %v2337, %v2333
    %v2367 = vpack.c.bf16 %v2347, %v2343
    %v2368 = vpack.c.bf16 %v2357, %v2353
    %2377 = vrot.lane.b32.xlu0 %v2361, 64
    %v2378 = vpop.permute.xlu0 %2377
    %2379 = vrot.lane.b32.xlu0 %v2362, 64
    %v2380 = vpop.permute.xlu0 %2379
    %2381 = vrot.lane.b32.xlu0 %v2363, 64
    %v2382 = vpop.permute.xlu0 %2381
    %2383 = vrot.lane.b32.xlu0 %v2364, 64
    %v2384 = vpop.permute.xlu0 %2383
    %2385 = vrot.lane.b32.xlu0 %v2365, 64
    %v2386 = vpop.permute.xlu0 %2385
    %2387 = vrot.lane.b32.xlu0 %v2366, 64
    %v2388 = vpop.permute.xlu0 %2387
    %2389 = vrot.lane.b32.xlu0 %v2367, 64
    %v2390 = vpop.permute.xlu0 %2389
    %2391 = vrot.lane.b32.xlu0 %v2368, 64
    %v2392 = vpop.permute.xlu0 %2391
    %v2394 = vsel %vm356, %v2361, 0
    %v2397 = vsel %vm356, %v2362, 0
    %v2400 = vsel %vm356, %v2363, 0
    %v2403 = vsel %vm356, %v2364, 0
    %v2406 = vsel %vm356, %v2365, 0
    %v2409 = vsel %vm356, %v2366, 0
    %v2412 = vsel %vm356, %v2367, 0
    %v2415 = vsel %vm356, %v2368, 0
    %v2418 = vsel %vm356, %v2378, 0
    %v2421 = vsel %vm356, %v2380, 0
    %v2424 = vsel %vm356, %v2382, 0
    %v2427 = vsel %vm356, %v2384, 0
    %v2430 = vsel %vm356, %v2386, 0
    %v2433 = vsel %vm356, %v2388, 0
    %v2436 = vsel %vm356, %v2390, 0
    %v2439 = vsel %vm356, %v2392, 0
    %2441 = vmatprep.subr.bf16.mxu0 0
    %2442 = vmatpush1.bf16.xpose.msra.mxu0 %v2418
    %2443 = vmatprep.subr.bf16.mxu0 0
    %2444 = vmatpush1.bf16.xpose.msra.mxu0 %v2421
    %2445 = vmatprep.subr.bf16.mxu0 0
    %2446 = vmatpush1.bf16.xpose.msra.mxu0 %v2424
    %2447 = vmatprep.subr.bf16.mxu0 0
    %2448 = vmatpush1.bf16.xpose.msra.mxu0 %v2427
    %2449 = vmatprep.subr.bf16.mxu0 0
    %2450 = vmatpush1.bf16.xpose.msra.mxu0 %v2430
    %2451 = vmatprep.subr.bf16.mxu0 0
    %2452 = vmatpush1.bf16.xpose.msra.mxu0 %v2433
    %2453 = vmatprep.subr.bf16.mxu0 0
    %2454 = vmatpush1.bf16.xpose.msra.mxu0 %v2436
    %2455 = vmatprep.subr.bf16.mxu0 0
    %2456 = vmatpush1.bf16.xpose.msra.mxu0 %v2439
    %2457 = vmatprep.subr.bf16.mxu0 0
    %2458 = vmatpush1.bf16.xpose.msra.mxu0 0
    %2459 = vmatprep.subr.bf16.mxu0 0
    %2460 = vmatpush1.bf16.xpose.msra.mxu0 0
    %2461 = vmatprep.subr.bf16.mxu0 0
    %2462 = vmatpush1.bf16.xpose.msra.mxu0 0
    %2463 = vmatprep.subr.bf16.mxu0 0
    %2464 = vmatpush1.bf16.xpose.msra.mxu0 0
    %2465 = vmatprep.subr.bf16.mxu0 0
    %2466 = vmatpush1.bf16.xpose.msra.mxu0 0
    %2467 = vmatprep.subr.bf16.mxu0 0
    %2468 = vmatpush1.bf16.xpose.msra.mxu0 0
    %2469 = vmatprep.subr.bf16.mxu0 0
    %2470 = vmatpush1.bf16.xpose.msra.mxu0 0
    %2471 = vmatprep.subr.bf16.mxu0 0
    %2472 = vmatpush1.bf16.xpose.msra.mxu0 0
    %2473 = vmatprep.mubr.bf16.mxu0 0
    %2474 = vmatmul.mubr.bf16.gmra.mrb[0].mxu0 %v2394
    %v2475 = vpop.f32.mrb[0].mxu0
    %v2476 = vadd.f32 0.0, %v2475
    %v2477 = vpop.f32.mrb[0].mxu0
    %v2478 = vpop.f32.mrb[0].mxu0
    %v2479 = vadd.f32 0.0, %v2478
    %v2480 = vpop.f32.mrb[0].mxu0
    %2481 = vmatprep.mubr.bf16.mxu0 0
    %2482 = vmatmul.mubr.bf16.gmra.mrb[0].mxu0 %v2397
    %v2483 = vpop.f32.mrb[0].mxu0
    %v2484 = vadd.f32 0.0, %v2483
    %v2485 = vpop.f32.mrb[0].mxu0
    %v2486 = vpop.f32.mrb[0].mxu0
    %v2487 = vadd.f32 0.0, %v2486
    %v2488 = vpop.f32.mrb[0].mxu0
    %2489 = vmatprep.mubr.bf16.mxu0 0
    %2490 = vmatmul.mubr.bf16.gmra.mrb[0].mxu0 %v2400
    %v2491 = vpop.f32.mrb[0].mxu0
    %v2492 = vadd.f32 0.0, %v2491
    %v2493 = vpop.f32.mrb[0].mxu0
    %v2494 = vpop.f32.mrb[0].mxu0
    %v2495 = vadd.f32 0.0, %v2494
    %v2496 = vpop.f32.mrb[0].mxu0
    %2497 = vmatprep.mubr.bf16.mxu0 0
    %2498 = vmatmul.mubr.bf16.gmra.mrb[0].mxu0 %v2403
    %v2499 = vpop.f32.mrb[0].mxu0
    %v2500 = vadd.f32 0.0, %v2499
    %v2501 = vpop.f32.mrb[0].mxu0
    %v2502 = vpop.f32.mrb[0].mxu0
    %v2503 = vadd.f32 0.0, %v2502
    %v2504 = vpop.f32.mrb[0].mxu0
    %2505 = vmatprep.mubr.bf16.mxu0 0
    %2506 = vmatmul.mubr.bf16.gmra.mrb[0].mxu0 %v2406
    %v2507 = vpop.f32.mrb[0].mxu0
    %v2508 = vadd.f32 0.0, %v2507
    %v2509 = vpop.f32.mrb[0].mxu0
    %v2510 = vpop.f32.mrb[0].mxu0
    %v2511 = vadd.f32 0.0, %v2510
    %v2512 = vpop.f32.mrb[0].mxu0
    %2513 = vmatprep.mubr.bf16.mxu0 0
    %2514 = vmatmul.mubr.bf16.gmra.mrb[0].mxu0 %v2409
    %v2515 = vpop.f32.mrb[0].mxu0
    %v2516 = vadd.f32 0.0, %v2515
    %v2517 = vpop.f32.mrb[0].mxu0
    %v2518 = vpop.f32.mrb[0].mxu0
    %v2519 = vadd.f32 0.0, %v2518
    %v2520 = vpop.f32.mrb[0].mxu0
    %2521 = vmatprep.mubr.bf16.mxu0 0
    %2522 = vmatmul.mubr.bf16.gmra.mrb[0].mxu0 %v2412
    %v2523 = vpop.f32.mrb[0].mxu0
    %v2524 = vadd.f32 0.0, %v2523
    %v2525 = vpop.f32.mrb[0].mxu0
    %v2526 = vpop.f32.mrb[0].mxu0
    %v2527 = vadd.f32 0.0, %v2526
    %v2528 = vpop.f32.mrb[0].mxu0
    %2529 = vmatprep.mubr.bf16.mxu0 0
    %2530 = vmatmul.mubr.bf16.gmra.mrb[0].mxu0 %v2415
    %v2531 = vpop.f32.mrb[0].mxu0
    %v2532 = vadd.f32 0.0, %v2531
    %v2533 = vpop.f32.mrb[0].mxu0
    %v2534 = vpop.f32.mrb[0].mxu0
    %v2535 = vadd.f32 0.0, %v2534
    %v2536 = vpop.f32.mrb[0].mxu0
    %2537 = vdwg.mxu0
    %v2538 = vmul.f32 %v2476, 0.125
    %v2539 = vmul.f32 %v2479, 0.125
    %v2540 = vmul.f32 %v2484, 0.125
    %v2541 = vmul.f32 %v2487, 0.125
    %v2542 = vmul.f32 %v2492, 0.125
    %v2543 = vmul.f32 %v2495, 0.125
    %v2544 = vmul.f32 %v2500, 0.125
    %v2545 = vmul.f32 %v2503, 0.125
    %v2546 = vmul.f32 %v2508, 0.125
    %v2547 = vmul.f32 %v2511, 0.125
    %v2548 = vmul.f32 %v2516, 0.125
    %v2549 = vmul.f32 %v2519, 0.125
    %v2550 = vmul.f32 %v2524, 0.125
    %v2551 = vmul.f32 %v2527, 0.125
    %v2552 = vmul.f32 %v2532, 0.125
    %v2553 = vmul.f32 %v2535, 0.125
    %v2554 = vadd.f32 %v2538, %v2149
    %v2555 = vadd.f32 %v2539, %v2150
    %v2556 = vadd.f32 %v2540, %v2151
    %v2557 = vadd.f32 %v2541, %v2152
    %v2558 = vadd.f32 %v2542, %v2153
    %v2559 = vadd.f32 %v2543, %v2154
    %v2560 = vadd.f32 %v2544, %v2155
    %v2561 = vadd.f32 %v2545, %v2156
    %v2562 = vadd.f32 %v2546, %v2157
    %v2563 = vadd.f32 %v2547, %v2158
    %v2564 = vadd.f32 %v2548, %v2159
    %v2565 = vadd.f32 %v2549, %v2160
    %v2566 = vadd.f32 %v2550, %v2161
    %v2567 = vadd.f32 %v2551, %v2162
    %v2568 = vadd.f32 %v2552, %v2163
    %v2569 = vadd.f32 %v2553, %v2164
    %2570 = vmax.xlane.f32.xlu0 %v2554
    %v2571 = vpop.xlane.xlu0 %2570
    %2572 = vmax.xlane.f32.xlu0 %v2555
    %v2573 = vpop.xlane.xlu0 %2572
    %2574 = vmax.xlane.f32.xlu0 %v2556
    %v2575 = vpop.xlane.xlu0 %2574
    %2576 = vmax.xlane.f32.xlu0 %v2557
    %v2577 = vpop.xlane.xlu0 %2576
    %2578 = vmax.xlane.f32.xlu0 %v2558
    %v2579 = vpop.xlane.xlu0 %2578
    %2580 = vmax.xlane.f32.xlu0 %v2559
    %v2581 = vpop.xlane.xlu0 %2580
    %2582 = vmax.xlane.f32.xlu0 %v2560
    %v2583 = vpop.xlane.xlu0 %2582
    %2584 = vmax.xlane.f32.xlu0 %v2561
    %v2585 = vpop.xlane.xlu0 %2584
    %2586 = vmax.xlane.f32.xlu0 %v2562
    %v2587 = vpop.xlane.xlu0 %2586
    %2588 = vmax.xlane.f32.xlu0 %v2563
    %v2589 = vpop.xlane.xlu0 %2588
    %2590 = vmax.xlane.f32.xlu0 %v2564
    %v2591 = vpop.xlane.xlu0 %2590
    %2592 = vmax.xlane.f32.xlu0 %v2565
    %v2593 = vpop.xlane.xlu0 %2592
    %2594 = vmax.xlane.f32.xlu0 %v2566
    %v2595 = vpop.xlane.xlu0 %2594
    %2596 = vmax.xlane.f32.xlu0 %v2567
    %v2597 = vpop.xlane.xlu0 %2596
    %2598 = vmax.xlane.f32.xlu0 %v2568
    %v2599 = vpop.xlane.xlu0 %2598
    %2600 = vmax.xlane.f32.xlu0 %v2569
    %v2601 = vpop.xlane.xlu0 %2600
    %v2602 = vsub.f32 %v2554, %v2571
    %v2603 = vsub.f32 %v2555, %v2573
    %v2604 = vsub.f32 %v2556, %v2575
    %v2605 = vsub.f32 %v2557, %v2577
    %v2606 = vsub.f32 %v2558, %v2579
    %v2607 = vsub.f32 %v2559, %v2581
    %v2608 = vsub.f32 %v2560, %v2583
    %v2609 = vsub.f32 %v2561, %v2585
    %v2610 = vsub.f32 %v2562, %v2587
    %v2611 = vsub.f32 %v2563, %v2589
    %v2612 = vsub.f32 %v2564, %v2591
    %v2613 = vsub.f32 %v2565, %v2593
    %v2614 = vsub.f32 %v2566, %v2595
    %v2615 = vsub.f32 %v2567, %v2597
    %v2616 = vsub.f32 %v2568, %v2599
    %v2617 = vsub.f32 %v2569, %v2601
    %v2618 = vmul.f32 %v2602, 1.442695
    %v2619 = vpow.pop %v2618
    %v2620 = vmul.f32 %v2603, 1.442695
    %v2621 = vpow.pop %v2620
    %v2622 = vmul.f32 %v2604, 1.442695
    %v2623 = vpow.pop %v2622
    %v2624 = vmul.f32 %v2605, 1.442695
    %v2625 = vpow.pop %v2624
    %v2626 = vmul.f32 %v2606, 1.442695
    %v2627 = vpow.pop %v2626
    %v2628 = vmul.f32 %v2607, 1.442695
    %v2629 = vpow.pop %v2628
    %v2630 = vmul.f32 %v2608, 1.442695
    %v2631 = vpow.pop %v2630
    %v2632 = vmul.f32 %v2609, 1.442695
    %v2633 = vpow.pop %v2632
    %v2634 = vmul.f32 %v2610, 1.442695
    %v2635 = vpow.pop %v2634
    %v2636 = vmul.f32 %v2611, 1.442695
    %v2637 = vpow.pop %v2636
    %v2638 = vmul.f32 %v2612, 1.442695
    %v2639 = vpow.pop %v2638
    %v2640 = vmul.f32 %v2613, 1.442695
    %v2641 = vpow.pop %v2640
    %v2642 = vmul.f32 %v2614, 1.442695
    %v2643 = vpow.pop %v2642
    %v2644 = vmul.f32 %v2615, 1.442695
    %v2645 = vpow.pop %v2644
    %v2646 = vmul.f32 %v2616, 1.442695
    %v2647 = vpow.pop %v2646
    %v2648 = vmul.f32 %v2617, 1.442695
    %v2649 = vpow.pop %v2648
    %2650 = vadd.xlane.f32.xlu0 %v2619
    %v2651 = vpop.xlane.xlu0 %2650
    %2652 = vadd.xlane.f32.xlu0 %v2621
    %v2653 = vpop.xlane.xlu0 %2652
    %2654 = vadd.xlane.f32.xlu0 %v2623
    %v2655 = vpop.xlane.xlu0 %2654
    %2656 = vadd.xlane.f32.xlu0 %v2625
    %v2657 = vpop.xlane.xlu0 %2656
    %2658 = vadd.xlane.f32.xlu0 %v2627
    %v2659 = vpop.xlane.xlu0 %2658
    %2660 = vadd.xlane.f32.xlu0 %v2629
    %v2661 = vpop.xlane.xlu0 %2660
    %2662 = vadd.xlane.f32.xlu0 %v2631
    %v2663 = vpop.xlane.xlu0 %2662
    %2664 = vadd.xlane.f32.xlu0 %v2633
    %v2665 = vpop.xlane.xlu0 %2664
    %2666 = vadd.xlane.f32.xlu0 %v2635
    %v2667 = vpop.xlane.xlu0 %2666
    %2668 = vadd.xlane.f32.xlu0 %v2637
    %v2669 = vpop.xlane.xlu0 %2668
    %2670 = vadd.xlane.f32.xlu0 %v2639
    %v2671 = vpop.xlane.xlu0 %2670
    %2672 = vadd.xlane.f32.xlu0 %v2641
    %v2673 = vpop.xlane.xlu0 %2672
    %2674 = vadd.xlane.f32.xlu0 %v2643
    %v2675 = vpop.xlane.xlu0 %2674
    %2676 = vadd.xlane.f32.xlu0 %v2645
    %v2677 = vpop.xlane.xlu0 %2676
    %2678 = vadd.xlane.f32.xlu0 %v2647
    %v2679 = vpop.xlane.xlu0 %2678
    %2680 = vadd.xlane.f32.xlu0 %v2649
    %v2681 = vpop.xlane.xlu0 %2680
    %v2682 = vrcp.pop %v2651
    %v2683 = vrcp.pop %v2653
    %v2684 = vrcp.pop %v2655
    %v2685 = vrcp.pop %v2657
    %v2686 = vrcp.pop %v2659
    %v2687 = vrcp.pop %v2661
    %v2688 = vrcp.pop %v2663
    %v2689 = vrcp.pop %v2665
    %v2690 = vrcp.pop %v2667
    %v2691 = vrcp.pop %v2669
    %v2692 = vrcp.pop %v2671
    %v2693 = vrcp.pop %v2673
    %v2694 = vrcp.pop %v2675
    %v2695 = vrcp.pop %v2677
    %v2696 = vrcp.pop %v2679
    %v2697 = vrcp.pop %v2681
    %v2698 = vmul.f32 %v2619, %v2682
    %v2699 = vmul.f32 %v2621, %v2683
    %v2700 = vmul.f32 %v2623, %v2684
    %v2701 = vmul.f32 %v2625, %v2685
    %v2702 = vmul.f32 %v2627, %v2686
    %v2703 = vmul.f32 %v2629, %v2687
    %v2704 = vmul.f32 %v2631, %v2688
    %v2705 = vmul.f32 %v2633, %v2689
    %v2706 = vmul.f32 %v2635, %v2690
    %v2707 = vmul.f32 %v2637, %v2691
    %v2708 = vmul.f32 %v2639, %v2692
    %v2709 = vmul.f32 %v2641, %v2693
    %v2710 = vmul.f32 %v2643, %v2694
    %v2711 = vmul.f32 %v2645, %v2695
    %v2712 = vmul.f32 %v2647, %v2696
    %v2713 = vmul.f32 %v2649, %v2697
    %v2714 = vpack.c.bf16 %v2699, %v2698
    %v2715 = vpack.c.bf16 %v2701, %v2700
    %v2716 = vpack.c.bf16 %v2703, %v2702
    %v2717 = vpack.c.bf16 %v2705, %v2704
    %v2718 = vpack.c.bf16 %v2707, %v2706
    %v2719 = vpack.c.bf16 %v2709, %v2708
    %v2720 = vpack.c.bf16 %v2711, %v2710
    %v2721 = vpack.c.bf16 %v2713, %v2712
    %v2722 = vpack.c.bf16 %v2289, %v2285
    %v2723 = vpack.c.bf16 %v2299, %v2295
    %v2724 = vpack.c.bf16 %v2309, %v2305
    %v2725 = vpack.c.bf16 %v2319, %v2315
    %v2726 = vpack.c.bf16 %v2329, %v2325
    %v2727 = vpack.c.bf16 %v2339, %v2335
    %v2728 = vpack.c.bf16 %v2349, %v2345
    %v2729 = vpack.c.bf16 %v2359, %v2355
    %2730 = vmatprep.subr.bf16.mxu0 0
    %2731 = vmatpush1.bf16.msra.mxu0 %v2722
    %2732 = vmatprep.subr.bf16.mxu0 0
    %2733 = vmatpush1.bf16.msra.mxu0 %v2723
    %2734 = vmatprep.subr.bf16.mxu0 0
    %2735 = vmatpush1.bf16.msra.mxu0 %v2724
    %2736 = vmatprep.subr.bf16.mxu0 0
    %2737 = vmatpush1.bf16.msra.mxu0 %v2725
    %2738 = vmatprep.subr.bf16.mxu0 0
    %2739 = vmatpush1.bf16.msra.mxu0 %v2726
    %2740 = vmatprep.subr.bf16.mxu0 0
    %2741 = vmatpush1.bf16.msra.mxu0 %v2727
    %2742 = vmatprep.subr.bf16.mxu0 0
    %2743 = vmatpush1.bf16.msra.mxu0 %v2728
    %2744 = vmatprep.subr.bf16.mxu0 0
    %2745 = vmatpush1.bf16.msra.mxu0 %v2729
    %2746 = vmatprep.subr.bf16.mxu0 0
    %2747 = vmatpush1.bf16.msra.mxu0 0
    %2748 = vmatprep.subr.bf16.mxu0 0
    %2749 = vmatpush1.bf16.msra.mxu0 0
    %2750 = vmatprep.subr.bf16.mxu0 0
    %2751 = vmatpush1.bf16.msra.mxu0 0
    %2752 = vmatprep.subr.bf16.mxu0 0
    %2753 = vmatpush1.bf16.msra.mxu0 0
    %2754 = vmatprep.subr.bf16.mxu0 0
    %2755 = vmatpush1.bf16.msra.mxu0 0
    %2756 = vmatprep.subr.bf16.mxu0 0
    %2757 = vmatpush1.bf16.msra.mxu0 0
    %2758 = vmatprep.subr.bf16.mxu0 0
    %2759 = vmatpush1.bf16.msra.mxu0 0
    %2760 = vmatprep.subr.bf16.mxu0 0
    %2761 = vmatpush1.bf16.msra.mxu0 0
    %2762 = vmatprep.mubr.bf16.mxu0 0
    %2763 = vmatmul.mubr.bf16.gmra.mrb[0].mxu0 %v2714
    %v2764 = vpop.f32.mrb[0].mxu0
    %v2765 = vadd.f32 0.0, %v2764
    %v2766 = vpop.f32.mrb[0].mxu0
    %v2767 = vpop.f32.mrb[0].mxu0
    %v2768 = vadd.f32 0.0, %v2767
    %v2769 = vpop.f32.mrb[0].mxu0
    %2770 = vmatprep.mubr.bf16.mxu0 0
    %2771 = vmatmul.mubr.bf16.gmra.mrb[0].mxu0 %v2715
    %v2772 = vpop.f32.mrb[0].mxu0
    %v2773 = vadd.f32 0.0, %v2772
    %v2774 = vpop.f32.mrb[0].mxu0
    %v2775 = vpop.f32.mrb[0].mxu0
    %v2776 = vadd.f32 0.0, %v2775
    %v2777 = vpop.f32.mrb[0].mxu0
    %2778 = vmatprep.mubr.bf16.mxu0 0
    %2779 = vmatmul.mubr.bf16.gmra.mrb[0].mxu0 %v2716
    %v2780 = vpop.f32.mrb[0].mxu0
    %v2781 = vadd.f32 0.0, %v2780
    %v2782 = vpop.f32.mrb[0].mxu0
    %v2783 = vpop.f32.mrb[0].mxu0
    %v2784 = vadd.f32 0.0, %v2783
    %v2785 = vpop.f32.mrb[0].mxu0
    %2786 = vmatprep.mubr.bf16.mxu0 0
    %2787 = vmatmul.mubr.bf16.gmra.mrb[0].mxu0 %v2717
    %v2788 = vpop.f32.mrb[0].mxu0
    %v2789 = vadd.f32 0.0, %v2788
    %v2790 = vpop.f32.mrb[0].mxu0
    %v2791 = vpop.f32.mrb[0].mxu0
    %v2792 = vadd.f32 0.0, %v2791
    %v2793 = vpop.f32.mrb[0].mxu0
    %2794 = vmatprep.mubr.bf16.mxu0 0
    %2795 = vmatmul.mubr.bf16.gmra.mrb[0].mxu0 %v2718
    %v2796 = vpop.f32.mrb[0].mxu0
    %v2797 = vadd.f32 0.0, %v2796
    %v2798 = vpop.f32.mrb[0].mxu0
    %v2799 = vpop.f32.mrb[0].mxu0
    %v2800 = vadd.f32 0.0, %v2799
    %v2801 = vpop.f32.mrb[0].mxu0
    %2802 = vmatprep.mubr.bf16.mxu0 0
    %2803 = vmatmul.mubr.bf16.gmra.mrb[0].mxu0 %v2719
    %v2804 = vpop.f32.mrb[0].mxu0
    %v2805 = vadd.f32 0.0, %v2804
    %v2806 = vpop.f32.mrb[0].mxu0
    %v2807 = vpop.f32.mrb[0].mxu0
    %v2808 = vadd.f32 0.0, %v2807
    %v2809 = vpop.f32.mrb[0].mxu0
    %2810 = vmatprep.mubr.bf16.mxu0 0
    %2811 = vmatmul.mubr.bf16.gmra.mrb[0].mxu0 %v2720
    %v2812 = vpop.f32.mrb[0].mxu0
    %v2813 = vadd.f32 0.0, %v2812
    %v2814 = vpop.f32.mrb[0].mxu0
    %v2815 = vpop.f32.mrb[0].mxu0
    %v2816 = vadd.f32 0.0, %v2815
    %v2817 = vpop.f32.mrb[0].mxu0
    %2818 = vmatprep.mubr.bf16.mxu0 0
    %2819 = vmatmul.mubr.bf16.gmra.mrb[0].mxu0 %v2721
    %v2820 = vpop.f32.mrb[0].mxu0
    %v2821 = vadd.f32 0.0, %v2820
    %v2822 = vpop.f32.mrb[0].mxu0
    %v2823 = vpop.f32.mrb[0].mxu0
    %v2824 = vadd.f32 0.0, %v2823
    %v2825 = vpop.f32.mrb[0].mxu0
    %2826 = vdwg.mxu0
    %v2827 = vpack.c.bf16 %v2768, %v2765
    %v2828 = vpack.c.bf16 %v2776, %v2773
    %v2829 = vpack.c.bf16 %v2784, %v2781
    %v2830 = vpack.c.bf16 %v2792, %v2789
    %v2831 = vpack.c.bf16 %v2800, %v2797
    %v2832 = vpack.c.bf16 %v2808, %v2805
    %v2833 = vpack.c.bf16 %v2816, %v2813
    %v2834 = vpack.c.bf16 %v2824, %v2821
    %v2835 = vlaneseq
    %v2836 = vshrl.u32 %v2835, 7
    %v2837 = vsub.s32 0, %v2836
    %v2838 = vrot.slane %v2147, %v2837
    %v2847 = vunpack.c.l.b16 %v2139
    %v2848 = vunpack.c.l.b16 %v2140
    %v2849 = vunpack.c.l.b16 %v2141
    %v2850 = vunpack.c.l.b16 %v2142
    %v2851 = vunpack.c.l.b16 %v2143
    %v2852 = vunpack.c.l.b16 %v2144
    %v2853 = vunpack.c.l.b16 %v2145
    %v2854 = vunpack.c.l.b16 %v2146
    %v2855 = vpack.c.b16 %v2848, %v2847
    %v2856 = vpack.c.b16 %v2850, %v2849
    %v2857 = vpack.c.b16 %v2852, %v2851
    %v2858 = vpack.c.b16 %v2854, %v2853
    %v2864 = vsel %vm356, %v2827, 0
    %v2867 = vsel %vm356, %v2828, 0
    %v2870 = vsel %vm356, %v2829, 0
    %v2873 = vsel %vm356, %v2830, 0
    %v2876 = vsel %vm356, %v2831, 0
    %v2879 = vsel %vm356, %v2832, 0
    %v2882 = vsel %vm356, %v2833, 0
    %v2885 = vsel %vm356, %v2834, 0
    %2887 = vmatprep.subr.bf16.mxu0 0
    %2888 = vmatpush1.bf16.msra.mxu0 %v2855
    %2889 = vmatprep.subr.bf16.mxu0 0
    %2890 = vmatpush1.bf16.msra.mxu0 %v2856
    %2891 = vmatprep.subr.bf16.mxu0 0
    %2892 = vmatpush1.bf16.msra.mxu0 %v2857
    %2893 = vmatprep.subr.bf16.mxu0 0
    %2894 = vmatpush1.bf16.msra.mxu0 %v2858
    %2895 = vmatprep.subr.bf16.mxu0 0
    %2896 = vmatpush1.bf16.msra.mxu0 0
    %2897 = vmatprep.subr.bf16.mxu0 0
    %2898 = vmatpush1.bf16.msra.mxu0 0
    %2899 = vmatprep.subr.bf16.mxu0 0
    %2900 = vmatpush1.bf16.msra.mxu0 0
    %2901 = vmatprep.subr.bf16.mxu0 0
    %2902 = vmatpush1.bf16.msra.mxu0 0
    %2903 = vmatprep.subr.bf16.mxu0 0
    %2904 = vmatpush1.bf16.msra.mxu0 0
    %2905 = vmatprep.subr.bf16.mxu0 0
    %2906 = vmatpush1.bf16.msra.mxu0 0
    %2907 = vmatprep.subr.bf16.mxu0 0
    %2908 = vmatpush1.bf16.msra.mxu0 0
    %2909 = vmatprep.subr.bf16.mxu0 0
    %2910 = vmatpush1.bf16.msra.mxu0 0
    %2911 = vmatprep.subr.bf16.mxu0 0
    %2912 = vmatpush1.bf16.msra.mxu0 0
    %2913 = vmatprep.subr.bf16.mxu0 0
    %2914 = vmatpush1.bf16.msra.mxu0 0
    %2915 = vmatprep.subr.bf16.mxu0 0
    %2916 = vmatpush1.bf16.msra.mxu0 0
    %2917 = vmatprep.subr.bf16.mxu0 0
    %2918 = vmatpush1.bf16.msra.mxu0 0
    %2919 = vmatprep.mubr.bf16.mxu0 0
    %2920 = vmatmul.mubr.bf16.gmra.mrb[0].mxu0 %v2864
    %v2921 = vpop.f32.mrb[0].mxu0
    %v2922 = vadd.f32 %v2838, %v2921
    %v2923 = vpop.f32.mrb[0].mxu0
    %v2924 = vpop.f32.mrb[0].mxu0
    %v2925 = vadd.f32 %v2838, %v2924
    %v2926 = vpop.f32.mrb[0].mxu0
    %2927 = vmatprep.mubr.bf16.mxu0 0
    %2928 = vmatmul.mubr.bf16.gmra.mrb[0].mxu0 %v2867
    %v2929 = vpop.f32.mrb[0].mxu0
    %v2930 = vadd.f32 %v2838, %v2929
    %v2931 = vpop.f32.mrb[0].mxu0
    %v2932 = vpop.f32.mrb[0].mxu0
    %v2933 = vadd.f32 %v2838, %v2932
    %v2934 = vpop.f32.mrb[0].mxu0
    %2935 = vmatprep.mubr.bf16.mxu0 0
    %2936 = vmatmul.mubr.bf16.gmra.mrb[0].mxu0 %v2870
    %v2937 = vpop.f32.mrb[0].mxu0
    %v2938 = vadd.f32 %v2838, %v2937
    %v2939 = vpop.f32.mrb[0].mxu0
    %v2940 = vpop.f32.mrb[0].mxu0
    %v2941 = vadd.f32 %v2838, %v2940
    %v2942 = vpop.f32.mrb[0].mxu0
    %2943 = vmatprep.mubr.bf16.mxu0 0
    %2944 = vmatmul.mubr.bf16.gmra.mrb[0].mxu0 %v2873
    %v2945 = vpop.f32.mrb[0].mxu0
    %v2946 = vadd.f32 %v2838, %v2945
    %v2947 = vpop.f32.mrb[0].mxu0
    %v2948 = vpop.f32.mrb[0].mxu0
    %v2949 = vadd.f32 %v2838, %v2948
    %v2950 = vpop.f32.mrb[0].mxu0
    %2951 = vmatprep.mubr.bf16.mxu0 0
    %2952 = vmatmul.mubr.bf16.gmra.mrb[0].mxu0 %v2876
    %v2953 = vpop.f32.mrb[0].mxu0
    %v2954 = vadd.f32 %v2838, %v2953
    %v2955 = vpop.f32.mrb[0].mxu0
    %v2956 = vpop.f32.mrb[0].mxu0
    %v2957 = vadd.f32 %v2838, %v2956
    %v2958 = vpop.f32.mrb[0].mxu0
    %2959 = vmatprep.mubr.bf16.mxu0 0
    %2960 = vmatmul.mubr.bf16.gmra.mrb[0].mxu0 %v2879
    %v2961 = vpop.f32.mrb[0].mxu0
    %v2962 = vadd.f32 %v2838, %v2961
    %v2963 = vpop.f32.mrb[0].mxu0
    %v2964 = vpop.f32.mrb[0].mxu0
    %v2965 = vadd.f32 %v2838, %v2964
    %v2966 = vpop.f32.mrb[0].mxu0
    %2967 = vmatprep.mubr.bf16.mxu0 0
    %2968 = vmatmul.mubr.bf16.gmra.mrb[0].mxu0 %v2882
    %v2969 = vpop.f32.mrb[0].mxu0
    %v2970 = vadd.f32 %v2838, %v2969
    %v2971 = vpop.f32.mrb[0].mxu0
    %v2972 = vpop.f32.mrb[0].mxu0
    %v2973 = vadd.f32 %v2838, %v2972
    %v2974 = vpop.f32.mrb[0].mxu0
    %2975 = vmatprep.mubr.bf16.mxu0 0
    %2976 = vmatmul.mubr.bf16.gmra.mrb[0].mxu0 %v2885
    %v2977 = vpop.f32.mrb[0].mxu0
    %v2978 = vadd.f32 %v2838, %v2977
    %v2979 = vpop.f32.mrb[0].mxu0
    %v2980 = vpop.f32.mrb[0].mxu0
    %v2981 = vadd.f32 %v2838, %v2980
    %v2982 = vpop.f32.mrb[0].mxu0
    %2983 = vdwg.mxu0
    %v2984 = vadd.f32 %v1829, %v2922
    %v2985 = vadd.f32 %v1830, %v2925
    %v2986 = vadd.f32 %v1831, %v2930
    %v2987 = vadd.f32 %v1832, %v2933
    %v2988 = vadd.f32 %v1833, %v2938
    %v2989 = vadd.f32 %v1834, %v2941
    %v2990 = vadd.f32 %v1835, %v2946
    %v2991 = vadd.f32 %v1836, %v2949
    %v2992 = vadd.f32 %v1837, %v2954
    %v2993 = vadd.f32 %v1838, %v2957
    %v2994 = vadd.f32 %v1839, %v2962
    %v2995 = vadd.f32 %v1840, %v2965
    %v2996 = vadd.f32 %v1841, %v2970
    %v2997 = vadd.f32 %v1842, %v2973
    %v2998 = vadd.f32 %v1843, %v2978
    %v2999 = vadd.f32 %v1844, %v2981
    %v3000 = vld [vmem:[%s6 + $0xb] sm:$0x1]
    %v3001 = vld [vmem:[%s6 + $0xc] sm:$0x1]
    %v3002 = vsel %vm356, %v2984, 0.0
    %3003 = vadd.xlane.f32.xlu0 %v3002
    %v3004 = vpop.xlane.xlu0 %3003
    %v3005 = vsel %vm356, %v2985, 0.0
    %3006 = vadd.xlane.f32.xlu0 %v3005
    %v3007 = vpop.xlane.xlu0 %3006
    %v3008 = vsel %vm356, %v2986, 0.0
    %3009 = vadd.xlane.f32.xlu0 %v3008
    %v3010 = vpop.xlane.xlu0 %3009
    %v3011 = vsel %vm356, %v2987, 0.0
    %3012 = vadd.xlane.f32.xlu0 %v3011
    %v3013 = vpop.xlane.xlu0 %3012
    %v3014 = vsel %vm356, %v2988, 0.0
    %3015 = vadd.xlane.f32.xlu0 %v3014
    %v3016 = vpop.xlane.xlu0 %3015
    %v3017 = vsel %vm356, %v2989, 0.0
    %3018 = vadd.xlane.f32.xlu0 %v3017
    %v3019 = vpop.xlane.xlu0 %3018
    %v3020 = vsel %vm356, %v2990, 0.0
    %3021 = vadd.xlane.f32.xlu0 %v3020
    %v3022 = vpop.xlane.xlu0 %3021
    %v3023 = vsel %vm356, %v2991, 0.0
    %3024 = vadd.xlane.f32.xlu0 %v3023
    %v3025 = vpop.xlane.xlu0 %3024
    %v3026 = vsel %vm356, %v2992, 0.0
    %3027 = vadd.xlane.f32.xlu0 %v3026
    %v3028 = vpop.xlane.xlu0 %3027
    %v3029 = vsel %vm356, %v2993, 0.0
    %3030 = vadd.xlane.f32.xlu0 %v3029
    %v3031 = vpop.xlane.xlu0 %3030
    %v3032 = vsel %vm356, %v2994, 0.0
    %3033 = vadd.xlane.f32.xlu0 %v3032
    %v3034 = vpop.xlane.xlu0 %3033
    %v3035 = vsel %vm356, %v2995, 0.0
    %3036 = vadd.xlane.f32.xlu0 %v3035
    %v3037 = vpop.xlane.xlu0 %3036
    %v3038 = vsel %vm356, %v2996, 0.0
    %3039 = vadd.xlane.f32.xlu0 %v3038
    %v3040 = vpop.xlane.xlu0 %3039
    %v3041 = vsel %vm356, %v2997, 0.0
    %3042 = vadd.xlane.f32.xlu0 %v3041
    %v3043 = vpop.xlane.xlu0 %3042
    %v3044 = vsel %vm356, %v2998, 0.0
    %3045 = vadd.xlane.f32.xlu0 %v3044
    %v3046 = vpop.xlane.xlu0 %3045
    %v3047 = vsel %vm356, %v2999, 0.0
    %3048 = vadd.xlane.f32.xlu0 %v3047
    %v3049 = vpop.xlane.xlu0 %3048
    %v3050 = vmul.f32 %v3004, 0.015625
    %v3051 = vmul.f32 %v3007, 0.015625
    %v3052 = vmul.f32 %v3010, 0.015625
    %v3053 = vmul.f32 %v3013, 0.015625
    %v3054 = vmul.f32 %v3016, 0.015625
    %v3055 = vmul.f32 %v3019, 0.015625
    %v3056 = vmul.f32 %v3022, 0.015625
    %v3057 = vmul.f32 %v3025, 0.015625
    %v3058 = vmul.f32 %v3028, 0.015625
    %v3059 = vmul.f32 %v3031, 0.015625
    %v3060 = vmul.f32 %v3034, 0.015625
    %v3061 = vmul.f32 %v3037, 0.015625
    %v3062 = vmul.f32 %v3040, 0.015625
    %v3063 = vmul.f32 %v3043, 0.015625
    %v3064 = vmul.f32 %v3046, 0.015625
    %v3065 = vmul.f32 %v3049, 0.015625
    %v3066 = vmul.f32 %v2984, %v2984
    %v3067 = vmul.f32 %v2985, %v2985
    %v3068 = vmul.f32 %v2986, %v2986
    %v3069 = vmul.f32 %v2987, %v2987
    %v3070 = vmul.f32 %v2988, %v2988
    %v3071 = vmul.f32 %v2989, %v2989
    %v3072 = vmul.f32 %v2990, %v2990
    %v3073 = vmul.f32 %v2991, %v2991
    %v3074 = vmul.f32 %v2992, %v2992
    %v3075 = vmul.f32 %v2993, %v2993
    %v3076 = vmul.f32 %v2994, %v2994
    %v3077 = vmul.f32 %v2995, %v2995
    %v3078 = vmul.f32 %v2996, %v2996
    %v3079 = vmul.f32 %v2997, %v2997
    %v3080 = vmul.f32 %v2998, %v2998
    %v3081 = vmul.f32 %v2999, %v2999
    %v3082 = vsel %vm356, %v3066, 0.0
    %3083 = vadd.xlane.f32.xlu0 %v3082
    %v3084 = vpop.xlane.xlu0 %3083
    %v3085 = vsel %vm356, %v3067, 0.0
    %3086 = vadd.xlane.f32.xlu0 %v3085
    %v3087 = vpop.xlane.xlu0 %3086
    %v3088 = vsel %vm356, %v3068, 0.0
    %3089 = vadd.xlane.f32.xlu0 %v3088
    %v3090 = vpop.xlane.xlu0 %3089
    %v3091 = vsel %vm356, %v3069, 0.0
    %3092 = vadd.xlane.f32.xlu0 %v3091
    %v3093 = vpop.xlane.xlu0 %3092
    %v3094 = vsel %vm356, %v3070, 0.0
    %3095 = vadd.xlane.f32.xlu0 %v3094
    %v3096 = vpop.xlane.xlu0 %3095
    %v3097 = vsel %vm356, %v3071, 0.0
    %3098 = vadd.xlane.f32.xlu0 %v3097
    %v3099 = vpop.xlane.xlu0 %3098
    %v3100 = vsel %vm356, %v3072, 0.0
    %3101 = vadd.xlane.f32.xlu0 %v3100
    %v3102 = vpop.xlane.xlu0 %3101
    %v3103 = vsel %vm356, %v3073, 0.0
    %3104 = vadd.xlane.f32.xlu0 %v3103
    %v3105 = vpop.xlane.xlu0 %3104
    %v3106 = vsel %vm356, %v3074, 0.0
    %3107 = vadd.xlane.f32.xlu0 %v3106
    %v3108 = vpop.xlane.xlu0 %3107
    %v3109 = vsel %vm356, %v3075, 0.0
    %3110 = vadd.xlane.f32.xlu0 %v3109
    %v3111 = vpop.xlane.xlu0 %3110
    %v3112 = vsel %vm356, %v3076, 0.0
    %3113 = vadd.xlane.f32.xlu0 %v3112
    %v3114 = vpop.xlane.xlu0 %3113
    %v3115 = vsel %vm356, %v3077, 0.0
    %3116 = vadd.xlane.f32.xlu0 %v3115
    %v3117 = vpop.xlane.xlu0 %3116
    %v3118 = vsel %vm356, %v3078, 0.0
    %3119 = vadd.xlane.f32.xlu0 %v3118
    %v3120 = vpop.xlane.xlu0 %3119
    %v3121 = vsel %vm356, %v3079, 0.0
    %3122 = vadd.xlane.f32.xlu0 %v3121
    %v3123 = vpop.xlane.xlu0 %3122
    %v3124 = vsel %vm356, %v3080, 0.0
    %3125 = vadd.xlane.f32.xlu0 %v3124
    %v3126 = vpop.xlane.xlu0 %3125
    %v3127 = vsel %vm356, %v3081, 0.0
    %3128 = vadd.xlane.f32.xlu0 %v3127
    %v3129 = vpop.xlane.xlu0 %3128
    %v3130 = vmul.f32 %v3084, 0.015625
    %v3131 = vmul.f32 %v3087, 0.015625
    %v3132 = vmul.f32 %v3090, 0.015625
    %v3133 = vmul.f32 %v3093, 0.015625
    %v3134 = vmul.f32 %v3096, 0.015625
    %v3135 = vmul.f32 %v3099, 0.015625
    %v3136 = vmul.f32 %v3102, 0.015625
    %v3137 = vmul.f32 %v3105, 0.015625
    %v3138 = vmul.f32 %v3108, 0.015625
    %v3139 = vmul.f32 %v3111, 0.015625
    %v3140 = vmul.f32 %v3114, 0.015625
    %v3141 = vmul.f32 %v3117, 0.015625
    %v3142 = vmul.f32 %v3120, 0.015625
    %v3143 = vmul.f32 %v3123, 0.015625
    %v3144 = vmul.f32 %v3126, 0.015625
    %v3145 = vmul.f32 %v3129, 0.015625
    %v3146 = vmul.f32 %v3050, %v3050
    %v3147 = vmul.f32 %v3051, %v3051
    %v3148 = vmul.f32 %v3052, %v3052
    %v3149 = vmul.f32 %v3053, %v3053
    %v3150 = vmul.f32 %v3054, %v3054
    %v3151 = vmul.f32 %v3055, %v3055
    %v3152 = vmul.f32 %v3056, %v3056
    %v3153 = vmul.f32 %v3057, %v3057
    %v3154 = vmul.f32 %v3058, %v3058
    %v3155 = vmul.f32 %v3059, %v3059
    %v3156 = vmul.f32 %v3060, %v3060
    %v3157 = vmul.f32 %v3061, %v3061
    %v3158 = vmul.f32 %v3062, %v3062
    %v3159 = vmul.f32 %v3063, %v3063
    %v3160 = vmul.f32 %v3064, %v3064
    %v3161 = vmul.f32 %v3065, %v3065
    %v3162 = vsub.f32 %v3130, %v3146
    %v3163 = vsub.f32 %v3131, %v3147
    %v3164 = vsub.f32 %v3132, %v3148
    %v3165 = vsub.f32 %v3133, %v3149
    %v3166 = vsub.f32 %v3134, %v3150
    %v3167 = vsub.f32 %v3135, %v3151
    %v3168 = vsub.f32 %v3136, %v3152
    %v3169 = vsub.f32 %v3137, %v3153
    %v3170 = vsub.f32 %v3138, %v3154
    %v3171 = vsub.f32 %v3139, %v3155
    %v3172 = vsub.f32 %v3140, %v3156
    %v3173 = vsub.f32 %v3141, %v3157
    %v3174 = vsub.f32 %v3142, %v3158
    %v3175 = vsub.f32 %v3143, %v3159
    %v3176 = vsub.f32 %v3144, %v3160
    %v3177 = vsub.f32 %v3145, %v3161
    %v3178 = vsub.f32 %v2984, %v3050
    %v3179 = vsub.f32 %v2985, %v3051
    %v3180 = vsub.f32 %v2986, %v3052
    %v3181 = vsub.f32 %v2987, %v3053
    %v3182 = vsub.f32 %v2988, %v3054
    %v3183 = vsub.f32 %v2989, %v3055
    %v3184 = vsub.f32 %v2990, %v3056
    %v3185 = vsub.f32 %v2991, %v3057
    %v3186 = vsub.f32 %v2992, %v3058
    %v3187 = vsub.f32 %v2993, %v3059
    %v3188 = vsub.f32 %v2994, %v3060
    %v3189 = vsub.f32 %v2995, %v3061
    %v3190 = vsub.f32 %v2996, %v3062
    %v3191 = vsub.f32 %v2997, %v3063
    %v3192 = vsub.f32 %v2998, %v3064
    %v3193 = vsub.f32 %v2999, %v3065
    %v3194 = vadd.f32 %v3162, 1e-05
    %v3195 = vadd.f32 %v3163, 1e-05
    %v3196 = vadd.f32 %v3164, 1e-05
    %v3197 = vadd.f32 %v3165, 1e-05
    %v3198 = vadd.f32 %v3166, 1e-05
    %v3199 = vadd.f32 %v3167, 1e-05
    %v3200 = vadd.f32 %v3168, 1e-05
    %v3201 = vadd.f32 %v3169, 1e-05
    %v3202 = vadd.f32 %v3170, 1e-05
    %v3203 = vadd.f32 %v3171, 1e-05
    %v3204 = vadd.f32 %v3172, 1e-05
    %v3205 = vadd.f32 %v3173, 1e-05
    %v3206 = vadd.f32 %v3174, 1e-05
    %v3207 = vadd.f32 %v3175, 1e-05
    %v3208 = vadd.f32 %v3176, 1e-05
    %v3209 = vadd.f32 %v3177, 1e-05
    %v3210 = vrsqrt.pop %v3194
    %v3211 = vrsqrt.pop %v3195
    %v3212 = vrsqrt.pop %v3196
    %v3213 = vrsqrt.pop %v3197
    %v3214 = vrsqrt.pop %v3198
    %v3215 = vrsqrt.pop %v3199
    %v3216 = vrsqrt.pop %v3200
    %v3217 = vrsqrt.pop %v3201
    %v3218 = vrsqrt.pop %v3202
    %v3219 = vrsqrt.pop %v3203
    %v3220 = vrsqrt.pop %v3204
    %v3221 = vrsqrt.pop %v3205
    %v3222 = vrsqrt.pop %v3206
    %v3223 = vrsqrt.pop %v3207
    %v3224 = vrsqrt.pop %v3208
    %v3225 = vrsqrt.pop %v3209
    %v3226 = vmul.f32 %v3178, %v3210
    %v3227 = vmul.f32 %v3179, %v3211
    %v3228 = vmul.f32 %v3180, %v3212
    %v3229 = vmul.f32 %v3181, %v3213
    %v3230 = vmul.f32 %v3182, %v3214
    %v3231 = vmul.f32 %v3183, %v3215
    %v3232 = vmul.f32 %v3184, %v3216
    %v3233 = vmul.f32 %v3185, %v3217
    %v3234 = vmul.f32 %v3186, %v3218
    %v3235 = vmul.f32 %v3187, %v3219
    %v3236 = vmul.f32 %v3188, %v3220
    %v3237 = vmul.f32 %v3189, %v3221
    %v3238 = vmul.f32 %v3190, %v3222
    %v3239 = vmul.f32 %v3191, %v3223
    %v3240 = vmul.f32 %v3192, %v3224
    %v3241 = vmul.f32 %v3193, %v3225
    %v3242 = vlaneseq
    %v3243 = vshrl.u32 %v3242, 7
    %v3244 = vsub.s32 0, %v3243
    %v3245 = vrot.slane %v3000, %v3244
    %v3246 = vmul.f32 %v3226, %v3245
    %v3247 = vmul.f32 %v3227, %v3245
    %v3248 = vmul.f32 %v3228, %v3245
    %v3249 = vmul.f32 %v3229, %v3245
    %v3250 = vmul.f32 %v3230, %v3245
    %v3251 = vmul.f32 %v3231, %v3245
    %v3252 = vmul.f32 %v3232, %v3245
    %v3253 = vmul.f32 %v3233, %v3245
    %v3254 = vmul.f32 %v3234, %v3245
    %v3255 = vmul.f32 %v3235, %v3245
    %v3256 = vmul.f32 %v3236, %v3245
    %v3257 = vmul.f32 %v3237, %v3245
    %v3258 = vmul.f32 %v3238, %v3245
    %v3259 = vmul.f32 %v3239, %v3245
    %v3260 = vmul.f32 %v3240, %v3245
    %v3261 = vmul.f32 %v3241, %v3245
    %v3262 = vlaneseq
    %v3263 = vshrl.u32 %v3262, 7
    %v3264 = vsub.s32 0, %v3263
    %v3265 = vrot.slane %v3001, %v3264
    %v3266 = vadd.f32 %v3246, %v3265
    %v3267 = vadd.f32 %v3247, %v3265
    %v3268 = vadd.f32 %v3248, %v3265
    %v3269 = vadd.f32 %v3249, %v3265
    %v3270 = vadd.f32 %v3250, %v3265
    %v3271 = vadd.f32 %v3251, %v3265
    %v3272 = vadd.f32 %v3252, %v3265
    %v3273 = vadd.f32 %v3253, %v3265
    %v3274 = vadd.f32 %v3254, %v3265
    %v3275 = vadd.f32 %v3255, %v3265
    %v3276 = vadd.f32 %v3256, %v3265
    %v3277 = vadd.f32 %v3257, %v3265
    %v3278 = vadd.f32 %v3258, %v3265
    %v3279 = vadd.f32 %v3259, %v3265
    %v3280 = vadd.f32 %v3260, %v3265
    %v3281 = vadd.f32 %v3261, %v3265
    %s3282 = scalar_lea.vmem [#allocation2], 128
    %v3283 = vld [vmem:[%s3282] sm:$0xf]
    %v3284 = vld [vmem:[%s3282 + $0x4] sm:$0xf]
    %v3285 = vld [vmem:[%s3282 + $0x8] sm:$0xf]
    %v3286 = vld [vmem:[%s3282 + $0xc] sm:$0xf]
    %v3287 = vld [vmem:[%s3282 + $0x10] sm:$0xf]
    %v3288 = vld [vmem:[%s3282 + $0x14] sm:$0xf]
    %v3289 = vld [vmem:[%s3282 + $0x18] sm:$0xf]
    %v3290 = vld [vmem:[%s3282 + $0x1c] sm:$0xf]
    %v3291 = vpack.c.bf16 %v3267, %v3266
    %v3292 = vpack.c.bf16 %v3269, %v3268
    %v3293 = vpack.c.bf16 %v3271, %v3270
    %v3294 = vpack.c.bf16 %v3273, %v3272
    %v3295 = vpack.c.bf16 %v3275, %v3274
    %v3296 = vpack.c.bf16 %v3277, %v3276
    %v3297 = vpack.c.bf16 %v3279, %v3278
    %v3298 = vpack.c.bf16 %v3281, %v3280
    %v3299 = vld [vmem:[%s6 + $0xd] sm:$0x1]
    %v3300 = vlaneseq
    %v3301 = vshrl.u32 %v3300, 7
    %v3302 = vsub.s32 0, %v3301
    %v3303 = vrot.slane %v3299, %v3302
    %v3312 = vunpack.c.l.b16 %v3283
    %v3313 = vunpack.c.l.b16 %v3284
    %v3314 = vunpack.c.l.b16 %v3285
    %v3315 = vunpack.c.l.b16 %v3286
    %v3316 = vunpack.c.l.b16 %v3287
    %v3317 = vunpack.c.l.b16 %v3288
    %v3318 = vunpack.c.l.b16 %v3289
    %v3319 = vunpack.c.l.b16 %v3290
    %v3320 = vpack.c.b16 %v3313, %v3312
    %v3321 = vpack.c.b16 %v3315, %v3314
    %v3322 = vpack.c.b16 %v3317, %v3316
    %v3323 = vpack.c.b16 %v3319, %v3318
    %v3329 = vsel %vm356, %v3291, 0
    %v3332 = vsel %vm356, %v3292, 0
    %v3335 = vsel %vm356, %v3293, 0
    %v3338 = vsel %vm356, %v3294, 0
    %v3341 = vsel %vm356, %v3295, 0
    %v3344 = vsel %vm356, %v3296, 0
    %v3347 = vsel %vm356, %v3297, 0
    %v3350 = vsel %vm356, %v3298, 0
    %3352 = vmatprep.subr.bf16.mxu0 0
    %3353 = vmatpush1.bf16.msra.mxu0 %v3320
    %3354 = vmatprep.subr.bf16.mxu0 0
    %3355 = vmatpush1.bf16.msra.mxu0 %v3321
    %3356 = vmatprep.subr.bf16.mxu0 0
    %3357 = vmatpush1.bf16.msra.mxu0 %v3322
    %3358 = vmatprep.subr.bf16.mxu0 0
    %3359 = vmatpush1.bf16.msra.mxu0 %v3323
    %3360 = vmatprep.subr.bf16.mxu0 0
    %3361 = vmatpush1.bf16.msra.mxu0 0
    %3362 = vmatprep.subr.bf16.mxu0 0
    %3363 = vmatpush1.bf16.msra.mxu0 0
    %3364 = vmatprep.subr.bf16.mxu0 0
    %3365 = vmatpush1.bf16.msra.mxu0 0
    %3366 = vmatprep.subr.bf16.mxu0 0
    %3367 = vmatpush1.bf16.msra.mxu0 0
    %3368 = vmatprep.subr.bf16.mxu0 0
    %3369 = vmatpush1.bf16.msra.mxu0 0
    %3370 = vmatprep.subr.bf16.mxu0 0
    %3371 = vmatpush1.bf16.msra.mxu0 0
    %3372 = vmatprep.subr.bf16.mxu0 0
    %3373 = vmatpush1.bf16.msra.mxu0 0
    %3374 = vmatprep.subr.bf16.mxu0 0
    %3375 = vmatpush1.bf16.msra.mxu0 0
    %3376 = vmatprep.subr.bf16.mxu0 0
    %3377 = vmatpush1.bf16.msra.mxu0 0
    %3378 = vmatprep.subr.bf16.mxu0 0
    %3379 = vmatpush1.bf16.msra.mxu0 0
    %3380 = vmatprep.subr.bf16.mxu0 0
    %3381 = vmatpush1.bf16.msra.mxu0 0
    %3382 = vmatprep.subr.bf16.mxu0 0
    %3383 = vmatpush1.bf16.msra.mxu0 0
    %3384 = vmatprep.mubr.bf16.mxu0 0
    %3385 = vmatmul.mubr.bf16.gmra.mrb[0].mxu0 %v3329
    %v3386 = vpop.f32.mrb[0].mxu0
    %v3387 = vadd.f32 %v3303, %v3386
    %v3388 = vpop.f32.mrb[0].mxu0
    %v3389 = vpop.f32.mrb[0].mxu0
    %v3390 = vadd.f32 %v3303, %v3389
    %v3391 = vpop.f32.mrb[0].mxu0
    %3392 = vmatprep.mubr.bf16.mxu0 0
    %3393 = vmatmul.mubr.bf16.gmra.mrb[0].mxu0 %v3332
    %v3394 = vpop.f32.mrb[0].mxu0
    %v3395 = vadd.f32 %v3303, %v3394
    %v3396 = vpop.f32.mrb[0].mxu0
    %v3397 = vpop.f32.mrb[0].mxu0
    %v3398 = vadd.f32 %v3303, %v3397
    %v3399 = vpop.f32.mrb[0].mxu0
    %3400 = vmatprep.mubr.bf16.mxu0 0
    %3401 = vmatmul.mubr.bf16.gmra.mrb[0].mxu0 %v3335
    %v3402 = vpop.f32.mrb[0].mxu0
    %v3403 = vadd.f32 %v3303, %v3402
    %v3404 = vpop.f32.mrb[0].mxu0
    %v3405 = vpop.f32.mrb[0].mxu0
    %v3406 = vadd.f32 %v3303, %v3405
    %v3407 = vpop.f32.mrb[0].mxu0
    %3408 = vmatprep.mubr.bf16.mxu0 0
    %3409 = vmatmul.mubr.bf16.gmra.mrb[0].mxu0 %v3338
    %v3410 = vpop.f32.mrb[0].mxu0
    %v3411 = vadd.f32 %v3303, %v3410
    %v3412 = vpop.f32.mrb[0].mxu0
    %v3413 = vpop.f32.mrb[0].mxu0
    %v3414 = vadd.f32 %v3303, %v3413
    %v3415 = vpop.f32.mrb[0].mxu0
    %3416 = vmatprep.mubr.bf16.mxu0 0
    %3417 = vmatmul.mubr.bf16.gmra.mrb[0].mxu0 %v3341
    %v3418 = vpop.f32.mrb[0].mxu0
    %v3419 = vadd.f32 %v3303, %v3418
    %v3420 = vpop.f32.mrb[0].mxu0
    %v3421 = vpop.f32.mrb[0].mxu0
    %v3422 = vadd.f32 %v3303, %v3421
    %v3423 = vpop.f32.mrb[0].mxu0
    %3424 = vmatprep.mubr.bf16.mxu0 0
    %3425 = vmatmul.mubr.bf16.gmra.mrb[0].mxu0 %v3344
    %v3426 = vpop.f32.mrb[0].mxu0
    %v3427 = vadd.f32 %v3303, %v3426
    %v3428 = vpop.f32.mrb[0].mxu0
    %v3429 = vpop.f32.mrb[0].mxu0
    %v3430 = vadd.f32 %v3303, %v3429
    %v3431 = vpop.f32.mrb[0].mxu0
    %3432 = vmatprep.mubr.bf16.mxu0 0
    %3433 = vmatmul.mubr.bf16.gmra.mrb[0].mxu0 %v3347
    %v3434 = vpop.f32.mrb[0].mxu0
    %v3435 = vadd.f32 %v3303, %v3434
    %v3436 = vpop.f32.mrb[0].mxu0
    %v3437 = vpop.f32.mrb[0].mxu0
    %v3438 = vadd.f32 %v3303, %v3437
    %v3439 = vpop.f32.mrb[0].mxu0
    %3440 = vmatprep.mubr.bf16.mxu0 0
    %3441 = vmatmul.mubr.bf16.gmra.mrb[0].mxu0 %v3350
    %v3442 = vpop.f32.mrb[0].mxu0
    %v3443 = vadd.f32 %v3303, %v3442
    %v3444 = vpop.f32.mrb[0].mxu0
    %v3445 = vpop.f32.mrb[0].mxu0
    %v3446 = vadd.f32 %v3303, %v3445
    %v3447 = vpop.f32.mrb[0].mxu0
    %3448 = vdwg.mxu0
    %v3449 = vmax.f32 %v3387, 0.0
    %v3450 = vmax.f32 %v3390, 0.0
    %v3451 = vmax.f32 %v3395, 0.0
    %v3452 = vmax.f32 %v3398, 0.0
    %v3453 = vmax.f32 %v3403, 0.0
    %v3454 = vmax.f32 %v3406, 0.0
    %v3455 = vmax.f32 %v3411, 0.0
    %v3456 = vmax.f32 %v3414, 0.0
    %v3457 = vmax.f32 %v3419, 0.0
    %v3458 = vmax.f32 %v3422, 0.0
    %v3459 = vmax.f32 %v3427, 0.0
    %v3460 = vmax.f32 %v3430, 0.0
    %v3461 = vmax.f32 %v3435, 0.0
    %v3462 = vmax.f32 %v3438, 0.0
    %v3463 = vmax.f32 %v3443, 0.0
    %v3464 = vmax.f32 %v3446, 0.0
    %s3465 = scalar_lea.vmem [#allocation2], 160
    %v3466 = vld [vmem:[%s3465] sm:$0xf]
    %v3467 = vld [vmem:[%s3465 + $0x4] sm:$0xf]
    %v3468 = vld [vmem:[%s3465 + $0x8] sm:$0xf]
    %v3469 = vld [vmem:[%s3465 + $0xc] sm:$0xf]
    %v3470 = vld [vmem:[%s3465 + $0x10] sm:$0xf]
    %v3471 = vld [vmem:[%s3465 + $0x14] sm:$0xf]
    %v3472 = vld [vmem:[%s3465 + $0x18] sm:$0xf]
    %v3473 = vld [vmem:[%s3465 + $0x1c] sm:$0xf]
    %v3474 = vpack.c.bf16 %v3450, %v3449
    %v3475 = vpack.c.bf16 %v3452, %v3451
    %v3476 = vpack.c.bf16 %v3454, %v3453
    %v3477 = vpack.c.bf16 %v3456, %v3455
    %v3478 = vpack.c.bf16 %v3458, %v3457
    %v3479 = vpack.c.bf16 %v3460, %v3459
    %v3480 = vpack.c.bf16 %v3462, %v3461
    %v3481 = vpack.c.bf16 %v3464, %v3463
    %v3490 = vunpack.c.l.b16 %v3466
    %v3491 = vunpack.c.l.b16 %v3467
    %v3492 = vunpack.c.l.b16 %v3468
    %v3493 = vunpack.c.l.b16 %v3469
    %v3494 = vunpack.c.l.b16 %v3470
    %v3495 = vunpack.c.l.b16 %v3471
    %v3496 = vunpack.c.l.b16 %v3472
    %v3497 = vunpack.c.l.b16 %v3473
    %v3498 = vpack.c.b16 %v3491, %v3490
    %v3499 = vpack.c.b16 %v3493, %v3492
    %v3500 = vpack.c.b16 %v3495, %v3494
    %v3501 = vpack.c.b16 %v3497, %v3496
    %v3507 = vsel %vm356, %v3474, 0
    %v3510 = vsel %vm356, %v3475, 0
    %v3513 = vsel %vm356, %v3476, 0
    %v3516 = vsel %vm356, %v3477, 0
    %v3519 = vsel %vm356, %v3478, 0
    %v3522 = vsel %vm356, %v3479, 0
    %v3525 = vsel %vm356, %v3480, 0
    %v3528 = vsel %vm356, %v3481, 0
    %3530 = vmatprep.subr.bf16.mxu0 0
    %3531 = vmatpush1.bf16.msra.mxu0 %v3498
    %3532 = vmatprep.subr.bf16.mxu0 0
    %3533 = vmatpush1.bf16.msra.mxu0 %v3499
    %3534 = vmatprep.subr.bf16.mxu0 0
    %3535 = vmatpush1.bf16.msra.mxu0 %v3500
    %3536 = vmatprep.subr.bf16.mxu0 0
    %3537 = vmatpush1.bf16.msra.mxu0 %v3501
    %3538 = vmatprep.subr.bf16.mxu0 0
    %3539 = vmatpush1.bf16.msra.mxu0 0
    %3540 = vmatprep.subr.bf16.mxu0 0
    %3541 = vmatpush1.bf16.msra.mxu0 0
    %3542 = vmatprep.subr.bf16.mxu0 0
    %3543 = vmatpush1.bf16.msra.mxu0 0
    %3544 = vmatprep.subr.bf16.mxu0 0
    %3545 = vmatpush1.bf16.msra.mxu0 0
    %3546 = vmatprep.subr.bf16.mxu0 0
    %3547 = vmatpush1.bf16.msra.mxu0 0
    %3548 = vmatprep.subr.bf16.mxu0 0
    %3549 = vmatpush1.bf16.msra.mxu0 0
    %3550 = vmatprep.subr.bf16.mxu0 0
    %3551 = vmatpush1.bf16.msra.mxu0 0
    %3552 = vmatprep.subr.bf16.mxu0 0
    %3553 = vmatpush1.bf16.msra.mxu0 0
    %3554 = vmatprep.subr.bf16.mxu0 0
    %3555 = vmatpush1.bf16.msra.mxu0 0
    %3556 = vmatprep.subr.bf16.mxu0 0
    %3557 = vmatpush1.bf16.msra.mxu0 0
    %3558 = vmatprep.subr.bf16.mxu0 0
    %3559 = vmatpush1.bf16.msra.mxu0 0
    %3560 = vmatprep.subr.bf16.mxu0 0
    %3561 = vmatpush1.bf16.msra.mxu0 0
    %3562 = vmatprep.mubr.bf16.mxu0 0
    %3563 = vmatmul.mubr.bf16.gmra.mrb[0].mxu0 %v3507
    %v3564 = vpop.f32.mrb[0].mxu0
    %v3565 = vadd.f32 0.0, %v3564
    %v3566 = vpop.f32.mrb[0].mxu0
    %v3567 = vpop.f32.mrb[0].mxu0
    %v3568 = vadd.f32 0.0, %v3567
    %v3569 = vpop.f32.mrb[0].mxu0
    %3570 = vmatprep.mubr.bf16.mxu0 0
    %3571 = vmatmul.mubr.bf16.gmra.mrb[0].mxu0 %v3510
    %v3572 = vpop.f32.mrb[0].mxu0
    %v3573 = vadd.f32 0.0, %v3572
    %v3574 = vpop.f32.mrb[0].mxu0
    %v3575 = vpop.f32.mrb[0].mxu0
    %v3576 = vadd.f32 0.0, %v3575
    %v3577 = vpop.f32.mrb[0].mxu0
    %3578 = vmatprep.mubr.bf16.mxu0 0
    %3579 = vmatmul.mubr.bf16.gmra.mrb[0].mxu0 %v3513
    %v3580 = vpop.f32.mrb[0].mxu0
    %v3581 = vadd.f32 0.0, %v3580
    %v3582 = vpop.f32.mrb[0].mxu0
    %v3583 = vpop.f32.mrb[0].mxu0
    %v3584 = vadd.f32 0.0, %v3583
    %v3585 = vpop.f32.mrb[0].mxu0
    %3586 = vmatprep.mubr.bf16.mxu0 0
    %3587 = vmatmul.mubr.bf16.gmra.mrb[0].mxu0 %v3516
    %v3588 = vpop.f32.mrb[0].mxu0
    %v3589 = vadd.f32 0.0, %v3588
    %v3590 = vpop.f32.mrb[0].mxu0
    %v3591 = vpop.f32.mrb[0].mxu0
    %v3592 = vadd.f32 0.0, %v3591
    %v3593 = vpop.f32.mrb[0].mxu0
    %3594 = vmatprep.mubr.bf16.mxu0 0
    %3595 = vmatmul.mubr.bf16.gmra.mrb[0].mxu0 %v3519
    %v3596 = vpop.f32.mrb[0].mxu0
    %v3597 = vadd.f32 0.0, %v3596
    %v3598 = vpop.f32.mrb[0].mxu0
    %v3599 = vpop.f32.mrb[0].mxu0
    %v3600 = vadd.f32 0.0, %v3599
    %v3601 = vpop.f32.mrb[0].mxu0
    %3602 = vmatprep.mubr.bf16.mxu0 0
    %3603 = vmatmul.mubr.bf16.gmra.mrb[0].mxu0 %v3522
    %v3604 = vpop.f32.mrb[0].mxu0
    %v3605 = vadd.f32 0.0, %v3604
    %v3606 = vpop.f32.mrb[0].mxu0
    %v3607 = vpop.f32.mrb[0].mxu0
    %v3608 = vadd.f32 0.0, %v3607
    %v3609 = vpop.f32.mrb[0].mxu0
    %3610 = vmatprep.mubr.bf16.mxu0 0
    %3611 = vmatmul.mubr.bf16.gmra.mrb[0].mxu0 %v3525
    %v3612 = vpop.f32.mrb[0].mxu0
    %v3613 = vadd.f32 0.0, %v3612
    %v3614 = vpop.f32.mrb[0].mxu0
    %v3615 = vpop.f32.mrb[0].mxu0
    %v3616 = vadd.f32 0.0, %v3615
    %v3617 = vpop.f32.mrb[0].mxu0
    %3618 = vmatprep.mubr.bf16.mxu0 0
    %3619 = vmatmul.mubr.bf16.gmra.mrb[0].mxu0 %v3528
    %v3620 = vpop.f32.mrb[0].mxu0
    %v3621 = vadd.f32 0.0, %v3620
    %v3622 = vpop.f32.mrb[0].mxu0
    %v3623 = vpop.f32.mrb[0].mxu0
    %v3624 = vadd.f32 0.0, %v3623
    %v3625 = vpop.f32.mrb[0].mxu0
    %3626 = vdwg.mxu0
    %v3627 = vadd.f32 %v2984, %v3565
    %v3628 = vadd.f32 %v2985, %v3568
    %v3629 = vadd.f32 %v2986, %v3573
    %v3630 = vadd.f32 %v2987, %v3576
    %v3631 = vadd.f32 %v2988, %v3581
    %v3632 = vadd.f32 %v2989, %v3584
    %v3633 = vadd.f32 %v2990, %v3589
    %v3634 = vadd.f32 %v2991, %v3592
    %v3635 = vadd.f32 %v2992, %v3597
    %v3636 = vadd.f32 %v2993, %v3600
    %v3637 = vadd.f32 %v2994, %v3605
    %v3638 = vadd.f32 %v2995, %v3608
    %v3639 = vadd.f32 %v2996, %v3613
    %v3640 = vadd.f32 %v2997, %v3616
    %v3641 = vadd.f32 %v2998, %v3621
    %v3642 = vadd.f32 %v2999, %v3624
    %v3643 = vld [vmem:[%s6 + $0xe] sm:$0x1]
    %v3644 = vlaneseq
    %v3645 = vshrl.u32 %v3644, 7
    %v3646 = vsub.s32 0, %v3645
    %v3647 = vrot.slane %v3643, %v3646
    %v3648 = vadd.f32 %v3627, %v3647
    %v3649 = vadd.f32 %v3628, %v3647
    %v3650 = vadd.f32 %v3629, %v3647
    %v3651 = vadd.f32 %v3630, %v3647
    %v3652 = vadd.f32 %v3631, %v3647
    %v3653 = vadd.f32 %v3632, %v3647
    %v3654 = vadd.f32 %v3633, %v3647
    %v3655 = vadd.f32 %v3634, %v3647
    %v3656 = vadd.f32 %v3635, %v3647
    %v3657 = vadd.f32 %v3636, %v3647
    %v3658 = vadd.f32 %v3637, %v3647
    %v3659 = vadd.f32 %v3638, %v3647
    %v3660 = vadd.f32 %v3639, %v3647
    %v3661 = vadd.f32 %v3640, %v3647
    %v3662 = vadd.f32 %v3641, %v3647
    %v3663 = vadd.f32 %v3642, %v3647
    %s3664 = scalar_lea.vmem [#allocation2], 192
    %v3665 = vld [vmem:[%s3664] sm:$0xf]
    %v3666 = vld [vmem:[%s3664 + $0x4] sm:$0xf]
    %v3667 = vld [vmem:[%s3664 + $0x8] sm:$0xf]
    %v3668 = vld [vmem:[%s3664 + $0xc] sm:$0xf]
    %v3669 = vld [vmem:[%s3664 + $0x10] sm:$0xf]
    %v3670 = vld [vmem:[%s3664 + $0x14] sm:$0xf]
    %v3671 = vld [vmem:[%s3664 + $0x18] sm:$0xf]
    %v3672 = vld [vmem:[%s3664 + $0x1c] sm:$0xf]
    %v3673 = vpack.c.bf16 %v3649, %v3648
    %v3674 = vpack.c.bf16 %v3651, %v3650
    %v3675 = vpack.c.bf16 %v3653, %v3652
    %v3676 = vpack.c.bf16 %v3655, %v3654
    %v3677 = vpack.c.bf16 %v3657, %v3656
    %v3678 = vpack.c.bf16 %v3659, %v3658
    %v3679 = vpack.c.bf16 %v3661, %v3660
    %v3680 = vpack.c.bf16 %v3663, %v3662
    %v3681 = vld [vmem:[%s6 + $0xf] sm:$0x1]
    %v3682 = vlaneseq
    %v3683 = vshrl.u32 %v3682, 7
    %v3684 = vsub.s32 0, %v3683
    %v3685 = vrot.slane %v3681, %v3684
    %v3694 = vunpack.c.l.b16 %v3665
    %v3695 = vunpack.c.l.b16 %v3666
    %v3696 = vunpack.c.l.b16 %v3667
    %v3697 = vunpack.c.l.b16 %v3668
    %v3698 = vunpack.c.l.b16 %v3669
    %v3699 = vunpack.c.l.b16 %v3670
    %v3700 = vunpack.c.l.b16 %v3671
    %v3701 = vunpack.c.l.b16 %v3672
    %v3702 = vpack.c.b16 %v3695, %v3694
    %v3703 = vpack.c.b16 %v3697, %v3696
    %v3704 = vpack.c.b16 %v3699, %v3698
    %v3705 = vpack.c.b16 %v3701, %v3700
    %v3711 = vsel %vm356, %v3673, 0
    %v3714 = vsel %vm356, %v3674, 0
    %v3717 = vsel %vm356, %v3675, 0
    %v3720 = vsel %vm356, %v3676, 0
    %v3723 = vsel %vm356, %v3677, 0
    %v3726 = vsel %vm356, %v3678, 0
    %v3729 = vsel %vm356, %v3679, 0
    %v3732 = vsel %vm356, %v3680, 0
    %3734 = vmatprep.subr.bf16.mxu0 0
    %3735 = vmatpush1.bf16.msra.mxu0 %v3702
    %3736 = vmatprep.subr.bf16.mxu0 0
    %3737 = vmatpush1.bf16.msra.mxu0 %v3703
    %3738 = vmatprep.subr.bf16.mxu0 0
    %3739 = vmatpush1.bf16.msra.mxu0 %v3704
    %3740 = vmatprep.subr.bf16.mxu0 0
    %3741 = vmatpush1.bf16.msra.mxu0 %v3705
    %3742 = vmatprep.subr.bf16.mxu0 0
    %3743 = vmatpush1.bf16.msra.mxu0 0
    %3744 = vmatprep.subr.bf16.mxu0 0
    %3745 = vmatpush1.bf16.msra.mxu0 0
    %3746 = vmatprep.subr.bf16.mxu0 0
    %3747 = vmatpush1.bf16.msra.mxu0 0
    %3748 = vmatprep.subr.bf16.mxu0 0
    %3749 = vmatpush1.bf16.msra.mxu0 0
    %3750 = vmatprep.subr.bf16.mxu0 0
    %3751 = vmatpush1.bf16.msra.mxu0 0
    %3752 = vmatprep.subr.bf16.mxu0 0
    %3753 = vmatpush1.bf16.msra.mxu0 0
    %3754 = vmatprep.subr.bf16.mxu0 0
    %3755 = vmatpush1.bf16.msra.mxu0 0
    %3756 = vmatprep.subr.bf16.mxu0 0
    %3757 = vmatpush1.bf16.msra.mxu0 0
    %3758 = vmatprep.subr.bf16.mxu0 0
    %3759 = vmatpush1.bf16.msra.mxu0 0
    %3760 = vmatprep.subr.bf16.mxu0 0
    %3761 = vmatpush1.bf16.msra.mxu0 0
    %3762 = vmatprep.subr.bf16.mxu0 0
    %3763 = vmatpush1.bf16.msra.mxu0 0
    %3764 = vmatprep.subr.bf16.mxu0 0
    %3765 = vmatpush1.bf16.msra.mxu0 0
    %3766 = vmatprep.mubr.bf16.mxu0 0
    %3767 = vmatmul.mubr.bf16.gmra.mrb[0].mxu0 %v3711
    %v3768 = vpop.f32.mrb[0].mxu0
    %v3769 = vadd.f32 %v3685, %v3768
    %v3770 = vpop.f32.mrb[0].mxu0
    %v3771 = vpop.f32.mrb[0].mxu0
    %v3772 = vadd.f32 %v3685, %v3771
    %v3773 = vpop.f32.mrb[0].mxu0
    %3774 = vmatprep.mubr.bf16.mxu0 0
    %3775 = vmatmul.mubr.bf16.gmra.mrb[0].mxu0 %v3714
    %v3776 = vpop.f32.mrb[0].mxu0
    %v3777 = vadd.f32 %v3685, %v3776
    %v3778 = vpop.f32.mrb[0].mxu0
    %v3779 = vpop.f32.mrb[0].mxu0
    %v3780 = vadd.f32 %v3685, %v3779
    %v3781 = vpop.f32.mrb[0].mxu0
    %3782 = vmatprep.mubr.bf16.mxu0 0
    %3783 = vmatmul.mubr.bf16.gmra.mrb[0].mxu0 %v3717
    %v3784 = vpop.f32.mrb[0].mxu0
    %v3785 = vadd.f32 %v3685, %v3784
    %v3786 = vpop.f32.mrb[0].mxu0
    %v3787 = vpop.f32.mrb[0].mxu0
    %v3788 = vadd.f32 %v3685, %v3787
    %v3789 = vpop.f32.mrb[0].mxu0
    %3790 = vmatprep.mubr.bf16.mxu0 0
    %3791 = vmatmul.mubr.bf16.gmra.mrb[0].mxu0 %v3720
    %v3792 = vpop.f32.mrb[0].mxu0
    %v3793 = vadd.f32 %v3685, %v3792
    %v3794 = vpop.f32.mrb[0].mxu0
    %v3795 = vpop.f32.mrb[0].mxu0
    %v3796 = vadd.f32 %v3685, %v3795
    %v3797 = vpop.f32.mrb[0].mxu0
    %3798 = vmatprep.mubr.bf16.mxu0 0
    %3799 = vmatmul.mubr.bf16.gmra.mrb[0].mxu0 %v3723
    %v3800 = vpop.f32.mrb[0].mxu0
    %v3801 = vadd.f32 %v3685, %v3800
    %v3802 = vpop.f32.mrb[0].mxu0
    %v3803 = vpop.f32.mrb[0].mxu0
    %v3804 = vadd.f32 %v3685, %v3803
    %v3805 = vpop.f32.mrb[0].mxu0
    %3806 = vmatprep.mubr.bf16.mxu0 0
    %3807 = vmatmul.mubr.bf16.gmra.mrb[0].mxu0 %v3726
    %v3808 = vpop.f32.mrb[0].mxu0
    %v3809 = vadd.f32 %v3685, %v3808
    %v3810 = vpop.f32.mrb[0].mxu0
    %v3811 = vpop.f32.mrb[0].mxu0
    %v3812 = vadd.f32 %v3685, %v3811
    %v3813 = vpop.f32.mrb[0].mxu0
    %3814 = vmatprep.mubr.bf16.mxu0 0
    %3815 = vmatmul.mubr.bf16.gmra.mrb[0].mxu0 %v3729
    %v3816 = vpop.f32.mrb[0].mxu0
    %v3817 = vadd.f32 %v3685, %v3816
    %v3818 = vpop.f32.mrb[0].mxu0
    %v3819 = vpop.f32.mrb[0].mxu0
    %v3820 = vadd.f32 %v3685, %v3819
    %v3821 = vpop.f32.mrb[0].mxu0
    %3822 = vmatprep.mubr.bf16.mxu0 0
    %3823 = vmatmul.mubr.bf16.gmra.mrb[0].mxu0 %v3732
    %v3824 = vpop.f32.mrb[0].mxu0
    %v3825 = vadd.f32 %v3685, %v3824
    %v3826 = vpop.f32.mrb[0].mxu0
    %v3827 = vpop.f32.mrb[0].mxu0
    %v3828 = vadd.f32 %v3685, %v3827
    %v3829 = vpop.f32.mrb[0].mxu0
    %3830 = vdwg.mxu0
    %v3831 = vmax.f32 %v3769, 0.0
    %v3832 = vmax.f32 %v3772, 0.0
    %v3833 = vmax.f32 %v3777, 0.0
    %v3834 = vmax.f32 %v3780, 0.0
    %v3835 = vmax.f32 %v3785, 0.0
    %v3836 = vmax.f32 %v3788, 0.0
    %v3837 = vmax.f32 %v3793, 0.0
    %v3838 = vmax.f32 %v3796, 0.0
    %v3839 = vmax.f32 %v3801, 0.0
    %v3840 = vmax.f32 %v3804, 0.0
    %v3841 = vmax.f32 %v3809, 0.0
    %v3842 = vmax.f32 %v3812, 0.0
    %v3843 = vmax.f32 %v3817, 0.0
    %v3844 = vmax.f32 %v3820, 0.0
    %v3845 = vmax.f32 %v3825, 0.0
    %v3846 = vmax.f32 %v3828, 0.0
    %s3847 = scalar_lea.vmem [#allocation2], 224
    %v3848 = vld [vmem:[%s3847] sm:$0xf]
    %v3849 = vld [vmem:[%s3847 + $0x4] sm:$0xf]
    %v3850 = vld [vmem:[%s3847 + $0x8] sm:$0xf]
    %v3851 = vld [vmem:[%s3847 + $0xc] sm:$0xf]
    %v3852 = vld [vmem:[%s3847 + $0x10] sm:$0xf]
    %v3853 = vld [vmem:[%s3847 + $0x14] sm:$0xf]
    %v3854 = vld [vmem:[%s3847 + $0x18] sm:$0xf]
    %v3855 = vld [vmem:[%s3847 + $0x1c] sm:$0xf]
    %v3856 = vpack.c.bf16 %v3832, %v3831
    %v3857 = vpack.c.bf16 %v3834, %v3833
    %v3858 = vpack.c.bf16 %v3836, %v3835
    %v3859 = vpack.c.bf16 %v3838, %v3837
    %v3860 = vpack.c.bf16 %v3840, %v3839
    %v3861 = vpack.c.bf16 %v3842, %v3841
    %v3862 = vpack.c.bf16 %v3844, %v3843
    %v3863 = vpack.c.bf16 %v3846, %v3845
    %v3864 = vld [vmem:[%s6 + $0x10] sm:$0x1]
    %v3865 = vlaneseq
    %v3866 = vshrl.u32 %v3865, 7
    %v3867 = vsub.s32 0, %v3866
    %v3868 = vrot.slane %v3864, %v3867
    %v3877 = vunpack.c.l.b16 %v3848
    %v3878 = vunpack.c.l.b16 %v3849
    %v3879 = vunpack.c.l.b16 %v3850
    %v3880 = vunpack.c.l.b16 %v3851
    %v3881 = vunpack.c.l.b16 %v3852
    %v3882 = vunpack.c.l.b16 %v3853
    %v3883 = vunpack.c.l.b16 %v3854
    %v3884 = vunpack.c.l.b16 %v3855
    %v3885 = vpack.c.b16 %v3878, %v3877
    %v3886 = vpack.c.b16 %v3880, %v3879
    %v3887 = vpack.c.b16 %v3882, %v3881
    %v3888 = vpack.c.b16 %v3884, %v3883
    %v3894 = vsel %vm356, %v3856, 0
    %v3897 = vsel %vm356, %v3857, 0
    %v3900 = vsel %vm356, %v3858, 0
    %v3903 = vsel %vm356, %v3859, 0
    %v3906 = vsel %vm356, %v3860, 0
    %v3909 = vsel %vm356, %v3861, 0
    %v3912 = vsel %vm356, %v3862, 0
    %v3915 = vsel %vm356, %v3863, 0
    %3917 = vmatprep.subr.bf16.mxu0 0
    %3918 = vmatpush1.bf16.msra.mxu0 %v3885
    %3919 = vmatprep.subr.bf16.mxu0 0
    %3920 = vmatpush1.bf16.msra.mxu0 %v3886
    %3921 = vmatprep.subr.bf16.mxu0 0
    %3922 = vmatpush1.bf16.msra.mxu0 %v3887
    %3923 = vmatprep.subr.bf16.mxu0 0
    %3924 = vmatpush1.bf16.msra.mxu0 %v3888
    %3925 = vmatprep.subr.bf16.mxu0 0
    %3926 = vmatpush1.bf16.msra.mxu0 0
    %3927 = vmatprep.subr.bf16.mxu0 0
    %3928 = vmatpush1.bf16.msra.mxu0 0
    %3929 = vmatprep.subr.bf16.mxu0 0
    %3930 = vmatpush1.bf16.msra.mxu0 0
    %3931 = vmatprep.subr.bf16.mxu0 0
    %3932 = vmatpush1.bf16.msra.mxu0 0
    %3933 = vmatprep.subr.bf16.mxu0 0
    %3934 = vmatpush1.bf16.msra.mxu0 0
    %3935 = vmatprep.subr.bf16.mxu0 0
    %3936 = vmatpush1.bf16.msra.mxu0 0
    %3937 = vmatprep.subr.bf16.mxu0 0
    %3938 = vmatpush1.bf16.msra.mxu0 0
    %3939 = vmatprep.subr.bf16.mxu0 0
    %3940 = vmatpush1.bf16.msra.mxu0 0
    %3941 = vmatprep.subr.bf16.mxu0 0
    %3942 = vmatpush1.bf16.msra.mxu0 0
    %3943 = vmatprep.subr.bf16.mxu0 0
    %3944 = vmatpush1.bf16.msra.mxu0 0
    %3945 = vmatprep.subr.bf16.mxu0 0
    %3946 = vmatpush1.bf16.msra.mxu0 0
    %3947 = vmatprep.subr.bf16.mxu0 0
    %3948 = vmatpush1.bf16.msra.mxu0 0
    %3949 = vmatprep.mubr.bf16.mxu0 0
    %3950 = vmatmul.mubr.bf16.gmra.mrb[0].mxu0 %v3894
    %v3951 = vpop.f32.mrb[0].mxu0
    %v3952 = vadd.f32 %v3868, %v3951
    %v3953 = vpop.f32.mrb[0].mxu0
    %v3954 = vpop.f32.mrb[0].mxu0
    %v3955 = vadd.f32 %v3868, %v3954
    %v3956 = vpop.f32.mrb[0].mxu0
    %3957 = vmatprep.mubr.bf16.mxu0 0
    %3958 = vmatmul.mubr.bf16.gmra.mrb[0].mxu0 %v3897
    %v3959 = vpop.f32.mrb[0].mxu0
    %v3960 = vadd.f32 %v3868, %v3959
    %v3961 = vpop.f32.mrb[0].mxu0
    %v3962 = vpop.f32.mrb[0].mxu0
    %v3963 = vadd.f32 %v3868, %v3962
    %v3964 = vpop.f32.mrb[0].mxu0
    %3965 = vmatprep.mubr.bf16.mxu0 0
    %3966 = vmatmul.mubr.bf16.gmra.mrb[0].mxu0 %v3900
    %v3967 = vpop.f32.mrb[0].mxu0
    %v3968 = vadd.f32 %v3868, %v3967
    %v3969 = vpop.f32.mrb[0].mxu0
    %v3970 = vpop.f32.mrb[0].mxu0
    %v3971 = vadd.f32 %v3868, %v3970
    %v3972 = vpop.f32.mrb[0].mxu0
    %3973 = vmatprep.mubr.bf16.mxu0 0
    %3974 = vmatmul.mubr.bf16.gmra.mrb[0].mxu0 %v3903
    %v3975 = vpop.f32.mrb[0].mxu0
    %v3976 = vadd.f32 %v3868, %v3975
    %v3977 = vpop.f32.mrb[0].mxu0
    %v3978 = vpop.f32.mrb[0].mxu0
    %v3979 = vadd.f32 %v3868, %v3978
    %v3980 = vpop.f32.mrb[0].mxu0
    %3981 = vmatprep.mubr.bf16.mxu0 0
    %3982 = vmatmul.mubr.bf16.gmra.mrb[0].mxu0 %v3906
    %v3983 = vpop.f32.mrb[0].mxu0
    %v3984 = vadd.f32 %v3868, %v3983
    %v3985 = vpop.f32.mrb[0].mxu0
    %v3986 = vpop.f32.mrb[0].mxu0
    %v3987 = vadd.f32 %v3868, %v3986
    %v3988 = vpop.f32.mrb[0].mxu0
    %3989 = vmatprep.mubr.bf16.mxu0 0
    %3990 = vmatmul.mubr.bf16.gmra.mrb[0].mxu0 %v3909
    %v3991 = vpop.f32.mrb[0].mxu0
    %v3992 = vadd.f32 %v3868, %v3991
    %v3993 = vpop.f32.mrb[0].mxu0
    %v3994 = vpop.f32.mrb[0].mxu0
    %v3995 = vadd.f32 %v3868, %v3994
    %v3996 = vpop.f32.mrb[0].mxu0
    %3997 = vmatprep.mubr.bf16.mxu0 0
    %3998 = vmatmul.mubr.bf16.gmra.mrb[0].mxu0 %v3912
    %v3999 = vpop.f32.mrb[0].mxu0
    %v4000 = vadd.f32 %v3868, %v3999
    %v4001 = vpop.f32.mrb[0].mxu0
    %v4002 = vpop.f32.mrb[0].mxu0
    %v4003 = vadd.f32 %v3868, %v4002
    %v4004 = vpop.f32.mrb[0].mxu0
    %4005 = vmatprep.mubr.bf16.mxu0 0
    %4006 = vmatmul.mubr.bf16.gmra.mrb[0].mxu0 %v3915
    %v4007 = vpop.f32.mrb[0].mxu0
    %v4008 = vadd.f32 %v3868, %v4007
    %v4009 = vpop.f32.mrb[0].mxu0
    %v4010 = vpop.f32.mrb[0].mxu0
    %v4011 = vadd.f32 %v3868, %v4010
    %v4012 = vpop.f32.mrb[0].mxu0
    %4013 = vdwg.mxu0
    %v4014 = vmax.f32 %v3952, 0.0
    %v4015 = vmax.f32 %v3955, 0.0
    %v4016 = vmax.f32 %v3960, 0.0
    %v4017 = vmax.f32 %v3963, 0.0
    %v4018 = vmax.f32 %v3968, 0.0
    %v4019 = vmax.f32 %v3971, 0.0
    %v4020 = vmax.f32 %v3976, 0.0
    %v4021 = vmax.f32 %v3979, 0.0
    %v4022 = vmax.f32 %v3984, 0.0
    %v4023 = vmax.f32 %v3987, 0.0
    %v4024 = vmax.f32 %v3992, 0.0
    %v4025 = vmax.f32 %v3995, 0.0
    %v4026 = vmax.f32 %v4000, 0.0
    %v4027 = vmax.f32 %v4003, 0.0
    %v4028 = vmax.f32 %v4008, 0.0
    %v4029 = vmax.f32 %v4011, 0.0
    %v4030 = vld [vmem:[%s6 + $0x11] sm:$0x1]
    %v4031 = vpack.c.bf16 %v4030, %v4030
    %v4032 = vpack.c.bf16 %v4015, %v4014
    %v4033 = vpack.c.bf16 %v4017, %v4016
    %v4034 = vpack.c.bf16 %v4019, %v4018
    %v4035 = vpack.c.bf16 %v4021, %v4020
    %v4036 = vpack.c.bf16 %v4023, %v4022
    %v4037 = vpack.c.bf16 %v4025, %v4024
    %v4038 = vpack.c.bf16 %v4027, %v4026
    %v4039 = vpack.c.bf16 %v4029, %v4028
    %v4041 = vsel %vm356, %v4031, 0
    %v4044 = vsel %vm356, %v4032, 0
    %v4047 = vsel %vm356, %v4033, 0
    %v4050 = vsel %vm356, %v4034, 0
    %v4053 = vsel %vm356, %v4035, 0
    %v4056 = vsel %vm356, %v4036, 0
    %v4059 = vsel %vm356, %v4037, 0
    %v4062 = vsel %vm356, %v4038, 0
    %v4065 = vsel %vm356, %v4039, 0
    %4067 = vmatprep.subr.bf16.mxu0 0
    %4068 = vmatpush1.bf16.xpose.msra.mxu0 %v4044
    %4069 = vmatprep.subr.bf16.mxu0 0
    %4070 = vmatpush1.bf16.xpose.msra.mxu0 %v4047
    %4071 = vmatprep.subr.bf16.mxu0 0
    %4072 = vmatpush1.bf16.xpose.msra.mxu0 %v4050
    %4073 = vmatprep.subr.bf16.mxu0 0
    %4074 = vmatpush1.bf16.xpose.msra.mxu0 %v4053
    %4075 = vmatprep.subr.bf16.mxu0 0
    %4076 = vmatpush1.bf16.xpose.msra.mxu0 %v4056
    %4077 = vmatprep.subr.bf16.mxu0 0
    %4078 = vmatpush1.bf16.xpose.msra.mxu0 %v4059
    %4079 = vmatprep.subr.bf16.mxu0 0
    %4080 = vmatpush1.bf16.xpose.msra.mxu0 %v4062
    %4081 = vmatprep.subr.bf16.mxu0 0
    %4082 = vmatpush1.bf16.xpose.msra.mxu0 %v4065
    %4083 = vmatprep.subr.bf16.mxu0 0
    %4084 = vmatpush1.bf16.xpose.msra.mxu0 0
    %4085 = vmatprep.subr.bf16.mxu0 0
    %4086 = vmatpush1.bf16.xpose.msra.mxu0 0
    %4087 = vmatprep.subr.bf16.mxu0 0
    %4088 = vmatpush1.bf16.xpose.msra.mxu0 0
    %4089 = vmatprep.subr.bf16.mxu0 0
    %4090 = vmatpush1.bf16.xpose.msra.mxu0 0
    %4091 = vmatprep.subr.bf16.mxu0 0
    %4092 = vmatpush1.bf16.xpose.msra.mxu0 0
    %4093 = vmatprep.subr.bf16.mxu0 0
    %4094 = vmatpush1.bf16.xpose.msra.mxu0 0
    %4095 = vmatprep.subr.bf16.mxu0 0
    %4096 = vmatpush1.bf16.xpose.msra.mxu0 0
    %4097 = vmatprep.subr.bf16.mxu0 0
    %4098 = vmatpush1.bf16.xpose.msra.mxu0 0
    %4099 = vmatprep.mubr.bf16.mxu0 0
    %4100 = vmatmul.mubr.bf16.gmra.mrb[0].mxu0 %v4041
    %v4101 = vpop.f32.mrb[0].mxu0
    %v4102 = vadd.f32 0.0, %v4101
    %v4103 = vpop.f32.mrb[0].mxu0
    %v4104 = vpop.f32.mrb[0].mxu0
    %v4105 = vpop.f32.mrb[0].mxu0
    %4106 = vdwg.mxu0
    %4107 = vst [vmem:[#allocation7] sm:$0x1] %v4102
    // Predicated region
    $region38: #{tpu_custom_call.1} parent=1 // pred_check
      _
    $region39: #{tpu_custom_call.1} parent=1 // pred_check_branch
      %4109 = sbr.rel (0) target = $region41
    $region40: #{tpu_custom_call.1} parent=1 // pred_region
      %s4111 = ssub.s32 16, 16
      %4112 = vsyncadd [#allocation4], %s4111
      %s4114 = sshll.u32 [#allocation7], 4
      %s4115 = int_to_ptr.vmem [resolvable:$true] %s4114
      %4117 = dma.vmem_to_hbm [thread:$0]  %s4115, 16, %s7, [#allocation4]
    $region41: #{tpu_custom_call.1} parent=1 // pred_fallthru
      _
    // Predicated region
    $region42: #{tpu_custom_call.1} parent=1 // pred_check
      _
    $region43: #{tpu_custom_call.1} parent=1 // pred_check_branch
      %4119 = sbr.rel (0) target = $region45
    $region44: #{tpu_custom_call.1} parent=1 // pred_region
      %4120 = dma.done [#allocation4], 16
    $region45: #{tpu_custom_call.1} parent=1 // pred_fallthru
      _
    %4121 = vsyncpa [#allocation3], 1
    %4122 = vsyncpa [#allocation6], 1
    %4123 = vsyncpa [#allocation4], 1

</llo_original>
